<compile_context>
chip_gen: v6e
topology: v6e:2x2x1
jax: 0.10.0
libtpu: 0.0.40
codegen_flags: <defaults>
</compile_context>

<pallas_src>
import jax
import jax.numpy as jnp
from jax.experimental import pallas as pl
from jax.experimental.pallas import tpu as pltpu

N_FEATURES = 20
SEQ_LEN = 32
N_CATEGORIES = 10
C1, C2, C3 = 64, 128, 128
# Samples per grid step.  TB*L = 1024 rows -> 4 full MXU M-passes per matmul,
# amortising MXU weight loads (esp. the 32 per-position FC matmuls) and the
# per-step grid overhead.  Adaptively reduced (multiple of 8) for small B.
TB = 32


def _conv1d_relu(h, w_ref, b_ref, prev_ok, next_ok, tb):
    """Conv1d(kernel_size=3, padding=1, stride=1) + bias + ReLU, channels-last.

    h:       (M, Cin) with M = L*tb, rows ordered r = l*tb + b (l-major).
    w_ref:   (3, Cin, Cout) ref; tap k multiplies x[t + k - 1].
    b_ref:   (1, Cout) ref.
    prev_ok: (M, 1) bool, True where l > 0     (x[t-1] exists).
    next_ok: (M, 1) bool, True where l < L - 1 (x[t+1] exists).
    Returns (M, Cout).
    """
    M = h.shape[0]
    # x[t-1]: shift down by tb rows (same sample, previous time step);
    # rows with l == 0 see the zero padding.
    prev = jnp.where(prev_ok, pltpu.roll(h, tb, axis=0), 0.0)
    # x[t+1]: shift up by tb rows == roll forward by M - tb (non-negative);
    # rows with l == L-1 see the zero padding.
    nxt = jnp.where(next_ok, pltpu.roll(h, M - tb, axis=0), 0.0)
    y = (jnp.dot(prev, w_ref[0], preferred_element_type=jnp.float32)
         + jnp.dot(h, w_ref[1], preferred_element_type=jnp.float32)
         + jnp.dot(nxt, w_ref[2], preferred_element_type=jnp.float32)
         + b_ref[...])
    return jnp.maximum(y, 0.0)


def cnn_kernel(x_ref, w1_ref, b1_ref, w2_ref, b2_ref, w3_ref, b3_ref,
               wf_ref, bf_ref, out_ref):
    L, tb, F = x_ref.shape
    M = L * tb
    x = x_ref[...].reshape(M, F)                 # (M, F), rows r = l*tb + b

    # One (M, 1) row iota shared by all three conv layers (broadcasts on Cin).
    row = jax.lax.broadcasted_iota(jnp.int32, (M, 1), 0)
    prev_ok = row >= tb
    next_ok = row < M - tb

    h1 = _conv1d_relu(x, w1_ref, b1_ref, prev_ok, next_ok, tb)    # (M, 64)
    h2 = _conv1d_relu(h1, w2_ref, b2_ref, prev_ok, next_ok, tb)   # (M, 128)
    h3 = _conv1d_relu(h2, w3_ref, b3_ref, prev_ok, next_ok, tb)   # (M, 128)

    # fc: out[b, n] = sum_{l,c} h3[l, b, c] * Wf[l, n, c] + bf[n]
    # (Wf[l, n, c] = torch_fc_weight[n, c*L + l], built in the wrapper, so
    #  this matches PyTorch's c*L + l flatten order exactly.)
    h3_3d = h3.reshape(L, tb, h3.shape[1])       # free major-dim split
    scores = jnp.einsum("ltc,lnc->ltn", h3_3d, wf_ref[...],
                        preferred_element_type=jnp.float32)
    out = jnp.sum(scores, axis=0) + bf_ref[...]  # (tb, n_categories)
    out_ref[...] = out.astype(out_ref.dtype)


def cnn_forward(x, w1, b1, w2, b2, w3, b3, wf, bf, tb=TB):
    """x: (B, L, n_features) -> (B, n_categories)."""
    B, L, F = x.shape
    n_cat = wf.shape[1]

    # Sample tile: multiple of 8 (sublane), capped at tb; pad batch to a
    # multiple of it, then go l-major: (L, B_pad, F).
    tb_eff = min(tb, max(8, ((B + 7) // 8) * 8))
    B_pad = ((B + tb_eff - 1) // tb_eff) * tb_eff
    if B_pad != B:
        x = jnp.pad(x, ((0, B_pad - B), (0, 0), (0, 0)))
    x_t = jnp.transpose(x, (1, 0, 2))            # (L, B_pad, F)

    def full_spec(a):
        nd = a.ndim
        return pl.BlockSpec(a.shape, lambda i, _nd=nd: (0,) * _nd)

    out = pl.pallas_call(
        cnn_kernel,
        out_shape=jax.ShapeDtypeStruct((B_pad, n_cat), jnp.float32),
        grid_spec=pltpu.PrefetchScalarGridSpec(
            num_scalar_prefetch=0,
            grid=(B_pad // tb_eff,),
            in_specs=[
                pl.BlockSpec((L, tb_eff, F), lambda i: (0, i, 0)),
                full_spec(w1), full_spec(b1),
                full_spec(w2), full_spec(b2),
                full_spec(w3), full_spec(b3),
                full_spec(wf), full_spec(bf),
            ],
            out_specs=pl.BlockSpec((tb_eff, n_cat), lambda i: (i, 0)),
        ),
        compiler_params=pltpu.CompilerParams(
            dimension_semantics=("parallel",)),
    )(x_t, w1, b1, w2, b2, w3, b3, wf, bf)
    return out[:B]


def ref_forward(x_blf, tw1, tb1, tw2, tb2, tw3, tb3, twf, tbf):
    """Pure-JAX reference matching the PyTorch module exactly (NCL layout)."""
    h = jnp.transpose(x_blf, (0, 2, 1))          # (B, C, L)

    def conv(h, w, b):
        y = jax.lax.conv_general_dilated(
            h, w, window_strides=(1,), padding=((1, 1),),
            dimension_numbers=("NCH", "OIH", "NCH"))
        return jnp.maximum(y + b[None, :, None], 0.0)

    h = conv(h, tw1, tb1)
    h = conv(h, tw2, tb2)
    h = conv(h, tw3, tb3)
    flat = h.reshape(h.shape[0], -1)             # (B, C*L), c-major
    return flat @ twf.T + tbf


if __name__ == "__main__":
    key = jax.random.PRNGKey(0)
    ks = jax.random.split(key, 10)
    B = 2

    # Parameters in PyTorch layout, deterministic init.
    tw1 = jax.random.normal(ks[0], (C1, N_FEATURES, 3), jnp.float32) * 0.1
    tb1 = jax.random.normal(ks[1], (C1,), jnp.float32) * 0.1
    tw2 = jax.random.normal(ks[2], (C2, C1, 3), jnp.float32) * 0.05
    tb2 = jax.random.normal(ks[3], (C2,), jnp.float32) * 0.05
    tw3 = jax.random.normal(ks[4], (C3, C2, 3), jnp.float32) * 0.05
    tb3 = jax.random.normal(ks[5], (C3,), jnp.float32) * 0.05
    twf = jax.random.normal(ks[6], (N_CATEGORIES, C3 * SEQ_LEN), jnp.float32) * 0.02
    tbf = jax.random.normal(ks[7], (N_CATEGORIES,), jnp.float32) * 0.02

    # Input: PyTorch forward expects (B, seq_length, n_features).
    x = jax.random.normal(ks[8], (B, SEQ_LEN, N_FEATURES), jnp.float32)

    # Re-layout parameters for the channels-last kernel.
    w1 = jnp.transpose(tw1, (2, 1, 0))           # (3, Cin, Cout)
    w2 = jnp.transpose(tw2, (2, 1, 0))
    w3 = jnp.transpose(tw3, (2, 1, 0))
    b1 = tb1.reshape(1, -1)
    b2 = tb2.reshape(1, -1)
    b3 = tb3.reshape(1, -1)
    # PyTorch flattens (B, C, L) as index c*L + l; kernel uses per-(l) blocks
    # contracting on c, so build Wf[l, n, c] = twf[n, c*L + l]  -> (L, N, C)
    # (lane-dense: C=128 on the lane axis).
    wf = jnp.transpose(twf.reshape(N_CATEGORIES, C3, SEQ_LEN), (2, 0, 1))
    bf = tbf.reshape(1, -1)

    out = cnn_forward(x, w1, b1, w2, b2, w3, b3, wf, bf)
    out = jax.block_until_ready(out)

    ref = ref_forward(x, tw1, tb1, tw2, tb2, tw3, tb3, twf, tbf)
    ref = jax.block_until_ready(ref)

    if not jnp.allclose(out, ref, atol=1e-3, rtol=1e-3):
        max_err = float(jnp.max(jnp.abs(out - ref)))
        raise AssertionError(f"Pallas kernel mismatch vs reference, max err {max_err}")

    print("KERNEL_OK")
</pallas_src>

<mosaic_0001>
module attributes {stable_mosaic.version = 11 : i64} {
  func.func @cnn_kernel(%arg0: i32, %arg1: memref<32x8x20xf32, #tpu.memory_space<vmem>>, %arg2: memref<3x20x64xf32, #tpu.memory_space<vmem>>, %arg3: memref<1x64xf32, #tpu.memory_space<vmem>>, %arg4: memref<3x64x128xf32, #tpu.memory_space<vmem>>, %arg5: memref<1x128xf32, #tpu.memory_space<vmem>>, %arg6: memref<3x128x128xf32, #tpu.memory_space<vmem>>, %arg7: memref<1x128xf32, #tpu.memory_space<vmem>>, %arg8: memref<32x10x128xf32, #tpu.memory_space<vmem>>, %arg9: memref<1x10xf32, #tpu.memory_space<vmem>>, %arg10: memref<8x10xf32, #tpu.memory_space<vmem>>) attributes {dimension_semantics = [#tpu.dimension_semantics<parallel>], iteration_bounds = array<i64: 1>, scalar_prefetch = 0 : i64, scratch_operands = 0 : i64, tpu.core_type = #tpu.core_type<tc>, window_params = [{transform_indices = @transform_0, window_bounds = array<i64: 32, 8, 20>}, {pipeline_mode = #tpu.pipeline_mode<synchronous>, transform_indices = @transform_1, window_bounds = array<i64: 3, 20, 64>}, {pipeline_mode = #tpu.pipeline_mode<synchronous>, transform_indices = @transform_2, window_bounds = array<i64: 1, 64>}, {pipeline_mode = #tpu.pipeline_mode<synchronous>, transform_indices = @transform_3, window_bounds = array<i64: 3, 64, 128>}, {pipeline_mode = #tpu.pipeline_mode<synchronous>, transform_indices = @transform_4, window_bounds = array<i64: 1, 128>}, {pipeline_mode = #tpu.pipeline_mode<synchronous>, transform_indices = @transform_5, window_bounds = array<i64: 3, 128, 128>}, {pipeline_mode = #tpu.pipeline_mode<synchronous>, transform_indices = @transform_6, window_bounds = array<i64: 1, 128>}, {pipeline_mode = #tpu.pipeline_mode<synchronous>, transform_indices = @transform_7, window_bounds = array<i64: 32, 10, 128>}, {pipeline_mode = #tpu.pipeline_mode<synchronous>, transform_indices = @transform_8, window_bounds = array<i64: 1, 10>}, {transform_indices = @transform_9, window_bounds = array<i64: 8, 10>}]} {
    %c0 = arith.constant 0 : index
    %c0_0 = arith.constant 0 : index
    %c0_1 = arith.constant 0 : index
    %0 = vector.load %arg1[%c0, %c0_0, %c0_1] : memref<32x8x20xf32, #tpu.memory_space<vmem>>, vector<32x8x20xf32>
    %1 = vector.shape_cast %0 : vector<32x8x20xf32> to vector<256x20xf32>
    %2 = tpu.iota {dimensions = array<i32: 0>} : vector<256x1xi32>
    %c8_i32 = arith.constant 8 : i32
    %3 = vector.broadcast %c8_i32 : i32 to vector<256x1xi32>
    %4 = arith.cmpi sge, %2, %3 : vector<256x1xi32>
    %c248_i32 = arith.constant 248 : i32
    %5 = vector.broadcast %c248_i32 : i32 to vector<256x1xi32>
    %6 = arith.cmpi slt, %2, %5 : vector<256x1xi32>
    %c8_i32_2 = arith.constant 8 : i32
    %7 = tpu.dynamic_rotate %1 by %c8_i32_2 dim 0 : vector<256x20xf32>, i32 -> vector<256x20xf32>
    %cst = arith.constant 0.000000e+00 : f32
    %8 = vector.shape_cast %4 : vector<256x1xi1> to vector<256x1xi1>
    %9 = vector.broadcast %8 : vector<256x1xi1> to vector<256x20xi1>
    %10 = vector.broadcast %cst : f32 to vector<256x20xf32>
    %11 = arith.select %9, %7, %10 : vector<256x20xi1>, vector<256x20xf32>
    %c248_i32_3 = arith.constant 248 : i32
    %12 = tpu.dynamic_rotate %1 by %c248_i32_3 dim 0 : vector<256x20xf32>, i32 -> vector<256x20xf32>
    %cst_4 = arith.constant 0.000000e+00 : f32
    %13 = vector.shape_cast %6 : vector<256x1xi1> to vector<256x1xi1>
    %14 = vector.broadcast %13 : vector<256x1xi1> to vector<256x20xi1>
    %15 = vector.broadcast %cst_4 : f32 to vector<256x20xf32>
    %16 = arith.select %14, %12, %15 : vector<256x20xi1>, vector<256x20xf32>
    %c0_5 = arith.constant 0 : index
    %c0_6 = arith.constant 0 : index
    %c0_7 = arith.constant 0 : index
    %17 = vector.load %arg2[%c0_5, %c0_6, %c0_7] : memref<3x20x64xf32, #tpu.memory_space<vmem>>, vector<1x20x64xf32>
    %18 = vector.shape_cast %17 : vector<1x20x64xf32> to vector<20x64xf32>
    %cst_8 = arith.constant dense<0.000000e+00> : vector<256x64xf32>
    %19 = tpu.matmul %11, %18, %cst_8 {dimension_numbers = #tpu.dot_dimension_numbers<[1], [0], [0], [1], [0, 0, 1, 1], [], []>} : vector<256x20xf32>, vector<20x64xf32>, vector<256x64xf32> -> vector<256x64xf32>
    %c1 = arith.constant 1 : index
    %c0_9 = arith.constant 0 : index
    %c0_10 = arith.constant 0 : index
    %20 = vector.load %arg2[%c1, %c0_9, %c0_10] : memref<3x20x64xf32, #tpu.memory_space<vmem>>, vector<1x20x64xf32>
    %21 = vector.shape_cast %20 : vector<1x20x64xf32> to vector<20x64xf32>
    %cst_11 = arith.constant dense<0.000000e+00> : vector<256x64xf32>
    %22 = tpu.matmul %1, %21, %cst_11 {dimension_numbers = #tpu.dot_dimension_numbers<[1], [0], [0], [1], [0, 0, 1, 1], [], []>} : vector<256x20xf32>, vector<20x64xf32>, vector<256x64xf32> -> vector<256x64xf32>
    %23 = arith.addf %19, %22 : vector<256x64xf32>
    %c2 = arith.constant 2 : index
    %c0_12 = arith.constant 0 : index
    %c0_13 = arith.constant 0 : index
    %24 = vector.load %arg2[%c2, %c0_12, %c0_13] : memref<3x20x64xf32, #tpu.memory_space<vmem>>, vector<1x20x64xf32>
    %25 = vector.shape_cast %24 : vector<1x20x64xf32> to vector<20x64xf32>
    %cst_14 = arith.constant dense<0.000000e+00> : vector<256x64xf32>
    %26 = tpu.matmul %16, %25, %cst_14 {dimension_numbers = #tpu.dot_dimension_numbers<[1], [0], [0], [1], [0, 0, 1, 1], [], []>} : vector<256x20xf32>, vector<20x64xf32>, vector<256x64xf32> -> vector<256x64xf32>
    %27 = arith.addf %23, %26 : vector<256x64xf32>
    %c0_15 = arith.constant 0 : index
    %c0_16 = arith.constant 0 : index
    %28 = vector.load %arg3[%c0_15, %c0_16] : memref<1x64xf32, #tpu.memory_space<vmem>>, vector<1x64xf32>
    %29 = vector.broadcast %28 : vector<1x64xf32> to vector<256x64xf32>
    %30 = arith.addf %27, %29 : vector<256x64xf32>
    %cst_17 = arith.constant 0.000000e+00 : f32
    %31 = vector.broadcast %cst_17 : f32 to vector<256x64xf32>
    %32 = arith.maximumf %30, %31 : vector<256x64xf32>
    %c8_i32_18 = arith.constant 8 : i32
    %33 = tpu.dynamic_rotate %32 by %c8_i32_18 dim 0 : vector<256x64xf32>, i32 -> vector<256x64xf32>
    %cst_19 = arith.constant 0.000000e+00 : f32
    %34 = vector.shape_cast %4 : vector<256x1xi1> to vector<256x1xi1>
    %35 = vector.broadcast %34 : vector<256x1xi1> to vector<256x64xi1>
    %36 = vector.broadcast %cst_19 : f32 to vector<256x64xf32>
    %37 = arith.select %35, %33, %36 : vector<256x64xi1>, vector<256x64xf32>
    %c248_i32_20 = arith.constant 248 : i32
    %38 = tpu.dynamic_rotate %32 by %c248_i32_20 dim 0 : vector<256x64xf32>, i32 -> vector<256x64xf32>
    %cst_21 = arith.constant 0.000000e+00 : f32
    %39 = vector.shape_cast %6 : vector<256x1xi1> to vector<256x1xi1>
    %40 = vector.broadcast %39 : vector<256x1xi1> to vector<256x64xi1>
    %41 = vector.broadcast %cst_21 : f32 to vector<256x64xf32>
    %42 = arith.select %40, %38, %41 : vector<256x64xi1>, vector<256x64xf32>
    %c0_22 = arith.constant 0 : index
    %c0_23 = arith.constant 0 : index
    %c0_24 = arith.constant 0 : index
    %43 = vector.load %arg4[%c0_22, %c0_23, %c0_24] : memref<3x64x128xf32, #tpu.memory_space<vmem>>, vector<1x64x128xf32>
    %44 = vector.shape_cast %43 : vector<1x64x128xf32> to vector<64x128xf32>
    %cst_25 = arith.constant dense<0.000000e+00> : vector<256x128xf32>
    %45 = tpu.matmul %37, %44, %cst_25 {dimension_numbers = #tpu.dot_dimension_numbers<[1], [0], [0], [1], [0, 0, 1, 1], [], []>} : vector<256x64xf32>, vector<64x128xf32>, vector<256x128xf32> -> vector<256x128xf32>
    %c1_26 = arith.constant 1 : index
    %c0_27 = arith.constant 0 : index
    %c0_28 = arith.constant 0 : index
    %46 = vector.load %arg4[%c1_26, %c0_27, %c0_28] : memref<3x64x128xf32, #tpu.memory_space<vmem>>, vector<1x64x128xf32>
    %47 = vector.shape_cast %46 : vector<1x64x128xf32> to vector<64x128xf32>
    %cst_29 = arith.constant dense<0.000000e+00> : vector<256x128xf32>
    %48 = tpu.matmul %32, %47, %cst_29 {dimension_numbers = #tpu.dot_dimension_numbers<[1], [0], [0], [1], [0, 0, 1, 1], [], []>} : vector<256x64xf32>, vector<64x128xf32>, vector<256x128xf32> -> vector<256x128xf32>
    %49 = arith.addf %45, %48 : vector<256x128xf32>
    %c2_30 = arith.constant 2 : index
    %c0_31 = arith.constant 0 : index
    %c0_32 = arith.constant 0 : index
    %50 = vector.load %arg4[%c2_30, %c0_31, %c0_32] : memref<3x64x128xf32, #tpu.memory_space<vmem>>, vector<1x64x128xf32>
    %51 = vector.shape_cast %50 : vector<1x64x128xf32> to vector<64x128xf32>
    %cst_33 = arith.constant dense<0.000000e+00> : vector<256x128xf32>
    %52 = tpu.matmul %42, %51, %cst_33 {dimension_numbers = #tpu.dot_dimension_numbers<[1], [0], [0], [1], [0, 0, 1, 1], [], []>} : vector<256x64xf32>, vector<64x128xf32>, vector<256x128xf32> -> vector<256x128xf32>
    %53 = arith.addf %49, %52 : vector<256x128xf32>
    %c0_34 = arith.constant 0 : index
    %c0_35 = arith.constant 0 : index
    %54 = vector.load %arg5[%c0_34, %c0_35] : memref<1x128xf32, #tpu.memory_space<vmem>>, vector<1x128xf32>
    %55 = vector.broadcast %54 : vector<1x128xf32> to vector<256x128xf32>
    %56 = arith.addf %53, %55 : vector<256x128xf32>
    %cst_36 = arith.constant 0.000000e+00 : f32
    %57 = vector.broadcast %cst_36 : f32 to vector<256x128xf32>
    %58 = arith.maximumf %56, %57 : vector<256x128xf32>
    %c8_i32_37 = arith.constant 8 : i32
    %59 = tpu.dynamic_rotate %58 by %c8_i32_37 dim 0 : vector<256x128xf32>, i32 -> vector<256x128xf32>
    %cst_38 = arith.constant 0.000000e+00 : f32
    %60 = vector.shape_cast %4 : vector<256x1xi1> to vector<256x1xi1>
    %61 = vector.broadcast %60 : vector<256x1xi1> to vector<256x128xi1>
    %62 = vector.broadcast %cst_38 : f32 to vector<256x128xf32>
    %63 = arith.select %61, %59, %62 : vector<256x128xi1>, vector<256x128xf32>
    %c248_i32_39 = arith.constant 248 : i32
    %64 = tpu.dynamic_rotate %58 by %c248_i32_39 dim 0 : vector<256x128xf32>, i32 -> vector<256x128xf32>
    %cst_40 = arith.constant 0.000000e+00 : f32
    %65 = vector.shape_cast %6 : vector<256x1xi1> to vector<256x1xi1>
    %66 = vector.broadcast %65 : vector<256x1xi1> to vector<256x128xi1>
    %67 = vector.broadcast %cst_40 : f32 to vector<256x128xf32>
    %68 = arith.select %66, %64, %67 : vector<256x128xi1>, vector<256x128xf32>
    %c0_41 = arith.constant 0 : index
    %c0_42 = arith.constant 0 : index
    %c0_43 = arith.constant 0 : index
    %69 = vector.load %arg6[%c0_41, %c0_42, %c0_43] : memref<3x128x128xf32, #tpu.memory_space<vmem>>, vector<1x128x128xf32>
    %70 = vector.shape_cast %69 : vector<1x128x128xf32> to vector<128x128xf32>
    %cst_44 = arith.constant dense<0.000000e+00> : vector<256x128xf32>
    %71 = tpu.matmul %63, %70, %cst_44 {dimension_numbers = #tpu.dot_dimension_numbers<[1], [0], [0], [1], [0, 0, 1, 1], [], []>} : vector<256x128xf32>, vector<128x128xf32>, vector<256x128xf32> -> vector<256x128xf32>
    %c1_45 = arith.constant 1 : index
    %c0_46 = arith.constant 0 : index
    %c0_47 = arith.constant 0 : index
    %72 = vector.load %arg6[%c1_45, %c0_46, %c0_47] : memref<3x128x128xf32, #tpu.memory_space<vmem>>, vector<1x128x128xf32>
    %73 = vector.shape_cast %72 : vector<1x128x128xf32> to vector<128x128xf32>
    %cst_48 = arith.constant dense<0.000000e+00> : vector<256x128xf32>
    %74 = tpu.matmul %58, %73, %cst_48 {dimension_numbers = #tpu.dot_dimension_numbers<[1], [0], [0], [1], [0, 0, 1, 1], [], []>} : vector<256x128xf32>, vector<128x128xf32>, vector<256x128xf32> -> vector<256x128xf32>
    %75 = arith.addf %71, %74 : vector<256x128xf32>
    %c2_49 = arith.constant 2 : index
    %c0_50 = arith.constant 0 : index
    %c0_51 = arith.constant 0 : index
    %76 = vector.load %arg6[%c2_49, %c0_50, %c0_51] : memref<3x128x128xf32, #tpu.memory_space<vmem>>, vector<1x128x128xf32>
    %77 = vector.shape_cast %76 : vector<1x128x128xf32> to vector<128x128xf32>
    %cst_52 = arith.constant dense<0.000000e+00> : vector<256x128xf32>
    %78 = tpu.matmul %68, %77, %cst_52 {dimension_numbers = #tpu.dot_dimension_numbers<[1], [0], [0], [1], [0, 0, 1, 1], [], []>} : vector<256x128xf32>, vector<128x128xf32>, vector<256x128xf32> -> vector<256x128xf32>
    %79 = arith.addf %75, %78 : vector<256x128xf32>
    %c0_53 = arith.constant 0 : index
    %c0_54 = arith.constant 0 : index
    %80 = vector.load %arg7[%c0_53, %c0_54] : memref<1x128xf32, #tpu.memory_space<vmem>>, vector<1x128xf32>
    %81 = vector.broadcast %80 : vector<1x128xf32> to vector<256x128xf32>
    %82 = arith.addf %79, %81 : vector<256x128xf32>
    %cst_55 = arith.constant 0.000000e+00 : f32
    %83 = vector.broadcast %cst_55 : f32 to vector<256x128xf32>
    %84 = arith.maximumf %82, %83 : vector<256x128xf32>
    %85 = vector.shape_cast %84 : vector<256x128xf32> to vector<32x8x128xf32>
    %c0_56 = arith.constant 0 : index
    %c0_57 = arith.constant 0 : index
    %c0_58 = arith.constant 0 : index
    %86 = vector.load %arg8[%c0_56, %c0_57, %c0_58] : memref<32x10x128xf32, #tpu.memory_space<vmem>>, vector<32x10x128xf32>
    "tpu.trace_start"() <{level = 10 : i32, message = "ltc,lnc->ltn"}> : () -> ()
    %cst_59 = arith.constant dense<0.000000e+00> : vector<32x8x10xf32>
    %87 = tpu.matmul %85, %86, %cst_59 {dimension_numbers = #tpu.dot_dimension_numbers<[2], [2], [1], [1], [0, 0, 0, 1, 1, 1], [0], [0]>} : vector<32x8x128xf32>, vector<32x10x128xf32>, vector<32x8x10xf32> -> vector<32x8x10xf32>
    "tpu.trace_stop"() : () -> ()
    %cst_60 = arith.constant dense<0.000000e+00> : vector<8x10xf32>
    %88 = vector.multi_reduction <add>, %87, %cst_60 [0] : vector<32x8x10xf32> to vector<8x10xf32>
    %c0_61 = arith.constant 0 : index
    %c0_62 = arith.constant 0 : index
    %89 = vector.load %arg9[%c0_61, %c0_62] : memref<1x10xf32, #tpu.memory_space<vmem>>, vector<1x10xf32>
    %90 = vector.broadcast %89 : vector<1x10xf32> to vector<8x10xf32>
    %91 = arith.addf %88, %90 : vector<8x10xf32>
    %c0_63 = arith.constant 0 : index
    %c0_64 = arith.constant 0 : index
    %92 = vector.load %arg10[%c0_63, %c0_64] : memref<8x10xf32, #tpu.memory_space<vmem>>, vector<8x10xf32>
    tpu.vector_store %arg10[%c0_63, %c0_64], %91 {strides = array<i32>} : memref<8x10xf32, #tpu.memory_space<vmem>>, vector<8x10xf32>,
    return
  }
  func.func @transform_0(%arg0: i32) -> (i32, i32, i32) {
    %c0_i32 = arith.constant 0 : i32
    %c0_i32_0 = arith.constant 0 : i32
    %c0_i32_1 = arith.constant 0 : i32
    return %c0_i32, %arg0, %c0_i32_0 : i32, i32, i32
  }
  func.func @transform_1(%arg0: i32) -> (i32, i32, i32) {
    %c0_i32 = arith.constant 0 : i32
    %c0_i32_0 = arith.constant 0 : i32
    %c0_i32_1 = arith.constant 0 : i32
    %c0_i32_2 = arith.constant 0 : i32
    return %c0_i32, %c0_i32_0, %c0_i32_1 : i32, i32, i32
  }
  func.func @transform_2(%arg0: i32) -> (i32, i32) {
    %c0_i32 = arith.constant 0 : i32
    %c0_i32_0 = arith.constant 0 : i32
    %c0_i32_1 = arith.constant 0 : i32
    return %c0_i32, %c0_i32_0 : i32, i32
  }
  func.func @transform_3(%arg0: i32) -> (i32, i32, i32) {
    %c0_i32 = arith.constant 0 : i32
    %c0_i32_0 = arith.constant 0 : i32
    %c0_i32_1 = arith.constant 0 : i32
    %c0_i32_2 = arith.constant 0 : i32
    return %c0_i32, %c0_i32_0, %c0_i32_1 : i32, i32, i32
  }
  func.func @transform_4(%arg0: i32) -> (i32, i32) {
    %c0_i32 = arith.constant 0 : i32
    %c0_i32_0 = arith.constant 0 : i32
    %c0_i32_1 = arith.constant 0 : i32
    return %c0_i32, %c0_i32_0 : i32, i32
  }
  func.func @transform_5(%arg0: i32) -> (i32, i32, i32) {
    %c0_i32 = arith.constant 0 : i32
    %c0_i32_0 = arith.constant 0 : i32
    %c0_i32_1 = arith.constant 0 : i32
    %c0_i32_2 = arith.constant 0 : i32
    return %c0_i32, %c0_i32_0, %c0_i32_1 : i32, i32, i32
  }
  func.func @transform_6(%arg0: i32) -> (i32, i32) {
    %c0_i32 = arith.constant 0 : i32
    %c0_i32_0 = arith.constant 0 : i32
    %c0_i32_1 = arith.constant 0 : i32
    return %c0_i32, %c0_i32_0 : i32, i32
  }
  func.func @transform_7(%arg0: i32) -> (i32, i32, i32) {
    %c0_i32 = arith.constant 0 : i32
    %c0_i32_0 = arith.constant 0 : i32
    %c0_i32_1 = arith.constant 0 : i32
    %c0_i32_2 = arith.constant 0 : i32
    return %c0_i32, %c0_i32_0, %c0_i32_1 : i32, i32, i32
  }
  func.func @transform_8(%arg0: i32) -> (i32, i32) {
    %c0_i32 = arith.constant 0 : i32
    %c0_i32_0 = arith.constant 0 : i32
    %c0_i32_1 = arith.constant 0 : i32
    return %c0_i32, %c0_i32_0 : i32, i32
  }
  func.func @transform_9(%arg0: i32) -> (i32, i32) {
    %c0_i32 = arith.constant 0 : i32
    %c0_i32_0 = arith.constant 0 : i32
    return %arg0, %c0_i32 : i32, i32
  }
}

</mosaic_0001>

<llo_original>
// kernel: tpu_custom_call.1
$region0: #{tpu_custom_call.1}
  #allocation0 [shape = 'u32[]', space=smem, size = 0x4, offset = 0x4, fixed_abs, tag = 'smem constant byte address 0x4 - core index']
  #allocation1 [shape = 'u32[144,128]{1,0:T(1,128)}', space=vmem, size = 0x12000, scoped, tag = 'internal scratch']
  %s0 = inlined_call_operand.vmem [shape: f32[32,8,20], index: 0, kind: input, shape index: {}]
  %s1 = inlined_call_operand.vmem [shape: f32[3,20,64], index: 1, kind: input, shape index: {}]
  %s2 = inlined_call_operand.vmem [shape: f32[1,64], index: 2, kind: input, shape index: {}]
  %s3 = inlined_call_operand.vmem [shape: f32[3,64,128], index: 3, kind: input, shape index: {}]
  %s4 = inlined_call_operand.vmem [shape: f32[1,128], index: 4, kind: input, shape index: {}]
  %s5 = inlined_call_operand.vmem [shape: f32[3,128,128], index: 5, kind: input, shape index: {}]
  %s6 = inlined_call_operand.vmem [shape: f32[1,128], index: 6, kind: input, shape index: {}]
  %s7 = inlined_call_operand.vmem [shape: f32[32,10,128], index: 7, kind: input, shape index: {}]
  %s8 = inlined_call_operand.vmem [shape: f32[1,10], index: 8, kind: input, shape index: {}]
  %s9 = inlined_call_operand.hbm [shape: f32[8,10], index: 9, kind: output, shape index: {}]
  %s10 = sld [smem:[#allocation0]]
  $region46: #{tpu_custom_call.1} parent=0
    _
  %s12 = ssub.s32 1, %s10
  %s13 = scalar_select 0, %s12, %s10
  $region1: #{tpu_custom_call.1} parent=0
    #allocation2 [shape = 'u8[4096]{0}', space=vmem, size = 0x1000, scoped, tag = 'output window, operand 0, single buffered']
    #allocation3 [shape = 's32[1]{0}', space=sflag, size = 0x4, scoped, tag = 'scoped memory for tpu_custom_call.1']
    %14 = vsyncpa [#allocation3], 0
    // Predicated region
    $region2: #{tpu_custom_call.1} parent=1 // pred_check
      _
    $region3: #{tpu_custom_call.1} parent=1 // pred_check_branch
      %16 = sbr.rel (0) target = $region5
    $region4: #{tpu_custom_call.1} parent=1 // pred_region
      _
    $region5: #{tpu_custom_call.1} parent=1 // pred_fallthru
      _
    // Predicated region
    $region6: #{tpu_custom_call.1} parent=1 // pred_check
      _
    $region7: #{tpu_custom_call.1} parent=1 // pred_check_branch
      %18 = sbr.rel (0) target = $region9
    $region8: #{tpu_custom_call.1} parent=1 // pred_region
      _
    $region9: #{tpu_custom_call.1} parent=1 // pred_fallthru
      _
    // Predicated region
    $region10: #{tpu_custom_call.1} parent=1 // pred_check
      _
    $region11: #{tpu_custom_call.1} parent=1 // pred_check_branch
      %20 = sbr.rel (0) target = $region13
    $region12: #{tpu_custom_call.1} parent=1 // pred_region
      _
    $region13: #{tpu_custom_call.1} parent=1 // pred_fallthru
      _
    // Predicated region
    $region14: #{tpu_custom_call.1} parent=1 // pred_check
      _
    $region15: #{tpu_custom_call.1} parent=1 // pred_check_branch
      %22 = sbr.rel (0) target = $region17
    $region16: #{tpu_custom_call.1} parent=1 // pred_region
      _
    $region17: #{tpu_custom_call.1} parent=1 // pred_fallthru
      _
    // Predicated region
    $region18: #{tpu_custom_call.1} parent=1 // pred_check
      _
    $region19: #{tpu_custom_call.1} parent=1 // pred_check_branch
      %24 = sbr.rel (0) target = $region21
    $region20: #{tpu_custom_call.1} parent=1 // pred_region
      _
    $region21: #{tpu_custom_call.1} parent=1 // pred_fallthru
      _
    // Predicated region
    $region22: #{tpu_custom_call.1} parent=1 // pred_check
      _
    $region23: #{tpu_custom_call.1} parent=1 // pred_check_branch
      %26 = sbr.rel (0) target = $region25
    $region24: #{tpu_custom_call.1} parent=1 // pred_region
      _
    $region25: #{tpu_custom_call.1} parent=1 // pred_fallthru
      _
    // Predicated region
    $region26: #{tpu_custom_call.1} parent=1 // pred_check
      _
    $region27: #{tpu_custom_call.1} parent=1 // pred_check_branch
      %28 = sbr.rel (0) target = $region29
    $region28: #{tpu_custom_call.1} parent=1 // pred_region
      _
    $region29: #{tpu_custom_call.1} parent=1 // pred_fallthru
      _
    // Predicated region
    $region30: #{tpu_custom_call.1} parent=1 // pred_check
      _
    $region31: #{tpu_custom_call.1} parent=1 // pred_check_branch
      %30 = sbr.rel (0) target = $region33
    $region32: #{tpu_custom_call.1} parent=1 // pred_region
      _
    $region33: #{tpu_custom_call.1} parent=1 // pred_fallthru
      _
    // Predicated region
    $region34: #{tpu_custom_call.1} parent=1 // pred_check
      _
    $region35: #{tpu_custom_call.1} parent=1 // pred_check_branch
      %32 = sbr.rel (0) target = $region37
    $region36: #{tpu_custom_call.1} parent=1 // pred_region
      _
    $region37: #{tpu_custom_call.1} parent=1 // pred_fallthru
      _
    %v33 = vld [vmem:[%s0] sm:$0xff]
    %v34 = vld [vmem:[%s0 + $0x8] sm:$0xff]
    %v35 = vld [vmem:[%s0 + $0x10] sm:$0xff]
    %v36 = vld [vmem:[%s0 + $0x18] sm:$0xff]
    %v37 = vld [vmem:[%s0 + $0x20] sm:$0xff]
    %v38 = vld [vmem:[%s0 + $0x28] sm:$0xff]
    %v39 = vld [vmem:[%s0 + $0x30] sm:$0xff]
    %v40 = vld [vmem:[%s0 + $0x38] sm:$0xff]
    %v41 = vld [vmem:[%s0 + $0x40] sm:$0xff]
    %v42 = vld [vmem:[%s0 + $0x48] sm:$0xff]
    %v43 = vld [vmem:[%s0 + $0x50] sm:$0xff]
    %v44 = vld [vmem:[%s0 + $0x58] sm:$0xff]
    %v45 = vld [vmem:[%s0 + $0x60] sm:$0xff]
    %v46 = vld [vmem:[%s0 + $0x68] sm:$0xff]
    %v47 = vld [vmem:[%s0 + $0x70] sm:$0xff]
    %v48 = vld [vmem:[%s0 + $0x78] sm:$0xff]
    %v49 = vld [vmem:[%s0 + $0x80] sm:$0xff]
    %v50 = vld [vmem:[%s0 + $0x88] sm:$0xff]
    %v51 = vld [vmem:[%s0 + $0x90] sm:$0xff]
    %v52 = vld [vmem:[%s0 + $0x98] sm:$0xff]
    %v53 = vld [vmem:[%s0 + $0xa0] sm:$0xff]
    %v54 = vld [vmem:[%s0 + $0xa8] sm:$0xff]
    %v55 = vld [vmem:[%s0 + $0xb0] sm:$0xff]
    %v56 = vld [vmem:[%s0 + $0xb8] sm:$0xff]
    %v57 = vld [vmem:[%s0 + $0xc0] sm:$0xff]
    %v58 = vld [vmem:[%s0 + $0xc8] sm:$0xff]
    %v59 = vld [vmem:[%s0 + $0xd0] sm:$0xff]
    %v60 = vld [vmem:[%s0 + $0xd8] sm:$0xff]
    %v61 = vld [vmem:[%s0 + $0xe0] sm:$0xff]
    %v62 = vld [vmem:[%s0 + $0xe8] sm:$0xff]
    %v63 = vld [vmem:[%s0 + $0xf0] sm:$0xff]
    %v64 = vld [vmem:[%s0 + $0xf8] sm:$0xff]
    %v65 = vlaneseq
    %v66 = vshrl.u32 %v65, 7
    %v67 = vadd.s32 %v66, 8
    %v68 = vadd.s32 %v66, 16
    %v69 = vadd.s32 %v66, 24
    %v70 = vadd.s32 %v66, 32
    %v71 = vadd.s32 %v66, 40
    %v72 = vadd.s32 %v66, 48
    %v73 = vadd.s32 %v66, 56
    %v74 = vadd.s32 %v66, 64
    %v75 = vadd.s32 %v66, 72
    %v76 = vadd.s32 %v66, 80
    %v77 = vadd.s32 %v66, 88
    %v78 = vadd.s32 %v66, 96
    %v79 = vadd.s32 %v66, 104
    %v80 = vadd.s32 %v66, 112
    %v81 = vadd.s32 %v66, 120
    %v82 = vadd.s32 %v66, 128
    %v83 = vadd.s32 %v66, 136
    %v84 = vadd.s32 %v66, 144
    %v85 = vadd.s32 %v66, 152
    %v86 = vadd.s32 %v66, 160
    %v87 = vadd.s32 %v66, 168
    %v88 = vadd.s32 %v66, 176
    %v89 = vadd.s32 %v66, 184
    %v90 = vadd.s32 %v66, 192
    %v91 = vadd.s32 %v66, 200
    %v92 = vadd.s32 %v66, 208
    %v93 = vadd.s32 %v66, 216
    %v94 = vadd.s32 %v66, 224
    %v95 = vadd.s32 %v66, 232
    %v96 = vadd.s32 %v66, 240
    %v97 = vadd.s32 %v66, 248
    %vm98 = vcmp.ge.s32.totalorder %v66, 8
    %vm99 = vcmp.ge.s32.totalorder %v67, 8
    %vm100 = vcmp.ge.s32.totalorder %v68, 8
    %vm101 = vcmp.ge.s32.totalorder %v69, 8
    %vm102 = vcmp.ge.s32.totalorder %v70, 8
    %vm103 = vcmp.ge.s32.totalorder %v71, 8
    %vm104 = vcmp.ge.s32.totalorder %v72, 8
    %vm105 = vcmp.ge.s32.totalorder %v73, 8
    %vm106 = vcmp.ge.s32.totalorder %v74, 8
    %vm107 = vcmp.ge.s32.totalorder %v75, 8
    %vm108 = vcmp.ge.s32.totalorder %v76, 8
    %vm109 = vcmp.ge.s32.totalorder %v77, 8
    %vm110 = vcmp.ge.s32.totalorder %v78, 8
    %vm111 = vcmp.ge.s32.totalorder %v79, 8
    %vm112 = vcmp.ge.s32.totalorder %v80, 8
    %vm113 = vcmp.ge.s32.totalorder %v81, 8
    %vm114 = vcmp.ge.s32.totalorder %v82, 8
    %vm115 = vcmp.ge.s32.totalorder %v83, 8
    %vm116 = vcmp.ge.s32.totalorder %v84, 8
    %vm117 = vcmp.ge.s32.totalorder %v85, 8
    %vm118 = vcmp.ge.s32.totalorder %v86, 8
    %vm119 = vcmp.ge.s32.totalorder %v87, 8
    %vm120 = vcmp.ge.s32.totalorder %v88, 8
    %vm121 = vcmp.ge.s32.totalorder %v89, 8
    %vm122 = vcmp.ge.s32.totalorder %v90, 8
    %vm123 = vcmp.ge.s32.totalorder %v91, 8
    %vm124 = vcmp.ge.s32.totalorder %v92, 8
    %vm125 = vcmp.ge.s32.totalorder %v93, 8
    %vm126 = vcmp.ge.s32.totalorder %v94, 8
    %vm127 = vcmp.ge.s32.totalorder %v95, 8
    %vm128 = vcmp.ge.s32.totalorder %v96, 8
    %vm129 = vcmp.ge.s32.totalorder %v97, 8
    %vm130 = vcmp.lt.s32.totalorder %v66, 248
    %vm131 = vcmp.lt.s32.totalorder %v67, 248
    %vm132 = vcmp.lt.s32.totalorder %v68, 248
    %vm133 = vcmp.lt.s32.totalorder %v69, 248
    %vm134 = vcmp.lt.s32.totalorder %v70, 248
    %vm135 = vcmp.lt.s32.totalorder %v71, 248
    %vm136 = vcmp.lt.s32.totalorder %v72, 248
    %vm137 = vcmp.lt.s32.totalorder %v73, 248
    %vm138 = vcmp.lt.s32.totalorder %v74, 248
    %vm139 = vcmp.lt.s32.totalorder %v75, 248
    %vm140 = vcmp.lt.s32.totalorder %v76, 248
    %vm141 = vcmp.lt.s32.totalorder %v77, 248
    %vm142 = vcmp.lt.s32.totalorder %v78, 248
    %vm143 = vcmp.lt.s32.totalorder %v79, 248
    %vm144 = vcmp.lt.s32.totalorder %v80, 248
    %vm145 = vcmp.lt.s32.totalorder %v81, 248
    %vm146 = vcmp.lt.s32.totalorder %v82, 248
    %vm147 = vcmp.lt.s32.totalorder %v83, 248
    %vm148 = vcmp.lt.s32.totalorder %v84, 248
    %vm149 = vcmp.lt.s32.totalorder %v85, 248
    %vm150 = vcmp.lt.s32.totalorder %v86, 248
    %vm151 = vcmp.lt.s32.totalorder %v87, 248
    %vm152 = vcmp.lt.s32.totalorder %v88, 248
    %vm153 = vcmp.lt.s32.totalorder %v89, 248
    %vm154 = vcmp.lt.s32.totalorder %v90, 248
    %vm155 = vcmp.lt.s32.totalorder %v91, 248
    %vm156 = vcmp.lt.s32.totalorder %v92, 248
    %vm157 = vcmp.lt.s32.totalorder %v93, 248
    %vm158 = vcmp.lt.s32.totalorder %v94, 248
    %vm159 = vcmp.lt.s32.totalorder %v95, 248
    %vm160 = vcmp.lt.s32.totalorder %v96, 248
    %vm161 = vcmp.lt.s32.totalorder %v97, 248
    %v162 = vsel %vm98, 1, 0
    %v163 = vsel %vm99, 1, 0
    %v164 = vsel %vm100, 1, 0
    %v165 = vsel %vm101, 1, 0
    %v166 = vsel %vm102, 1, 0
    %v167 = vsel %vm103, 1, 0
    %v168 = vsel %vm104, 1, 0
    %v169 = vsel %vm105, 1, 0
    %v170 = vsel %vm106, 1, 0
    %v171 = vsel %vm107, 1, 0
    %v172 = vsel %vm108, 1, 0
    %v173 = vsel %vm109, 1, 0
    %v174 = vsel %vm110, 1, 0
    %v175 = vsel %vm111, 1, 0
    %v176 = vsel %vm112, 1, 0
    %v177 = vsel %vm113, 1, 0
    %v178 = vsel %vm114, 1, 0
    %v179 = vsel %vm115, 1, 0
    %v180 = vsel %vm116, 1, 0
    %v181 = vsel %vm117, 1, 0
    %v182 = vsel %vm118, 1, 0
    %v183 = vsel %vm119, 1, 0
    %v184 = vsel %vm120, 1, 0
    %v185 = vsel %vm121, 1, 0
    %v186 = vsel %vm122, 1, 0
    %v187 = vsel %vm123, 1, 0
    %v188 = vsel %vm124, 1, 0
    %v189 = vsel %vm125, 1, 0
    %v190 = vsel %vm126, 1, 0
    %v191 = vsel %vm127, 1, 0
    %v192 = vsel %vm128, 1, 0
    %v193 = vsel %vm129, 1, 0
    %vm194 = vcmp.eq.s32.totalorder %v162, 1
    %vm195 = vcmp.eq.s32.totalorder %v163, 1
    %vm196 = vcmp.eq.s32.totalorder %v164, 1
    %vm197 = vcmp.eq.s32.totalorder %v165, 1
    %vm198 = vcmp.eq.s32.totalorder %v166, 1
    %vm199 = vcmp.eq.s32.totalorder %v167, 1
    %vm200 = vcmp.eq.s32.totalorder %v168, 1
    %vm201 = vcmp.eq.s32.totalorder %v169, 1
    %vm202 = vcmp.eq.s32.totalorder %v170, 1
    %vm203 = vcmp.eq.s32.totalorder %v171, 1
    %vm204 = vcmp.eq.s32.totalorder %v172, 1
    %vm205 = vcmp.eq.s32.totalorder %v173, 1
    %vm206 = vcmp.eq.s32.totalorder %v174, 1
    %vm207 = vcmp.eq.s32.totalorder %v175, 1
    %vm208 = vcmp.eq.s32.totalorder %v176, 1
    %vm209 = vcmp.eq.s32.totalorder %v177, 1
    %vm210 = vcmp.eq.s32.totalorder %v178, 1
    %vm211 = vcmp.eq.s32.totalorder %v179, 1
    %vm212 = vcmp.eq.s32.totalorder %v180, 1
    %vm213 = vcmp.eq.s32.totalorder %v181, 1
    %vm214 = vcmp.eq.s32.totalorder %v182, 1
    %vm215 = vcmp.eq.s32.totalorder %v183, 1
    %vm216 = vcmp.eq.s32.totalorder %v184, 1
    %vm217 = vcmp.eq.s32.totalorder %v185, 1
    %vm218 = vcmp.eq.s32.totalorder %v186, 1
    %vm219 = vcmp.eq.s32.totalorder %v187, 1
    %vm220 = vcmp.eq.s32.totalorder %v188, 1
    %vm221 = vcmp.eq.s32.totalorder %v189, 1
    %vm222 = vcmp.eq.s32.totalorder %v190, 1
    %vm223 = vcmp.eq.s32.totalorder %v191, 1
    %vm224 = vcmp.eq.s32.totalorder %v192, 1
    %vm225 = vcmp.eq.s32.totalorder %v193, 1
    %v226 = vsel %vm194, %v64, 0.0
    %v227 = vsel %vm195, %v33, 0.0
    %v228 = vsel %vm196, %v34, 0.0
    %v229 = vsel %vm197, %v35, 0.0
    %v230 = vsel %vm198, %v36, 0.0
    %v231 = vsel %vm199, %v37, 0.0
    %v232 = vsel %vm200, %v38, 0.0
    %v233 = vsel %vm201, %v39, 0.0
    %v234 = vsel %vm202, %v40, 0.0
    %v235 = vsel %vm203, %v41, 0.0
    %v236 = vsel %vm204, %v42, 0.0
    %v237 = vsel %vm205, %v43, 0.0
    %v238 = vsel %vm206, %v44, 0.0
    %v239 = vsel %vm207, %v45, 0.0
    %v240 = vsel %vm208, %v46, 0.0
    %v241 = vsel %vm209, %v47, 0.0
    %v242 = vsel %vm210, %v48, 0.0
    %v243 = vsel %vm211, %v49, 0.0
    %v244 = vsel %vm212, %v50, 0.0
    %v245 = vsel %vm213, %v51, 0.0
    %v246 = vsel %vm214, %v52, 0.0
    %v247 = vsel %vm215, %v53, 0.0
    %v248 = vsel %vm216, %v54, 0.0
    %v249 = vsel %vm217, %v55, 0.0
    %v250 = vsel %vm218, %v56, 0.0
    %v251 = vsel %vm219, %v57, 0.0
    %v252 = vsel %vm220, %v58, 0.0
    %v253 = vsel %vm221, %v59, 0.0
    %v254 = vsel %vm222, %v60, 0.0
    %v255 = vsel %vm223, %v61, 0.0
    %v256 = vsel %vm224, %v62, 0.0
    %v257 = vsel %vm225, %v63, 0.0
    %v258 = vsel %vm130, 1, 0
    %v259 = vsel %vm131, 1, 0
    %v260 = vsel %vm132, 1, 0
    %v261 = vsel %vm133, 1, 0
    %v262 = vsel %vm134, 1, 0
    %v263 = vsel %vm135, 1, 0
    %v264 = vsel %vm136, 1, 0
    %v265 = vsel %vm137, 1, 0
    %v266 = vsel %vm138, 1, 0
    %v267 = vsel %vm139, 1, 0
    %v268 = vsel %vm140, 1, 0
    %v269 = vsel %vm141, 1, 0
    %v270 = vsel %vm142, 1, 0
    %v271 = vsel %vm143, 1, 0
    %v272 = vsel %vm144, 1, 0
    %v273 = vsel %vm145, 1, 0
    %v274 = vsel %vm146, 1, 0
    %v275 = vsel %vm147, 1, 0
    %v276 = vsel %vm148, 1, 0
    %v277 = vsel %vm149, 1, 0
    %v278 = vsel %vm150, 1, 0
    %v279 = vsel %vm151, 1, 0
    %v280 = vsel %vm152, 1, 0
    %v281 = vsel %vm153, 1, 0
    %v282 = vsel %vm154, 1, 0
    %v283 = vsel %vm155, 1, 0
    %v284 = vsel %vm156, 1, 0
    %v285 = vsel %vm157, 1, 0
    %v286 = vsel %vm158, 1, 0
    %v287 = vsel %vm159, 1, 0
    %v288 = vsel %vm160, 1, 0
    %v289 = vsel %vm161, 1, 0
    %vm290 = vcmp.eq.s32.totalorder %v258, 1
    %vm291 = vcmp.eq.s32.totalorder %v259, 1
    %vm292 = vcmp.eq.s32.totalorder %v260, 1
    %vm293 = vcmp.eq.s32.totalorder %v261, 1
    %vm294 = vcmp.eq.s32.totalorder %v262, 1
    %vm295 = vcmp.eq.s32.totalorder %v263, 1
    %vm296 = vcmp.eq.s32.totalorder %v264, 1
    %vm297 = vcmp.eq.s32.totalorder %v265, 1
    %vm298 = vcmp.eq.s32.totalorder %v266, 1
    %vm299 = vcmp.eq.s32.totalorder %v267, 1
    %vm300 = vcmp.eq.s32.totalorder %v268, 1
    %vm301 = vcmp.eq.s32.totalorder %v269, 1
    %vm302 = vcmp.eq.s32.totalorder %v270, 1
    %vm303 = vcmp.eq.s32.totalorder %v271, 1
    %vm304 = vcmp.eq.s32.totalorder %v272, 1
    %vm305 = vcmp.eq.s32.totalorder %v273, 1
    %vm306 = vcmp.eq.s32.totalorder %v274, 1
    %vm307 = vcmp.eq.s32.totalorder %v275, 1
    %vm308 = vcmp.eq.s32.totalorder %v276, 1
    %vm309 = vcmp.eq.s32.totalorder %v277, 1
    %vm310 = vcmp.eq.s32.totalorder %v278, 1
    %vm311 = vcmp.eq.s32.totalorder %v279, 1
    %vm312 = vcmp.eq.s32.totalorder %v280, 1
    %vm313 = vcmp.eq.s32.totalorder %v281, 1
    %vm314 = vcmp.eq.s32.totalorder %v282, 1
    %vm315 = vcmp.eq.s32.totalorder %v283, 1
    %vm316 = vcmp.eq.s32.totalorder %v284, 1
    %vm317 = vcmp.eq.s32.totalorder %v285, 1
    %vm318 = vcmp.eq.s32.totalorder %v286, 1
    %vm319 = vcmp.eq.s32.totalorder %v287, 1
    %vm320 = vcmp.eq.s32.totalorder %v288, 1
    %vm321 = vcmp.eq.s32.totalorder %v289, 1
    %v322 = vsel %vm290, %v34, 0.0
    %v323 = vsel %vm291, %v35, 0.0
    %v324 = vsel %vm292, %v36, 0.0
    %v325 = vsel %vm293, %v37, 0.0
    %v326 = vsel %vm294, %v38, 0.0
    %v327 = vsel %vm295, %v39, 0.0
    %v328 = vsel %vm296, %v40, 0.0
    %v329 = vsel %vm297, %v41, 0.0
    %v330 = vsel %vm298, %v42, 0.0
    %v331 = vsel %vm299, %v43, 0.0
    %v332 = vsel %vm300, %v44, 0.0
    %v333 = vsel %vm301, %v45, 0.0
    %v334 = vsel %vm302, %v46, 0.0
    %v335 = vsel %vm303, %v47, 0.0
    %v336 = vsel %vm304, %v48, 0.0
    %v337 = vsel %vm305, %v49, 0.0
    %v338 = vsel %vm306, %v50, 0.0
    %v339 = vsel %vm307, %v51, 0.0
    %v340 = vsel %vm308, %v52, 0.0
    %v341 = vsel %vm309, %v53, 0.0
    %v342 = vsel %vm310, %v54, 0.0
    %v343 = vsel %vm311, %v55, 0.0
    %v344 = vsel %vm312, %v56, 0.0
    %v345 = vsel %vm313, %v57, 0.0
    %v346 = vsel %vm314, %v58, 0.0
    %v347 = vsel %vm315, %v59, 0.0
    %v348 = vsel %vm316, %v60, 0.0
    %v349 = vsel %vm317, %v61, 0.0
    %v350 = vsel %vm318, %v62, 0.0
    %v351 = vsel %vm319, %v63, 0.0
    %v352 = vsel %vm320, %v64, 0.0
    %v353 = vsel %vm321, %v33, 0.0
    %v354 = vld [vmem:[%s1] sm:$0xff]
    %v355 = vld [vmem:[%s1 + $0x8] sm:$0xff]
    %v356 = vld [vmem:[%s1 + $0x10] sm:$0xf]
    %s357 = scalar_lea.vmem %s1, 24
    %v358 = vld [vmem:[%s357] sm:$0xff]
    %v359 = vld [vmem:[%s357 + $0x8] sm:$0xff]
    %v360 = vld [vmem:[%s357 + $0x10] sm:$0xf]
    %vm361 = vcmask 162816
    %v363 = vsel %vm361, %v33, 0
    %v366 = vsel %vm361, %v34, 0
    %v369 = vsel %vm361, %v35, 0
    %v372 = vsel %vm361, %v36, 0
    %v375 = vsel %vm361, %v37, 0
    %v378 = vsel %vm361, %v38, 0
    %v381 = vsel %vm361, %v39, 0
    %v384 = vsel %vm361, %v40, 0
    %v387 = vsel %vm361, %v41, 0
    %v390 = vsel %vm361, %v42, 0
    %v393 = vsel %vm361, %v43, 0
    %v396 = vsel %vm361, %v44, 0
    %v399 = vsel %vm361, %v45, 0
    %v402 = vsel %vm361, %v46, 0
    %v405 = vsel %vm361, %v47, 0
    %v408 = vsel %vm361, %v48, 0
    %v411 = vsel %vm361, %v49, 0
    %v414 = vsel %vm361, %v50, 0
    %v417 = vsel %vm361, %v51, 0
    %v420 = vsel %vm361, %v52, 0
    %v423 = vsel %vm361, %v53, 0
    %v426 = vsel %vm361, %v54, 0
    %v429 = vsel %vm361, %v55, 0
    %v432 = vsel %vm361, %v56, 0
    %v435 = vsel %vm361, %v57, 0
    %v438 = vsel %vm361, %v58, 0
    %v441 = vsel %vm361, %v59, 0
    %v444 = vsel %vm361, %v60, 0
    %v447 = vsel %vm361, %v61, 0
    %v450 = vsel %vm361, %v62, 0
    %v453 = vsel %vm361, %v63, 0
    %v456 = vsel %vm361, %v64, 0
    %vm458 = vcmask 1043456
    %v460 = vsel %vm458, %v360, 0
    %462 = vmatprep.subr.mxu0 0.0
    %463 = vmatpush1.msra.mxu0 0.0
    %464 = vmatprep.subr.mxu0 0.0
    %465 = vmatpush1.msra.mxu0 0.0
    %466 = vmatprep.subr.mxu0 0.0
    %467 = vmatpush1.msra.mxu0 0.0
    %468 = vmatprep.subr.mxu0 0.0
    %469 = vmatpush1.msra.mxu0 0.0
    %470 = vmatprep.subr.mxu0 0.0
    %471 = vmatpush1.msra.mxu0 0.0
    %472 = vmatprep.subr.mxu0 0.0
    %473 = vmatpush1.msra.mxu0 0.0
    %474 = vmatprep.subr.mxu0 0.0
    %475 = vmatpush1.msra.mxu0 0.0
    %476 = vmatprep.subr.mxu0 0.0
    %477 = vmatpush1.msra.mxu0 0.0
    %478 = vmatprep.subr.mxu0 0.0
    %479 = vmatpush1.msra.mxu0 0.0
    %480 = vmatprep.subr.mxu0 0.0
    %481 = vmatpush1.msra.mxu0 0.0
    %482 = vmatprep.subr.mxu0 0.0
    %483 = vmatpush1.msra.mxu0 0.0
    %484 = vmatprep.subr.mxu0 0.0
    %485 = vmatpush1.msra.mxu0 0.0
    %486 = vmatprep.subr.mxu0 0.0
    %487 = vmatpush1.msra.mxu0 0.0
    %488 = vmatprep.subr.mxu0 0.0
    %489 = vmatpush1.msra.mxu0 %v460
    %490 = vmatprep.subr.mxu0 0.0
    %491 = vmatpush1.msra.mxu0 %v359
    %492 = vmatprep.subr.mxu0 0.0
    %493 = vmatpush1.msra.mxu0 %v358
    %494 = vmatprep.subr.mxu0 0.0
    %495 = vmatpush2.msra.mxu0 0.0
    %496 = vmatprep.subr.mxu0 0.0
    %497 = vmatpush2.msra.mxu0 0.0
    %498 = vmatprep.subr.mxu0 0.0
    %499 = vmatpush2.msra.mxu0 0.0
    %500 = vmatprep.subr.mxu0 0.0
    %501 = vmatpush2.msra.mxu0 0.0
    %502 = vmatprep.subr.mxu0 0.0
    %503 = vmatpush2.msra.mxu0 0.0
    %504 = vmatprep.subr.mxu0 0.0
    %505 = vmatpush2.msra.mxu0 0.0
    %506 = vmatprep.subr.mxu0 0.0
    %507 = vmatpush2.msra.mxu0 0.0
    %508 = vmatprep.subr.mxu0 0.0
    %509 = vmatpush2.msra.mxu0 0.0
    %510 = vmatprep.subr.mxu0 0.0
    %511 = vmatpush2.msra.mxu0 0.0
    %512 = vmatprep.subr.mxu0 0.0
    %513 = vmatpush2.msra.mxu0 0.0
    %514 = vmatprep.subr.mxu0 0.0
    %515 = vmatpush2.msra.mxu0 0.0
    %516 = vmatprep.subr.mxu0 0.0
    %517 = vmatpush2.msra.mxu0 0.0
    %518 = vmatprep.subr.mxu0 0.0
    %519 = vmatpush2.msra.mxu0 0.0
    %520 = vmatprep.subr.mxu0 0.0
    %521 = vmatpush2.msra.mxu0 0.0
    %522 = vmatprep.subr.mxu0 0.0
    %523 = vmatpush2.msra.mxu0 0.0
    %524 = vmatprep.subr.mxu0 0.0
    %525 = vmatpush2.msra.mxu0 0.0
    %526 = vmatprep.mubr.f32.mxu0 0.0
    %527 = vmatmul.mubr.f32.gmra.mxu0 %v363
    %v528 = vpop.f32.mrf.mxu0
    %v529 = vadd.f32 0.0, %v528
    %v530 = vpop.f32.mrf.mxu0
    %531 = vmatprep.mubr.f32.mxu0 0.0
    %532 = vmatmul.mubr.f32.gmra.mxu0 %v366
    %v533 = vpop.f32.mrf.mxu0
    %v534 = vadd.f32 0.0, %v533
    %v535 = vpop.f32.mrf.mxu0
    %536 = vmatprep.mubr.f32.mxu0 0.0
    %537 = vmatmul.mubr.f32.gmra.mxu0 %v369
    %v538 = vpop.f32.mrf.mxu0
    %v539 = vadd.f32 0.0, %v538
    %v540 = vpop.f32.mrf.mxu0
    %541 = vmatprep.mubr.f32.mxu0 0.0
    %542 = vmatmul.mubr.f32.gmra.mxu0 %v372
    %v543 = vpop.f32.mrf.mxu0
    %v544 = vadd.f32 0.0, %v543
    %v545 = vpop.f32.mrf.mxu0
    %546 = vmatprep.mubr.f32.mxu0 0.0
    %547 = vmatmul.mubr.f32.gmra.mxu0 %v375
    %v548 = vpop.f32.mrf.mxu0
    %v549 = vadd.f32 0.0, %v548
    %v550 = vpop.f32.mrf.mxu0
    %551 = vmatprep.mubr.f32.mxu0 0.0
    %552 = vmatmul.mubr.f32.gmra.mxu0 %v378
    %v553 = vpop.f32.mrf.mxu0
    %v554 = vadd.f32 0.0, %v553
    %v555 = vpop.f32.mrf.mxu0
    %556 = vmatprep.mubr.f32.mxu0 0.0
    %557 = vmatmul.mubr.f32.gmra.mxu0 %v381
    %v558 = vpop.f32.mrf.mxu0
    %v559 = vadd.f32 0.0, %v558
    %v560 = vpop.f32.mrf.mxu0
    %561 = vmatprep.mubr.f32.mxu0 0.0
    %562 = vmatmul.mubr.f32.gmra.mxu0 %v384
    %v563 = vpop.f32.mrf.mxu0
    %v564 = vadd.f32 0.0, %v563
    %v565 = vpop.f32.mrf.mxu0
    %566 = vmatprep.mubr.f32.mxu0 0.0
    %567 = vmatmul.mubr.f32.gmra.mxu0 %v387
    %v568 = vpop.f32.mrf.mxu0
    %v569 = vadd.f32 0.0, %v568
    %v570 = vpop.f32.mrf.mxu0
    %571 = vmatprep.mubr.f32.mxu0 0.0
    %572 = vmatmul.mubr.f32.gmra.mxu0 %v390
    %v573 = vpop.f32.mrf.mxu0
    %v574 = vadd.f32 0.0, %v573
    %v575 = vpop.f32.mrf.mxu0
    %576 = vmatprep.mubr.f32.mxu0 0.0
    %577 = vmatmul.mubr.f32.gmra.mxu0 %v393
    %v578 = vpop.f32.mrf.mxu0
    %v579 = vadd.f32 0.0, %v578
    %v580 = vpop.f32.mrf.mxu0
    %581 = vmatprep.mubr.f32.mxu0 0.0
    %582 = vmatmul.mubr.f32.gmra.mxu0 %v396
    %v583 = vpop.f32.mrf.mxu0
    %v584 = vadd.f32 0.0, %v583
    %v585 = vpop.f32.mrf.mxu0
    %586 = vmatprep.mubr.f32.mxu0 0.0
    %587 = vmatmul.mubr.f32.gmra.mxu0 %v399
    %v588 = vpop.f32.mrf.mxu0
    %v589 = vadd.f32 0.0, %v588
    %v590 = vpop.f32.mrf.mxu0
    %591 = vmatprep.mubr.f32.mxu0 0.0
    %592 = vmatmul.mubr.f32.gmra.mxu0 %v402
    %v593 = vpop.f32.mrf.mxu0
    %v594 = vadd.f32 0.0, %v593
    %v595 = vpop.f32.mrf.mxu0
    %596 = vmatprep.mubr.f32.mxu0 0.0
    %597 = vmatmul.mubr.f32.gmra.mxu0 %v405
    %v598 = vpop.f32.mrf.mxu0
    %v599 = vadd.f32 0.0, %v598
    %v600 = vpop.f32.mrf.mxu0
    %601 = vmatprep.mubr.f32.mxu0 0.0
    %602 = vmatmul.mubr.f32.gmra.mxu0 %v408
    %v603 = vpop.f32.mrf.mxu0
    %v604 = vadd.f32 0.0, %v603
    %v605 = vpop.f32.mrf.mxu0
    %606 = vmatprep.mubr.f32.mxu0 0.0
    %607 = vmatmul.mubr.f32.gmra.mxu0 %v411
    %v608 = vpop.f32.mrf.mxu0
    %v609 = vadd.f32 0.0, %v608
    %v610 = vpop.f32.mrf.mxu0
    %611 = vmatprep.mubr.f32.mxu0 0.0
    %612 = vmatmul.mubr.f32.gmra.mxu0 %v414
    %v613 = vpop.f32.mrf.mxu0
    %v614 = vadd.f32 0.0, %v613
    %v615 = vpop.f32.mrf.mxu0
    %616 = vmatprep.mubr.f32.mxu0 0.0
    %617 = vmatmul.mubr.f32.gmra.mxu0 %v417
    %v618 = vpop.f32.mrf.mxu0
    %v619 = vadd.f32 0.0, %v618
    %v620 = vpop.f32.mrf.mxu0
    %621 = vmatprep.mubr.f32.mxu0 0.0
    %622 = vmatmul.mubr.f32.gmra.mxu0 %v420
    %v623 = vpop.f32.mrf.mxu0
    %v624 = vadd.f32 0.0, %v623
    %v625 = vpop.f32.mrf.mxu0
    %626 = vmatprep.mubr.f32.mxu0 0.0
    %627 = vmatmul.mubr.f32.gmra.mxu0 %v423
    %v628 = vpop.f32.mrf.mxu0
    %v629 = vadd.f32 0.0, %v628
    %v630 = vpop.f32.mrf.mxu0
    %631 = vmatprep.mubr.f32.mxu0 0.0
    %632 = vmatmul.mubr.f32.gmra.mxu0 %v426
    %v633 = vpop.f32.mrf.mxu0
    %v634 = vadd.f32 0.0, %v633
    %v635 = vpop.f32.mrf.mxu0
    %636 = vmatprep.mubr.f32.mxu0 0.0
    %637 = vmatmul.mubr.f32.gmra.mxu0 %v429
    %v638 = vpop.f32.mrf.mxu0
    %v639 = vadd.f32 0.0, %v638
    %v640 = vpop.f32.mrf.mxu0
    %641 = vmatprep.mubr.f32.mxu0 0.0
    %642 = vmatmul.mubr.f32.gmra.mxu0 %v432
    %v643 = vpop.f32.mrf.mxu0
    %v644 = vadd.f32 0.0, %v643
    %v645 = vpop.f32.mrf.mxu0
    %646 = vmatprep.mubr.f32.mxu0 0.0
    %647 = vmatmul.mubr.f32.gmra.mxu0 %v435
    %v648 = vpop.f32.mrf.mxu0
    %v649 = vadd.f32 0.0, %v648
    %v650 = vpop.f32.mrf.mxu0
    %651 = vmatprep.mubr.f32.mxu0 0.0
    %652 = vmatmul.mubr.f32.gmra.mxu0 %v438
    %v653 = vpop.f32.mrf.mxu0
    %v654 = vadd.f32 0.0, %v653
    %v655 = vpop.f32.mrf.mxu0
    %656 = vmatprep.mubr.f32.mxu0 0.0
    %657 = vmatmul.mubr.f32.gmra.mxu0 %v441
    %v658 = vpop.f32.mrf.mxu0
    %v659 = vadd.f32 0.0, %v658
    %v660 = vpop.f32.mrf.mxu0
    %661 = vmatprep.mubr.f32.mxu0 0.0
    %662 = vmatmul.mubr.f32.gmra.mxu0 %v444
    %v663 = vpop.f32.mrf.mxu0
    %v664 = vadd.f32 0.0, %v663
    %v665 = vpop.f32.mrf.mxu0
    %666 = vmatprep.mubr.f32.mxu0 0.0
    %667 = vmatmul.mubr.f32.gmra.mxu0 %v447
    %v668 = vpop.f32.mrf.mxu0
    %v669 = vadd.f32 0.0, %v668
    %v670 = vpop.f32.mrf.mxu0
    %671 = vmatprep.mubr.f32.mxu0 0.0
    %672 = vmatmul.mubr.f32.gmra.mxu0 %v450
    %v673 = vpop.f32.mrf.mxu0
    %v674 = vadd.f32 0.0, %v673
    %v675 = vpop.f32.mrf.mxu0
    %676 = vmatprep.mubr.f32.mxu0 0.0
    %677 = vmatmul.mubr.f32.gmra.mxu0 %v453
    %v678 = vpop.f32.mrf.mxu0
    %v679 = vadd.f32 0.0, %v678
    %v680 = vpop.f32.mrf.mxu0
    %681 = vmatprep.mubr.f32.mxu0 0.0
    %682 = vmatmul.mubr.f32.gmra.mxu0 %v456
    %v683 = vpop.f32.mrf.mxu0
    %v684 = vadd.f32 0.0, %v683
    %v685 = vpop.f32.mrf.mxu0
    %686 = vdwg.mxu0
    %v688 = vsel %vm361, %v226, 0
    %v691 = vsel %vm361, %v227, 0
    %v694 = vsel %vm361, %v228, 0
    %v697 = vsel %vm361, %v229, 0
    %v700 = vsel %vm361, %v230, 0
    %v703 = vsel %vm361, %v231, 0
    %v706 = vsel %vm361, %v232, 0
    %v709 = vsel %vm361, %v233, 0
    %v712 = vsel %vm361, %v234, 0
    %v715 = vsel %vm361, %v235, 0
    %v718 = vsel %vm361, %v236, 0
    %v721 = vsel %vm361, %v237, 0
    %v724 = vsel %vm361, %v238, 0
    %v727 = vsel %vm361, %v239, 0
    %v730 = vsel %vm361, %v240, 0
    %v733 = vsel %vm361, %v241, 0
    %v736 = vsel %vm361, %v242, 0
    %v739 = vsel %vm361, %v243, 0
    %v742 = vsel %vm361, %v244, 0
    %v745 = vsel %vm361, %v245, 0
    %v748 = vsel %vm361, %v246, 0
    %v751 = vsel %vm361, %v247, 0
    %v754 = vsel %vm361, %v248, 0
    %v757 = vsel %vm361, %v249, 0
    %v760 = vsel %vm361, %v250, 0
    %v763 = vsel %vm361, %v251, 0
    %v766 = vsel %vm361, %v252, 0
    %v769 = vsel %vm361, %v253, 0
    %v772 = vsel %vm361, %v254, 0
    %v775 = vsel %vm361, %v255, 0
    %v778 = vsel %vm361, %v256, 0
    %v781 = vsel %vm361, %v257, 0
    %v784 = vsel %vm458, %v356, 0
    %786 = vmatprep.subr.mxu0 0.0
    %787 = vmatpush1.msra.mxu0 0.0
    %788 = vmatprep.subr.mxu0 0.0
    %789 = vmatpush1.msra.mxu0 0.0
    %790 = vmatprep.subr.mxu0 0.0
    %791 = vmatpush1.msra.mxu0 0.0
    %792 = vmatprep.subr.mxu0 0.0
    %793 = vmatpush1.msra.mxu0 0.0
    %794 = vmatprep.subr.mxu0 0.0
    %795 = vmatpush1.msra.mxu0 0.0
    %796 = vmatprep.subr.mxu0 0.0
    %797 = vmatpush1.msra.mxu0 0.0
    %798 = vmatprep.subr.mxu0 0.0
    %799 = vmatpush1.msra.mxu0 0.0
    %800 = vmatprep.subr.mxu0 0.0
    %801 = vmatpush1.msra.mxu0 0.0
    %802 = vmatprep.subr.mxu0 0.0
    %803 = vmatpush1.msra.mxu0 0.0
    %804 = vmatprep.subr.mxu0 0.0
    %805 = vmatpush1.msra.mxu0 0.0
    %806 = vmatprep.subr.mxu0 0.0
    %807 = vmatpush1.msra.mxu0 0.0
    %808 = vmatprep.subr.mxu0 0.0
    %809 = vmatpush1.msra.mxu0 0.0
    %810 = vmatprep.subr.mxu0 0.0
    %811 = vmatpush1.msra.mxu0 0.0
    %812 = vmatprep.subr.mxu0 0.0
    %813 = vmatpush1.msra.mxu0 %v784
    %814 = vmatprep.subr.mxu0 0.0
    %815 = vmatpush1.msra.mxu0 %v355
    %816 = vmatprep.subr.mxu0 0.0
    %817 = vmatpush1.msra.mxu0 %v354
    %818 = vmatprep.subr.mxu0 0.0
    %819 = vmatpush2.msra.mxu0 0.0
    %820 = vmatprep.subr.mxu0 0.0
    %821 = vmatpush2.msra.mxu0 0.0
    %822 = vmatprep.subr.mxu0 0.0
    %823 = vmatpush2.msra.mxu0 0.0
    %824 = vmatprep.subr.mxu0 0.0
    %825 = vmatpush2.msra.mxu0 0.0
    %826 = vmatprep.subr.mxu0 0.0
    %827 = vmatpush2.msra.mxu0 0.0
    %828 = vmatprep.subr.mxu0 0.0
    %829 = vmatpush2.msra.mxu0 0.0
    %830 = vmatprep.subr.mxu0 0.0
    %831 = vmatpush2.msra.mxu0 0.0
    %832 = vmatprep.subr.mxu0 0.0
    %833 = vmatpush2.msra.mxu0 0.0
    %834 = vmatprep.subr.mxu0 0.0
    %835 = vmatpush2.msra.mxu0 0.0
    %836 = vmatprep.subr.mxu0 0.0
    %837 = vmatpush2.msra.mxu0 0.0
    %838 = vmatprep.subr.mxu0 0.0
    %839 = vmatpush2.msra.mxu0 0.0
    %840 = vmatprep.subr.mxu0 0.0
    %841 = vmatpush2.msra.mxu0 0.0
    %842 = vmatprep.subr.mxu0 0.0
    %843 = vmatpush2.msra.mxu0 0.0
    %844 = vmatprep.subr.mxu0 0.0
    %845 = vmatpush2.msra.mxu0 0.0
    %846 = vmatprep.subr.mxu0 0.0
    %847 = vmatpush2.msra.mxu0 0.0
    %848 = vmatprep.subr.mxu0 0.0
    %849 = vmatpush2.msra.mxu0 0.0
    %850 = vmatprep.mubr.f32.mxu0 0.0
    %851 = vmatmul.mubr.f32.gmra.mxu0 %v688
    %v852 = vpop.f32.mrf.mxu0
    %v853 = vadd.f32 %v529, %v852
    %v854 = vpop.f32.mrf.mxu0
    %855 = vmatprep.mubr.f32.mxu0 0.0
    %856 = vmatmul.mubr.f32.gmra.mxu0 %v691
    %v857 = vpop.f32.mrf.mxu0
    %v858 = vadd.f32 %v534, %v857
    %v859 = vpop.f32.mrf.mxu0
    %860 = vmatprep.mubr.f32.mxu0 0.0
    %861 = vmatmul.mubr.f32.gmra.mxu0 %v694
    %v862 = vpop.f32.mrf.mxu0
    %v863 = vadd.f32 %v539, %v862
    %v864 = vpop.f32.mrf.mxu0
    %865 = vmatprep.mubr.f32.mxu0 0.0
    %866 = vmatmul.mubr.f32.gmra.mxu0 %v697
    %v867 = vpop.f32.mrf.mxu0
    %v868 = vadd.f32 %v544, %v867
    %v869 = vpop.f32.mrf.mxu0
    %870 = vmatprep.mubr.f32.mxu0 0.0
    %871 = vmatmul.mubr.f32.gmra.mxu0 %v700
    %v872 = vpop.f32.mrf.mxu0
    %v873 = vadd.f32 %v549, %v872
    %v874 = vpop.f32.mrf.mxu0
    %875 = vmatprep.mubr.f32.mxu0 0.0
    %876 = vmatmul.mubr.f32.gmra.mxu0 %v703
    %v877 = vpop.f32.mrf.mxu0
    %v878 = vadd.f32 %v554, %v877
    %v879 = vpop.f32.mrf.mxu0
    %880 = vmatprep.mubr.f32.mxu0 0.0
    %881 = vmatmul.mubr.f32.gmra.mxu0 %v706
    %v882 = vpop.f32.mrf.mxu0
    %v883 = vadd.f32 %v559, %v882
    %v884 = vpop.f32.mrf.mxu0
    %885 = vmatprep.mubr.f32.mxu0 0.0
    %886 = vmatmul.mubr.f32.gmra.mxu0 %v709
    %v887 = vpop.f32.mrf.mxu0
    %v888 = vadd.f32 %v564, %v887
    %v889 = vpop.f32.mrf.mxu0
    %890 = vmatprep.mubr.f32.mxu0 0.0
    %891 = vmatmul.mubr.f32.gmra.mxu0 %v712
    %v892 = vpop.f32.mrf.mxu0
    %v893 = vadd.f32 %v569, %v892
    %v894 = vpop.f32.mrf.mxu0
    %895 = vmatprep.mubr.f32.mxu0 0.0
    %896 = vmatmul.mubr.f32.gmra.mxu0 %v715
    %v897 = vpop.f32.mrf.mxu0
    %v898 = vadd.f32 %v574, %v897
    %v899 = vpop.f32.mrf.mxu0
    %900 = vmatprep.mubr.f32.mxu0 0.0
    %901 = vmatmul.mubr.f32.gmra.mxu0 %v718
    %v902 = vpop.f32.mrf.mxu0
    %v903 = vadd.f32 %v579, %v902
    %v904 = vpop.f32.mrf.mxu0
    %905 = vmatprep.mubr.f32.mxu0 0.0
    %906 = vmatmul.mubr.f32.gmra.mxu0 %v721
    %v907 = vpop.f32.mrf.mxu0
    %v908 = vadd.f32 %v584, %v907
    %v909 = vpop.f32.mrf.mxu0
    %910 = vmatprep.mubr.f32.mxu0 0.0
    %911 = vmatmul.mubr.f32.gmra.mxu0 %v724
    %v912 = vpop.f32.mrf.mxu0
    %v913 = vadd.f32 %v589, %v912
    %v914 = vpop.f32.mrf.mxu0
    %915 = vmatprep.mubr.f32.mxu0 0.0
    %916 = vmatmul.mubr.f32.gmra.mxu0 %v727
    %v917 = vpop.f32.mrf.mxu0
    %v918 = vadd.f32 %v594, %v917
    %v919 = vpop.f32.mrf.mxu0
    %920 = vmatprep.mubr.f32.mxu0 0.0
    %921 = vmatmul.mubr.f32.gmra.mxu0 %v730
    %v922 = vpop.f32.mrf.mxu0
    %v923 = vadd.f32 %v599, %v922
    %v924 = vpop.f32.mrf.mxu0
    %925 = vmatprep.mubr.f32.mxu0 0.0
    %926 = vmatmul.mubr.f32.gmra.mxu0 %v733
    %v927 = vpop.f32.mrf.mxu0
    %v928 = vadd.f32 %v604, %v927
    %v929 = vpop.f32.mrf.mxu0
    %930 = vmatprep.mubr.f32.mxu0 0.0
    %931 = vmatmul.mubr.f32.gmra.mxu0 %v736
    %v932 = vpop.f32.mrf.mxu0
    %v933 = vadd.f32 %v609, %v932
    %v934 = vpop.f32.mrf.mxu0
    %935 = vmatprep.mubr.f32.mxu0 0.0
    %936 = vmatmul.mubr.f32.gmra.mxu0 %v739
    %v937 = vpop.f32.mrf.mxu0
    %v938 = vadd.f32 %v614, %v937
    %v939 = vpop.f32.mrf.mxu0
    %940 = vmatprep.mubr.f32.mxu0 0.0
    %941 = vmatmul.mubr.f32.gmra.mxu0 %v742
    %v942 = vpop.f32.mrf.mxu0
    %v943 = vadd.f32 %v619, %v942
    %v944 = vpop.f32.mrf.mxu0
    %945 = vmatprep.mubr.f32.mxu0 0.0
    %946 = vmatmul.mubr.f32.gmra.mxu0 %v745
    %v947 = vpop.f32.mrf.mxu0
    %v948 = vadd.f32 %v624, %v947
    %v949 = vpop.f32.mrf.mxu0
    %950 = vmatprep.mubr.f32.mxu0 0.0
    %951 = vmatmul.mubr.f32.gmra.mxu0 %v748
    %v952 = vpop.f32.mrf.mxu0
    %v953 = vadd.f32 %v629, %v952
    %v954 = vpop.f32.mrf.mxu0
    %955 = vmatprep.mubr.f32.mxu0 0.0
    %956 = vmatmul.mubr.f32.gmra.mxu0 %v751
    %v957 = vpop.f32.mrf.mxu0
    %v958 = vadd.f32 %v634, %v957
    %v959 = vpop.f32.mrf.mxu0
    %960 = vmatprep.mubr.f32.mxu0 0.0
    %961 = vmatmul.mubr.f32.gmra.mxu0 %v754
    %v962 = vpop.f32.mrf.mxu0
    %v963 = vadd.f32 %v639, %v962
    %v964 = vpop.f32.mrf.mxu0
    %965 = vmatprep.mubr.f32.mxu0 0.0
    %966 = vmatmul.mubr.f32.gmra.mxu0 %v757
    %v967 = vpop.f32.mrf.mxu0
    %v968 = vadd.f32 %v644, %v967
    %v969 = vpop.f32.mrf.mxu0
    %970 = vmatprep.mubr.f32.mxu0 0.0
    %971 = vmatmul.mubr.f32.gmra.mxu0 %v760
    %v972 = vpop.f32.mrf.mxu0
    %v973 = vadd.f32 %v649, %v972
    %v974 = vpop.f32.mrf.mxu0
    %975 = vmatprep.mubr.f32.mxu0 0.0
    %976 = vmatmul.mubr.f32.gmra.mxu0 %v763
    %v977 = vpop.f32.mrf.mxu0
    %v978 = vadd.f32 %v654, %v977
    %v979 = vpop.f32.mrf.mxu0
    %980 = vmatprep.mubr.f32.mxu0 0.0
    %981 = vmatmul.mubr.f32.gmra.mxu0 %v766
    %v982 = vpop.f32.mrf.mxu0
    %v983 = vadd.f32 %v659, %v982
    %v984 = vpop.f32.mrf.mxu0
    %985 = vmatprep.mubr.f32.mxu0 0.0
    %986 = vmatmul.mubr.f32.gmra.mxu0 %v769
    %v987 = vpop.f32.mrf.mxu0
    %v988 = vadd.f32 %v664, %v987
    %v989 = vpop.f32.mrf.mxu0
    %990 = vmatprep.mubr.f32.mxu0 0.0
    %991 = vmatmul.mubr.f32.gmra.mxu0 %v772
    %v992 = vpop.f32.mrf.mxu0
    %v993 = vadd.f32 %v669, %v992
    %v994 = vpop.f32.mrf.mxu0
    %995 = vmatprep.mubr.f32.mxu0 0.0
    %996 = vmatmul.mubr.f32.gmra.mxu0 %v775
    %v997 = vpop.f32.mrf.mxu0
    %v998 = vadd.f32 %v674, %v997
    %v999 = vpop.f32.mrf.mxu0
    %1000 = vmatprep.mubr.f32.mxu0 0.0
    %1001 = vmatmul.mubr.f32.gmra.mxu0 %v778
    %v1002 = vpop.f32.mrf.mxu0
    %v1003 = vadd.f32 %v679, %v1002
    %v1004 = vpop.f32.mrf.mxu0
    %1005 = vmatprep.mubr.f32.mxu0 0.0
    %1006 = vmatmul.mubr.f32.gmra.mxu0 %v781
    %v1007 = vpop.f32.mrf.mxu0
    %v1008 = vadd.f32 %v684, %v1007
    %v1009 = vpop.f32.mrf.mxu0
    %1010 = vdwg.mxu0
    %s1011 = scalar_lea.vmem %s1, 48
    %v1012 = vld [vmem:[%s1011] sm:$0xff]
    %v1013 = vld [vmem:[%s1011 + $0x8] sm:$0xff]
    %v1014 = vld [vmem:[%s1011 + $0x10] sm:$0xf]
    %v1016 = vsel %vm361, %v322, 0
    %v1019 = vsel %vm361, %v323, 0
    %v1022 = vsel %vm361, %v324, 0
    %v1025 = vsel %vm361, %v325, 0
    %v1028 = vsel %vm361, %v326, 0
    %v1031 = vsel %vm361, %v327, 0
    %v1034 = vsel %vm361, %v328, 0
    %v1037 = vsel %vm361, %v329, 0
    %v1040 = vsel %vm361, %v330, 0
    %v1043 = vsel %vm361, %v331, 0
    %v1046 = vsel %vm361, %v332, 0
    %v1049 = vsel %vm361, %v333, 0
    %v1052 = vsel %vm361, %v334, 0
    %v1055 = vsel %vm361, %v335, 0
    %v1058 = vsel %vm361, %v336, 0
    %v1061 = vsel %vm361, %v337, 0
    %v1064 = vsel %vm361, %v338, 0
    %v1067 = vsel %vm361, %v339, 0
    %v1070 = vsel %vm361, %v340, 0
    %v1073 = vsel %vm361, %v341, 0
    %v1076 = vsel %vm361, %v342, 0
    %v1079 = vsel %vm361, %v343, 0
    %v1082 = vsel %vm361, %v344, 0
    %v1085 = vsel %vm361, %v345, 0
    %v1088 = vsel %vm361, %v346, 0
    %v1091 = vsel %vm361, %v347, 0
    %v1094 = vsel %vm361, %v348, 0
    %v1097 = vsel %vm361, %v349, 0
    %v1100 = vsel %vm361, %v350, 0
    %v1103 = vsel %vm361, %v351, 0
    %v1106 = vsel %vm361, %v352, 0
    %v1109 = vsel %vm361, %v353, 0
    %v1112 = vsel %vm458, %v1014, 0
    %1114 = vmatprep.subr.mxu0 0.0
    %1115 = vmatpush1.msra.mxu0 0.0
    %1116 = vmatprep.subr.mxu0 0.0
    %1117 = vmatpush1.msra.mxu0 0.0
    %1118 = vmatprep.subr.mxu0 0.0
    %1119 = vmatpush1.msra.mxu0 0.0
    %1120 = vmatprep.subr.mxu0 0.0
    %1121 = vmatpush1.msra.mxu0 0.0
    %1122 = vmatprep.subr.mxu0 0.0
    %1123 = vmatpush1.msra.mxu0 0.0
    %1124 = vmatprep.subr.mxu0 0.0
    %1125 = vmatpush1.msra.mxu0 0.0
    %1126 = vmatprep.subr.mxu0 0.0
    %1127 = vmatpush1.msra.mxu0 0.0
    %1128 = vmatprep.subr.mxu0 0.0
    %1129 = vmatpush1.msra.mxu0 0.0
    %1130 = vmatprep.subr.mxu0 0.0
    %1131 = vmatpush1.msra.mxu0 0.0
    %1132 = vmatprep.subr.mxu0 0.0
    %1133 = vmatpush1.msra.mxu0 0.0
    %1134 = vmatprep.subr.mxu0 0.0
    %1135 = vmatpush1.msra.mxu0 0.0
    %1136 = vmatprep.subr.mxu0 0.0
    %1137 = vmatpush1.msra.mxu0 0.0
    %1138 = vmatprep.subr.mxu0 0.0
    %1139 = vmatpush1.msra.mxu0 0.0
    %1140 = vmatprep.subr.mxu0 0.0
    %1141 = vmatpush1.msra.mxu0 %v1112
    %1142 = vmatprep.subr.mxu0 0.0
    %1143 = vmatpush1.msra.mxu0 %v1013
    %1144 = vmatprep.subr.mxu0 0.0
    %1145 = vmatpush1.msra.mxu0 %v1012
    %1146 = vmatprep.subr.mxu0 0.0
    %1147 = vmatpush2.msra.mxu0 0.0
    %1148 = vmatprep.subr.mxu0 0.0
    %1149 = vmatpush2.msra.mxu0 0.0
    %1150 = vmatprep.subr.mxu0 0.0
    %1151 = vmatpush2.msra.mxu0 0.0
    %1152 = vmatprep.subr.mxu0 0.0
    %1153 = vmatpush2.msra.mxu0 0.0
    %1154 = vmatprep.subr.mxu0 0.0
    %1155 = vmatpush2.msra.mxu0 0.0
    %1156 = vmatprep.subr.mxu0 0.0
    %1157 = vmatpush2.msra.mxu0 0.0
    %1158 = vmatprep.subr.mxu0 0.0
    %1159 = vmatpush2.msra.mxu0 0.0
    %1160 = vmatprep.subr.mxu0 0.0
    %1161 = vmatpush2.msra.mxu0 0.0
    %1162 = vmatprep.subr.mxu0 0.0
    %1163 = vmatpush2.msra.mxu0 0.0
    %1164 = vmatprep.subr.mxu0 0.0
    %1165 = vmatpush2.msra.mxu0 0.0
    %1166 = vmatprep.subr.mxu0 0.0
    %1167 = vmatpush2.msra.mxu0 0.0
    %1168 = vmatprep.subr.mxu0 0.0
    %1169 = vmatpush2.msra.mxu0 0.0
    %1170 = vmatprep.subr.mxu0 0.0
    %1171 = vmatpush2.msra.mxu0 0.0
    %1172 = vmatprep.subr.mxu0 0.0
    %1173 = vmatpush2.msra.mxu0 0.0
    %1174 = vmatprep.subr.mxu0 0.0
    %1175 = vmatpush2.msra.mxu0 0.0
    %1176 = vmatprep.subr.mxu0 0.0
    %1177 = vmatpush2.msra.mxu0 0.0
    %1178 = vmatprep.mubr.f32.mxu0 0.0
    %1179 = vmatmul.mubr.f32.gmra.mxu0 %v1016
    %v1180 = vpop.f32.mrf.mxu0
    %v1181 = vadd.f32 0.0, %v1180
    %v1182 = vpop.f32.mrf.mxu0
    %1183 = vmatprep.mubr.f32.mxu0 0.0
    %1184 = vmatmul.mubr.f32.gmra.mxu0 %v1019
    %v1185 = vpop.f32.mrf.mxu0
    %v1186 = vadd.f32 0.0, %v1185
    %v1187 = vpop.f32.mrf.mxu0
    %1188 = vmatprep.mubr.f32.mxu0 0.0
    %1189 = vmatmul.mubr.f32.gmra.mxu0 %v1022
    %v1190 = vpop.f32.mrf.mxu0
    %v1191 = vadd.f32 0.0, %v1190
    %v1192 = vpop.f32.mrf.mxu0
    %1193 = vmatprep.mubr.f32.mxu0 0.0
    %1194 = vmatmul.mubr.f32.gmra.mxu0 %v1025
    %v1195 = vpop.f32.mrf.mxu0
    %v1196 = vadd.f32 0.0, %v1195
    %v1197 = vpop.f32.mrf.mxu0
    %1198 = vmatprep.mubr.f32.mxu0 0.0
    %1199 = vmatmul.mubr.f32.gmra.mxu0 %v1028
    %v1200 = vpop.f32.mrf.mxu0
    %v1201 = vadd.f32 0.0, %v1200
    %v1202 = vpop.f32.mrf.mxu0
    %1203 = vmatprep.mubr.f32.mxu0 0.0
    %1204 = vmatmul.mubr.f32.gmra.mxu0 %v1031
    %v1205 = vpop.f32.mrf.mxu0
    %v1206 = vadd.f32 0.0, %v1205
    %v1207 = vpop.f32.mrf.mxu0
    %1208 = vmatprep.mubr.f32.mxu0 0.0
    %1209 = vmatmul.mubr.f32.gmra.mxu0 %v1034
    %v1210 = vpop.f32.mrf.mxu0
    %v1211 = vadd.f32 0.0, %v1210
    %v1212 = vpop.f32.mrf.mxu0
    %1213 = vmatprep.mubr.f32.mxu0 0.0
    %1214 = vmatmul.mubr.f32.gmra.mxu0 %v1037
    %v1215 = vpop.f32.mrf.mxu0
    %v1216 = vadd.f32 0.0, %v1215
    %v1217 = vpop.f32.mrf.mxu0
    %1218 = vmatprep.mubr.f32.mxu0 0.0
    %1219 = vmatmul.mubr.f32.gmra.mxu0 %v1040
    %v1220 = vpop.f32.mrf.mxu0
    %v1221 = vadd.f32 0.0, %v1220
    %v1222 = vpop.f32.mrf.mxu0
    %1223 = vmatprep.mubr.f32.mxu0 0.0
    %1224 = vmatmul.mubr.f32.gmra.mxu0 %v1043
    %v1225 = vpop.f32.mrf.mxu0
    %v1226 = vadd.f32 0.0, %v1225
    %v1227 = vpop.f32.mrf.mxu0
    %1228 = vmatprep.mubr.f32.mxu0 0.0
    %1229 = vmatmul.mubr.f32.gmra.mxu0 %v1046
    %v1230 = vpop.f32.mrf.mxu0
    %v1231 = vadd.f32 0.0, %v1230
    %v1232 = vpop.f32.mrf.mxu0
    %1233 = vmatprep.mubr.f32.mxu0 0.0
    %1234 = vmatmul.mubr.f32.gmra.mxu0 %v1049
    %v1235 = vpop.f32.mrf.mxu0
    %v1236 = vadd.f32 0.0, %v1235
    %v1237 = vpop.f32.mrf.mxu0
    %1238 = vmatprep.mubr.f32.mxu0 0.0
    %1239 = vmatmul.mubr.f32.gmra.mxu0 %v1052
    %v1240 = vpop.f32.mrf.mxu0
    %v1241 = vadd.f32 0.0, %v1240
    %v1242 = vpop.f32.mrf.mxu0
    %1243 = vmatprep.mubr.f32.mxu0 0.0
    %1244 = vmatmul.mubr.f32.gmra.mxu0 %v1055
    %v1245 = vpop.f32.mrf.mxu0
    %v1246 = vadd.f32 0.0, %v1245
    %v1247 = vpop.f32.mrf.mxu0
    %1248 = vmatprep.mubr.f32.mxu0 0.0
    %1249 = vmatmul.mubr.f32.gmra.mxu0 %v1058
    %v1250 = vpop.f32.mrf.mxu0
    %v1251 = vadd.f32 0.0, %v1250
    %v1252 = vpop.f32.mrf.mxu0
    %1253 = vmatprep.mubr.f32.mxu0 0.0
    %1254 = vmatmul.mubr.f32.gmra.mxu0 %v1061
    %v1255 = vpop.f32.mrf.mxu0
    %v1256 = vadd.f32 0.0, %v1255
    %v1257 = vpop.f32.mrf.mxu0
    %1258 = vmatprep.mubr.f32.mxu0 0.0
    %1259 = vmatmul.mubr.f32.gmra.mxu0 %v1064
    %v1260 = vpop.f32.mrf.mxu0
    %v1261 = vadd.f32 0.0, %v1260
    %v1262 = vpop.f32.mrf.mxu0
    %1263 = vmatprep.mubr.f32.mxu0 0.0
    %1264 = vmatmul.mubr.f32.gmra.mxu0 %v1067
    %v1265 = vpop.f32.mrf.mxu0
    %v1266 = vadd.f32 0.0, %v1265
    %v1267 = vpop.f32.mrf.mxu0
    %1268 = vmatprep.mubr.f32.mxu0 0.0
    %1269 = vmatmul.mubr.f32.gmra.mxu0 %v1070
    %v1270 = vpop.f32.mrf.mxu0
    %v1271 = vadd.f32 0.0, %v1270
    %v1272 = vpop.f32.mrf.mxu0
    %1273 = vmatprep.mubr.f32.mxu0 0.0
    %1274 = vmatmul.mubr.f32.gmra.mxu0 %v1073
    %v1275 = vpop.f32.mrf.mxu0
    %v1276 = vadd.f32 0.0, %v1275
    %v1277 = vpop.f32.mrf.mxu0
    %1278 = vmatprep.mubr.f32.mxu0 0.0
    %1279 = vmatmul.mubr.f32.gmra.mxu0 %v1076
    %v1280 = vpop.f32.mrf.mxu0
    %v1281 = vadd.f32 0.0, %v1280
    %v1282 = vpop.f32.mrf.mxu0
    %1283 = vmatprep.mubr.f32.mxu0 0.0
    %1284 = vmatmul.mubr.f32.gmra.mxu0 %v1079
    %v1285 = vpop.f32.mrf.mxu0
    %v1286 = vadd.f32 0.0, %v1285
    %v1287 = vpop.f32.mrf.mxu0
    %1288 = vmatprep.mubr.f32.mxu0 0.0
    %1289 = vmatmul.mubr.f32.gmra.mxu0 %v1082
    %v1290 = vpop.f32.mrf.mxu0
    %v1291 = vadd.f32 0.0, %v1290
    %v1292 = vpop.f32.mrf.mxu0
    %1293 = vmatprep.mubr.f32.mxu0 0.0
    %1294 = vmatmul.mubr.f32.gmra.mxu0 %v1085
    %v1295 = vpop.f32.mrf.mxu0
    %v1296 = vadd.f32 0.0, %v1295
    %v1297 = vpop.f32.mrf.mxu0
    %1298 = vmatprep.mubr.f32.mxu0 0.0
    %1299 = vmatmul.mubr.f32.gmra.mxu0 %v1088
    %v1300 = vpop.f32.mrf.mxu0
    %v1301 = vadd.f32 0.0, %v1300
    %v1302 = vpop.f32.mrf.mxu0
    %1303 = vmatprep.mubr.f32.mxu0 0.0
    %1304 = vmatmul.mubr.f32.gmra.mxu0 %v1091
    %v1305 = vpop.f32.mrf.mxu0
    %v1306 = vadd.f32 0.0, %v1305
    %v1307 = vpop.f32.mrf.mxu0
    %1308 = vmatprep.mubr.f32.mxu0 0.0
    %1309 = vmatmul.mubr.f32.gmra.mxu0 %v1094
    %v1310 = vpop.f32.mrf.mxu0
    %v1311 = vadd.f32 0.0, %v1310
    %v1312 = vpop.f32.mrf.mxu0
    %1313 = vmatprep.mubr.f32.mxu0 0.0
    %1314 = vmatmul.mubr.f32.gmra.mxu0 %v1097
    %v1315 = vpop.f32.mrf.mxu0
    %v1316 = vadd.f32 0.0, %v1315
    %v1317 = vpop.f32.mrf.mxu0
    %1318 = vmatprep.mubr.f32.mxu0 0.0
    %1319 = vmatmul.mubr.f32.gmra.mxu0 %v1100
    %v1320 = vpop.f32.mrf.mxu0
    %v1321 = vadd.f32 0.0, %v1320
    %v1322 = vpop.f32.mrf.mxu0
    %1323 = vmatprep.mubr.f32.mxu0 0.0
    %1324 = vmatmul.mubr.f32.gmra.mxu0 %v1103
    %v1325 = vpop.f32.mrf.mxu0
    %v1326 = vadd.f32 0.0, %v1325
    %v1327 = vpop.f32.mrf.mxu0
    %1328 = vmatprep.mubr.f32.mxu0 0.0
    %1329 = vmatmul.mubr.f32.gmra.mxu0 %v1106
    %v1330 = vpop.f32.mrf.mxu0
    %v1331 = vadd.f32 0.0, %v1330
    %v1332 = vpop.f32.mrf.mxu0
    %1333 = vmatprep.mubr.f32.mxu0 0.0
    %1334 = vmatmul.mubr.f32.gmra.mxu0 %v1109
    %v1335 = vpop.f32.mrf.mxu0
    %v1336 = vadd.f32 0.0, %v1335
    %v1337 = vpop.f32.mrf.mxu0
    %1338 = vdwg.mxu0
    %v1339 = vadd.f32 %v853, %v1181
    %v1340 = vadd.f32 %v858, %v1186
    %v1341 = vadd.f32 %v863, %v1191
    %v1342 = vadd.f32 %v868, %v1196
    %v1343 = vadd.f32 %v873, %v1201
    %v1344 = vadd.f32 %v878, %v1206
    %v1345 = vadd.f32 %v883, %v1211
    %v1346 = vadd.f32 %v888, %v1216
    %v1347 = vadd.f32 %v893, %v1221
    %v1348 = vadd.f32 %v898, %v1226
    %v1349 = vadd.f32 %v903, %v1231
    %v1350 = vadd.f32 %v908, %v1236
    %v1351 = vadd.f32 %v913, %v1241
    %v1352 = vadd.f32 %v918, %v1246
    %v1353 = vadd.f32 %v923, %v1251
    %v1354 = vadd.f32 %v928, %v1256
    %v1355 = vadd.f32 %v933, %v1261
    %v1356 = vadd.f32 %v938, %v1266
    %v1357 = vadd.f32 %v943, %v1271
    %v1358 = vadd.f32 %v948, %v1276
    %v1359 = vadd.f32 %v953, %v1281
    %v1360 = vadd.f32 %v958, %v1286
    %v1361 = vadd.f32 %v963, %v1291
    %v1362 = vadd.f32 %v968, %v1296
    %v1363 = vadd.f32 %v973, %v1301
    %v1364 = vadd.f32 %v978, %v1306
    %v1365 = vadd.f32 %v983, %v1311
    %v1366 = vadd.f32 %v988, %v1316
    %v1367 = vadd.f32 %v993, %v1321
    %v1368 = vadd.f32 %v998, %v1326
    %v1369 = vadd.f32 %v1003, %v1331
    %v1370 = vadd.f32 %v1008, %v1336
    %v1371 = vld [vmem:[%s2] sm:$0x1]
    %v1373 = vlaneseq
    %v1374 = vshrl.u32 %v1373, 7
    %v1375 = vsub.s32 0, %v1374
    %v1376 = vrot.slane %v1371, %v1375
    %v1378 = vadd.f32 %v1339, %v1376
    %v1379 = vadd.f32 %v1340, %v1376
    %v1380 = vadd.f32 %v1341, %v1376
    %v1381 = vadd.f32 %v1342, %v1376
    %v1382 = vadd.f32 %v1343, %v1376
    %v1383 = vadd.f32 %v1344, %v1376
    %v1384 = vadd.f32 %v1345, %v1376
    %v1385 = vadd.f32 %v1346, %v1376
    %v1386 = vadd.f32 %v1347, %v1376
    %v1387 = vadd.f32 %v1348, %v1376
    %v1388 = vadd.f32 %v1349, %v1376
    %v1389 = vadd.f32 %v1350, %v1376
    %v1390 = vadd.f32 %v1351, %v1376
    %v1391 = vadd.f32 %v1352, %v1376
    %v1392 = vadd.f32 %v1353, %v1376
    %v1393 = vadd.f32 %v1354, %v1376
    %v1394 = vadd.f32 %v1355, %v1376
    %v1395 = vadd.f32 %v1356, %v1376
    %v1396 = vadd.f32 %v1357, %v1376
    %v1397 = vadd.f32 %v1358, %v1376
    %v1398 = vadd.f32 %v1359, %v1376
    %v1399 = vadd.f32 %v1360, %v1376
    %v1400 = vadd.f32 %v1361, %v1376
    %v1401 = vadd.f32 %v1362, %v1376
    %v1402 = vadd.f32 %v1363, %v1376
    %v1403 = vadd.f32 %v1364, %v1376
    %v1404 = vadd.f32 %v1365, %v1376
    %v1405 = vadd.f32 %v1366, %v1376
    %v1406 = vadd.f32 %v1367, %v1376
    %v1407 = vadd.f32 %v1368, %v1376
    %v1408 = vadd.f32 %v1369, %v1376
    %v1409 = vadd.f32 %v1370, %v1376
    %v1410 = vmax.f32 %v1378, 0.0
    %v1411 = vmax.f32 %v1379, 0.0
    %v1412 = vmax.f32 %v1380, 0.0
    %v1413 = vmax.f32 %v1381, 0.0
    %v1414 = vmax.f32 %v1382, 0.0
    %v1415 = vmax.f32 %v1383, 0.0
    %v1416 = vmax.f32 %v1384, 0.0
    %v1417 = vmax.f32 %v1385, 0.0
    %v1418 = vmax.f32 %v1386, 0.0
    %v1419 = vmax.f32 %v1387, 0.0
    %v1420 = vmax.f32 %v1388, 0.0
    %v1421 = vmax.f32 %v1389, 0.0
    %v1422 = vmax.f32 %v1390, 0.0
    %v1423 = vmax.f32 %v1391, 0.0
    %v1424 = vmax.f32 %v1392, 0.0
    %v1425 = vmax.f32 %v1393, 0.0
    %v1426 = vmax.f32 %v1394, 0.0
    %v1427 = vmax.f32 %v1395, 0.0
    %v1428 = vmax.f32 %v1396, 0.0
    %v1429 = vmax.f32 %v1397, 0.0
    %v1430 = vmax.f32 %v1398, 0.0
    %v1431 = vmax.f32 %v1399, 0.0
    %v1432 = vmax.f32 %v1400, 0.0
    %v1433 = vmax.f32 %v1401, 0.0
    %v1434 = vmax.f32 %v1402, 0.0
    %v1435 = vmax.f32 %v1403, 0.0
    %v1436 = vmax.f32 %v1404, 0.0
    %v1437 = vmax.f32 %v1405, 0.0
    %v1438 = vmax.f32 %v1406, 0.0
    %v1439 = vmax.f32 %v1407, 0.0
    %v1440 = vmax.f32 %v1408, 0.0
    %v1441 = vmax.f32 %v1409, 0.0
    %v1442 = vsel %vm194, %v1441, 0.0
    %v1443 = vsel %vm195, %v1410, 0.0
    %v1444 = vsel %vm196, %v1411, 0.0
    %v1445 = vsel %vm197, %v1412, 0.0
    %v1446 = vsel %vm198, %v1413, 0.0
    %v1447 = vsel %vm199, %v1414, 0.0
    %v1448 = vsel %vm200, %v1415, 0.0
    %v1449 = vsel %vm201, %v1416, 0.0
    %v1450 = vsel %vm202, %v1417, 0.0
    %v1451 = vsel %vm203, %v1418, 0.0
    %v1452 = vsel %vm204, %v1419, 0.0
    %v1453 = vsel %vm205, %v1420, 0.0
    %v1454 = vsel %vm206, %v1421, 0.0
    %v1455 = vsel %vm207, %v1422, 0.0
    %v1456 = vsel %vm208, %v1423, 0.0
    %v1457 = vsel %vm209, %v1424, 0.0
    %v1458 = vsel %vm210, %v1425, 0.0
    %v1459 = vsel %vm211, %v1426, 0.0
    %v1460 = vsel %vm212, %v1427, 0.0
    %v1461 = vsel %vm213, %v1428, 0.0
    %v1462 = vsel %vm214, %v1429, 0.0
    %v1463 = vsel %vm215, %v1430, 0.0
    %v1464 = vsel %vm216, %v1431, 0.0
    %v1465 = vsel %vm217, %v1432, 0.0
    %v1466 = vsel %vm218, %v1433, 0.0
    %v1467 = vsel %vm219, %v1434, 0.0
    %v1468 = vsel %vm220, %v1435, 0.0
    %v1469 = vsel %vm221, %v1436, 0.0
    %v1470 = vsel %vm222, %v1437, 0.0
    %v1471 = vsel %vm223, %v1438, 0.0
    %v1472 = vsel %vm224, %v1439, 0.0
    %v1473 = vsel %vm225, %v1440, 0.0
    %v1474 = vsel %vm290, %v1411, 0.0
    %v1475 = vsel %vm291, %v1412, 0.0
    %v1476 = vsel %vm292, %v1413, 0.0
    %v1477 = vsel %vm293, %v1414, 0.0
    %v1478 = vsel %vm294, %v1415, 0.0
    %v1479 = vsel %vm295, %v1416, 0.0
    %v1480 = vsel %vm296, %v1417, 0.0
    %v1481 = vsel %vm297, %v1418, 0.0
    %v1482 = vsel %vm298, %v1419, 0.0
    %v1483 = vsel %vm299, %v1420, 0.0
    %v1484 = vsel %vm300, %v1421, 0.0
    %v1485 = vsel %vm301, %v1422, 0.0
    %v1486 = vsel %vm302, %v1423, 0.0
    %v1487 = vsel %vm303, %v1424, 0.0
    %v1488 = vsel %vm304, %v1425, 0.0
    %v1489 = vsel %vm305, %v1426, 0.0
    %v1490 = vsel %vm306, %v1427, 0.0
    %v1491 = vsel %vm307, %v1428, 0.0
    %v1492 = vsel %vm308, %v1429, 0.0
    %v1493 = vsel %vm309, %v1430, 0.0
    %v1494 = vsel %vm310, %v1431, 0.0
    %v1495 = vsel %vm311, %v1432, 0.0
    %v1496 = vsel %vm312, %v1433, 0.0
    %v1497 = vsel %vm313, %v1434, 0.0
    %v1498 = vsel %vm314, %v1435, 0.0
    %v1499 = vsel %vm315, %v1436, 0.0
    %v1500 = vsel %vm316, %v1437, 0.0
    %v1501 = vsel %vm317, %v1438, 0.0
    %v1502 = vsel %vm318, %v1439, 0.0
    %v1503 = vsel %vm319, %v1440, 0.0
    %v1504 = vsel %vm320, %v1441, 0.0
    %v1505 = vsel %vm321, %v1410, 0.0
    %v1506 = vld [vmem:[%s3] sm:$0xff]
    %v1507 = vld [vmem:[%s3 + $0x8] sm:$0xff]
    %v1508 = vld [vmem:[%s3 + $0x10] sm:$0xff]
    %v1509 = vld [vmem:[%s3 + $0x18] sm:$0xff]
    %v1510 = vld [vmem:[%s3 + $0x20] sm:$0xff]
    %v1511 = vld [vmem:[%s3 + $0x28] sm:$0xff]
    %v1512 = vld [vmem:[%s3 + $0x30] sm:$0xff]
    %v1513 = vld [vmem:[%s3 + $0x38] sm:$0xff]
    %s1514 = scalar_lea.vmem %s3, 64
    %v1515 = vld [vmem:[%s1514] sm:$0xff]
    %v1516 = vld [vmem:[%s1514 + $0x8] sm:$0xff]
    %v1517 = vld [vmem:[%s1514 + $0x10] sm:$0xff]
    %v1518 = vld [vmem:[%s1514 + $0x18] sm:$0xff]
    %v1519 = vld [vmem:[%s1514 + $0x20] sm:$0xff]
    %v1520 = vld [vmem:[%s1514 + $0x28] sm:$0xff]
    %v1521 = vld [vmem:[%s1514 + $0x30] sm:$0xff]
    %v1522 = vld [vmem:[%s1514 + $0x38] sm:$0xff]
    %vm1523 = vcmask 523264
    %v1525 = vsel %vm1523, %v1410, 0
    %v1528 = vsel %vm1523, %v1411, 0
    %v1531 = vsel %vm1523, %v1412, 0
    %v1534 = vsel %vm1523, %v1413, 0
    %v1537 = vsel %vm1523, %v1414, 0
    %v1540 = vsel %vm1523, %v1415, 0
    %v1543 = vsel %vm1523, %v1416, 0
    %v1546 = vsel %vm1523, %v1417, 0
    %v1549 = vsel %vm1523, %v1418, 0
    %v1552 = vsel %vm1523, %v1419, 0
    %v1555 = vsel %vm1523, %v1420, 0
    %v1558 = vsel %vm1523, %v1421, 0
    %v1561 = vsel %vm1523, %v1422, 0
    %v1564 = vsel %vm1523, %v1423, 0
    %v1567 = vsel %vm1523, %v1424, 0
    %v1570 = vsel %vm1523, %v1425, 0
    %v1573 = vsel %vm1523, %v1426, 0
    %v1576 = vsel %vm1523, %v1427, 0
    %v1579 = vsel %vm1523, %v1428, 0
    %v1582 = vsel %vm1523, %v1429, 0
    %v1585 = vsel %vm1523, %v1430, 0
    %v1588 = vsel %vm1523, %v1431, 0
    %v1591 = vsel %vm1523, %v1432, 0
    %v1594 = vsel %vm1523, %v1433, 0
    %v1597 = vsel %vm1523, %v1434, 0
    %v1600 = vsel %vm1523, %v1435, 0
    %v1603 = vsel %vm1523, %v1436, 0
    %v1606 = vsel %vm1523, %v1437, 0
    %v1609 = vsel %vm1523, %v1438, 0
    %v1612 = vsel %vm1523, %v1439, 0
    %v1615 = vsel %vm1523, %v1440, 0
    %v1618 = vsel %vm1523, %v1441, 0
    %1620 = vmatprep.subr.mxu0 0.0
    %1621 = vmatpush1.msra.mxu0 0.0
    %1622 = vmatprep.subr.mxu0 0.0
    %1623 = vmatpush1.msra.mxu0 0.0
    %1624 = vmatprep.subr.mxu0 0.0
    %1625 = vmatpush1.msra.mxu0 0.0
    %1626 = vmatprep.subr.mxu0 0.0
    %1627 = vmatpush1.msra.mxu0 0.0
    %1628 = vmatprep.subr.mxu0 0.0
    %1629 = vmatpush1.msra.mxu0 0.0
    %1630 = vmatprep.subr.mxu0 0.0
    %1631 = vmatpush1.msra.mxu0 0.0
    %1632 = vmatprep.subr.mxu0 0.0
    %1633 = vmatpush1.msra.mxu0 0.0
    %1634 = vmatprep.subr.mxu0 0.0
    %1635 = vmatpush1.msra.mxu0 0.0
    %1636 = vmatprep.subr.mxu0 0.0
    %1637 = vmatpush1.msra.mxu0 %v1522
    %1638 = vmatprep.subr.mxu0 0.0
    %1639 = vmatpush1.msra.mxu0 %v1521
    %1640 = vmatprep.subr.mxu0 0.0
    %1641 = vmatpush1.msra.mxu0 %v1520
    %1642 = vmatprep.subr.mxu0 0.0
    %1643 = vmatpush1.msra.mxu0 %v1519
    %1644 = vmatprep.subr.mxu0 0.0
    %1645 = vmatpush1.msra.mxu0 %v1518
    %1646 = vmatprep.subr.mxu0 0.0
    %1647 = vmatpush1.msra.mxu0 %v1517
    %1648 = vmatprep.subr.mxu0 0.0
    %1649 = vmatpush1.msra.mxu0 %v1516
    %1650 = vmatprep.subr.mxu0 0.0
    %1651 = vmatpush1.msra.mxu0 %v1515
    %1652 = vmatprep.subr.mxu0 0.0
    %1653 = vmatpush2.msra.mxu0 0.0
    %1654 = vmatprep.subr.mxu0 0.0
    %1655 = vmatpush2.msra.mxu0 0.0
    %1656 = vmatprep.subr.mxu0 0.0
    %1657 = vmatpush2.msra.mxu0 0.0
    %1658 = vmatprep.subr.mxu0 0.0
    %1659 = vmatpush2.msra.mxu0 0.0
    %1660 = vmatprep.subr.mxu0 0.0
    %1661 = vmatpush2.msra.mxu0 0.0
    %1662 = vmatprep.subr.mxu0 0.0
    %1663 = vmatpush2.msra.mxu0 0.0
    %1664 = vmatprep.subr.mxu0 0.0
    %1665 = vmatpush2.msra.mxu0 0.0
    %1666 = vmatprep.subr.mxu0 0.0
    %1667 = vmatpush2.msra.mxu0 0.0
    %1668 = vmatprep.subr.mxu0 0.0
    %1669 = vmatpush2.msra.mxu0 0.0
    %1670 = vmatprep.subr.mxu0 0.0
    %1671 = vmatpush2.msra.mxu0 0.0
    %1672 = vmatprep.subr.mxu0 0.0
    %1673 = vmatpush2.msra.mxu0 0.0
    %1674 = vmatprep.subr.mxu0 0.0
    %1675 = vmatpush2.msra.mxu0 0.0
    %1676 = vmatprep.subr.mxu0 0.0
    %1677 = vmatpush2.msra.mxu0 0.0
    %1678 = vmatprep.subr.mxu0 0.0
    %1679 = vmatpush2.msra.mxu0 0.0
    %1680 = vmatprep.subr.mxu0 0.0
    %1681 = vmatpush2.msra.mxu0 0.0
    %1682 = vmatprep.subr.mxu0 0.0
    %1683 = vmatpush2.msra.mxu0 0.0
    %1684 = vmatprep.mubr.f32.mxu0 0.0
    %1685 = vmatmul.mubr.f32.gmra.mxu0 %v1525
    %v1686 = vpop.f32.mrf.mxu0
    %v1687 = vadd.f32 0.0, %v1686
    %v1688 = vpop.f32.mrf.mxu0
    %1689 = vmatprep.mubr.f32.mxu0 0.0
    %1690 = vmatmul.mubr.f32.gmra.mxu0 %v1528
    %v1691 = vpop.f32.mrf.mxu0
    %v1692 = vadd.f32 0.0, %v1691
    %v1693 = vpop.f32.mrf.mxu0
    %1694 = vmatprep.mubr.f32.mxu0 0.0
    %1695 = vmatmul.mubr.f32.gmra.mxu0 %v1531
    %v1696 = vpop.f32.mrf.mxu0
    %v1697 = vadd.f32 0.0, %v1696
    %v1698 = vpop.f32.mrf.mxu0
    %1699 = vmatprep.mubr.f32.mxu0 0.0
    %1700 = vmatmul.mubr.f32.gmra.mxu0 %v1534
    %v1701 = vpop.f32.mrf.mxu0
    %v1702 = vadd.f32 0.0, %v1701
    %v1703 = vpop.f32.mrf.mxu0
    %1704 = vmatprep.mubr.f32.mxu0 0.0
    %1705 = vmatmul.mubr.f32.gmra.mxu0 %v1537
    %v1706 = vpop.f32.mrf.mxu0
    %v1707 = vadd.f32 0.0, %v1706
    %v1708 = vpop.f32.mrf.mxu0
    %1709 = vmatprep.mubr.f32.mxu0 0.0
    %1710 = vmatmul.mubr.f32.gmra.mxu0 %v1540
    %v1711 = vpop.f32.mrf.mxu0
    %v1712 = vadd.f32 0.0, %v1711
    %v1713 = vpop.f32.mrf.mxu0
    %1714 = vmatprep.mubr.f32.mxu0 0.0
    %1715 = vmatmul.mubr.f32.gmra.mxu0 %v1543
    %v1716 = vpop.f32.mrf.mxu0
    %v1717 = vadd.f32 0.0, %v1716
    %v1718 = vpop.f32.mrf.mxu0
    %1719 = vmatprep.mubr.f32.mxu0 0.0
    %1720 = vmatmul.mubr.f32.gmra.mxu0 %v1546
    %v1721 = vpop.f32.mrf.mxu0
    %v1722 = vadd.f32 0.0, %v1721
    %v1723 = vpop.f32.mrf.mxu0
    %1724 = vmatprep.mubr.f32.mxu0 0.0
    %1725 = vmatmul.mubr.f32.gmra.mxu0 %v1549
    %v1726 = vpop.f32.mrf.mxu0
    %v1727 = vadd.f32 0.0, %v1726
    %v1728 = vpop.f32.mrf.mxu0
    %1729 = vmatprep.mubr.f32.mxu0 0.0
    %1730 = vmatmul.mubr.f32.gmra.mxu0 %v1552
    %v1731 = vpop.f32.mrf.mxu0
    %v1732 = vadd.f32 0.0, %v1731
    %v1733 = vpop.f32.mrf.mxu0
    %1734 = vmatprep.mubr.f32.mxu0 0.0
    %1735 = vmatmul.mubr.f32.gmra.mxu0 %v1555
    %v1736 = vpop.f32.mrf.mxu0
    %v1737 = vadd.f32 0.0, %v1736
    %v1738 = vpop.f32.mrf.mxu0
    %1739 = vmatprep.mubr.f32.mxu0 0.0
    %1740 = vmatmul.mubr.f32.gmra.mxu0 %v1558
    %v1741 = vpop.f32.mrf.mxu0
    %v1742 = vadd.f32 0.0, %v1741
    %v1743 = vpop.f32.mrf.mxu0
    %1744 = vmatprep.mubr.f32.mxu0 0.0
    %1745 = vmatmul.mubr.f32.gmra.mxu0 %v1561
    %v1746 = vpop.f32.mrf.mxu0
    %v1747 = vadd.f32 0.0, %v1746
    %v1748 = vpop.f32.mrf.mxu0
    %1749 = vmatprep.mubr.f32.mxu0 0.0
    %1750 = vmatmul.mubr.f32.gmra.mxu0 %v1564
    %v1751 = vpop.f32.mrf.mxu0
    %v1752 = vadd.f32 0.0, %v1751
    %v1753 = vpop.f32.mrf.mxu0
    %1754 = vmatprep.mubr.f32.mxu0 0.0
    %1755 = vmatmul.mubr.f32.gmra.mxu0 %v1567
    %v1756 = vpop.f32.mrf.mxu0
    %v1757 = vadd.f32 0.0, %v1756
    %v1758 = vpop.f32.mrf.mxu0
    %1759 = vmatprep.mubr.f32.mxu0 0.0
    %1760 = vmatmul.mubr.f32.gmra.mxu0 %v1570
    %v1761 = vpop.f32.mrf.mxu0
    %v1762 = vadd.f32 0.0, %v1761
    %v1763 = vpop.f32.mrf.mxu0
    %1764 = vmatprep.mubr.f32.mxu0 0.0
    %1765 = vmatmul.mubr.f32.gmra.mxu0 %v1573
    %v1766 = vpop.f32.mrf.mxu0
    %v1767 = vadd.f32 0.0, %v1766
    %v1768 = vpop.f32.mrf.mxu0
    %1769 = vmatprep.mubr.f32.mxu0 0.0
    %1770 = vmatmul.mubr.f32.gmra.mxu0 %v1576
    %v1771 = vpop.f32.mrf.mxu0
    %v1772 = vadd.f32 0.0, %v1771
    %v1773 = vpop.f32.mrf.mxu0
    %1774 = vmatprep.mubr.f32.mxu0 0.0
    %1775 = vmatmul.mubr.f32.gmra.mxu0 %v1579
    %v1776 = vpop.f32.mrf.mxu0
    %v1777 = vadd.f32 0.0, %v1776
    %v1778 = vpop.f32.mrf.mxu0
    %1779 = vmatprep.mubr.f32.mxu0 0.0
    %1780 = vmatmul.mubr.f32.gmra.mxu0 %v1582
    %v1781 = vpop.f32.mrf.mxu0
    %v1782 = vadd.f32 0.0, %v1781
    %v1783 = vpop.f32.mrf.mxu0
    %1784 = vmatprep.mubr.f32.mxu0 0.0
    %1785 = vmatmul.mubr.f32.gmra.mxu0 %v1585
    %v1786 = vpop.f32.mrf.mxu0
    %v1787 = vadd.f32 0.0, %v1786
    %v1788 = vpop.f32.mrf.mxu0
    %1789 = vmatprep.mubr.f32.mxu0 0.0
    %1790 = vmatmul.mubr.f32.gmra.mxu0 %v1588
    %v1791 = vpop.f32.mrf.mxu0
    %v1792 = vadd.f32 0.0, %v1791
    %v1793 = vpop.f32.mrf.mxu0
    %1794 = vmatprep.mubr.f32.mxu0 0.0
    %1795 = vmatmul.mubr.f32.gmra.mxu0 %v1591
    %v1796 = vpop.f32.mrf.mxu0
    %v1797 = vadd.f32 0.0, %v1796
    %v1798 = vpop.f32.mrf.mxu0
    %1799 = vmatprep.mubr.f32.mxu0 0.0
    %1800 = vmatmul.mubr.f32.gmra.mxu0 %v1594
    %v1801 = vpop.f32.mrf.mxu0
    %v1802 = vadd.f32 0.0, %v1801
    %v1803 = vpop.f32.mrf.mxu0
    %1804 = vmatprep.mubr.f32.mxu0 0.0
    %1805 = vmatmul.mubr.f32.gmra.mxu0 %v1597
    %v1806 = vpop.f32.mrf.mxu0
    %v1807 = vadd.f32 0.0, %v1806
    %v1808 = vpop.f32.mrf.mxu0
    %1809 = vmatprep.mubr.f32.mxu0 0.0
    %1810 = vmatmul.mubr.f32.gmra.mxu0 %v1600
    %v1811 = vpop.f32.mrf.mxu0
    %v1812 = vadd.f32 0.0, %v1811
    %v1813 = vpop.f32.mrf.mxu0
    %1814 = vmatprep.mubr.f32.mxu0 0.0
    %1815 = vmatmul.mubr.f32.gmra.mxu0 %v1603
    %v1816 = vpop.f32.mrf.mxu0
    %v1817 = vadd.f32 0.0, %v1816
    %v1818 = vpop.f32.mrf.mxu0
    %1819 = vmatprep.mubr.f32.mxu0 0.0
    %1820 = vmatmul.mubr.f32.gmra.mxu0 %v1606
    %v1821 = vpop.f32.mrf.mxu0
    %v1822 = vadd.f32 0.0, %v1821
    %v1823 = vpop.f32.mrf.mxu0
    %1824 = vmatprep.mubr.f32.mxu0 0.0
    %1825 = vmatmul.mubr.f32.gmra.mxu0 %v1609
    %v1826 = vpop.f32.mrf.mxu0
    %v1827 = vadd.f32 0.0, %v1826
    %v1828 = vpop.f32.mrf.mxu0
    %1829 = vmatprep.mubr.f32.mxu0 0.0
    %1830 = vmatmul.mubr.f32.gmra.mxu0 %v1612
    %v1831 = vpop.f32.mrf.mxu0
    %v1832 = vadd.f32 0.0, %v1831
    %v1833 = vpop.f32.mrf.mxu0
    %1834 = vmatprep.mubr.f32.mxu0 0.0
    %1835 = vmatmul.mubr.f32.gmra.mxu0 %v1615
    %v1836 = vpop.f32.mrf.mxu0
    %v1837 = vadd.f32 0.0, %v1836
    %v1838 = vpop.f32.mrf.mxu0
    %1839 = vmatprep.mubr.f32.mxu0 0.0
    %1840 = vmatmul.mubr.f32.gmra.mxu0 %v1618
    %v1841 = vpop.f32.mrf.mxu0
    %v1842 = vadd.f32 0.0, %v1841
    %v1843 = vpop.f32.mrf.mxu0
    %1844 = vdwg.mxu0
    %v1846 = vsel %vm1523, %v1442, 0
    %v1849 = vsel %vm1523, %v1443, 0
    %v1852 = vsel %vm1523, %v1444, 0
    %v1855 = vsel %vm1523, %v1445, 0
    %v1858 = vsel %vm1523, %v1446, 0
    %v1861 = vsel %vm1523, %v1447, 0
    %v1864 = vsel %vm1523, %v1448, 0
    %v1867 = vsel %vm1523, %v1449, 0
    %v1870 = vsel %vm1523, %v1450, 0
    %v1873 = vsel %vm1523, %v1451, 0
    %v1876 = vsel %vm1523, %v1452, 0
    %v1879 = vsel %vm1523, %v1453, 0
    %v1882 = vsel %vm1523, %v1454, 0
    %v1885 = vsel %vm1523, %v1455, 0
    %v1888 = vsel %vm1523, %v1456, 0
    %v1891 = vsel %vm1523, %v1457, 0
    %v1894 = vsel %vm1523, %v1458, 0
    %v1897 = vsel %vm1523, %v1459, 0
    %v1900 = vsel %vm1523, %v1460, 0
    %v1903 = vsel %vm1523, %v1461, 0
    %v1906 = vsel %vm1523, %v1462, 0
    %v1909 = vsel %vm1523, %v1463, 0
    %v1912 = vsel %vm1523, %v1464, 0
    %v1915 = vsel %vm1523, %v1465, 0
    %v1918 = vsel %vm1523, %v1466, 0
    %v1921 = vsel %vm1523, %v1467, 0
    %v1924 = vsel %vm1523, %v1468, 0
    %v1927 = vsel %vm1523, %v1469, 0
    %v1930 = vsel %vm1523, %v1470, 0
    %v1933 = vsel %vm1523, %v1471, 0
    %v1936 = vsel %vm1523, %v1472, 0
    %v1939 = vsel %vm1523, %v1473, 0
    %1941 = vmatprep.subr.mxu0 0.0
    %1942 = vmatpush1.msra.mxu0 0.0
    %1943 = vmatprep.subr.mxu0 0.0
    %1944 = vmatpush1.msra.mxu0 0.0
    %1945 = vmatprep.subr.mxu0 0.0
    %1946 = vmatpush1.msra.mxu0 0.0
    %1947 = vmatprep.subr.mxu0 0.0
    %1948 = vmatpush1.msra.mxu0 0.0
    %1949 = vmatprep.subr.mxu0 0.0
    %1950 = vmatpush1.msra.mxu0 0.0
    %1951 = vmatprep.subr.mxu0 0.0
    %1952 = vmatpush1.msra.mxu0 0.0
    %1953 = vmatprep.subr.mxu0 0.0
    %1954 = vmatpush1.msra.mxu0 0.0
    %1955 = vmatprep.subr.mxu0 0.0
    %1956 = vmatpush1.msra.mxu0 0.0
    %1957 = vmatprep.subr.mxu0 0.0
    %1958 = vmatpush1.msra.mxu0 %v1513
    %1959 = vmatprep.subr.mxu0 0.0
    %1960 = vmatpush1.msra.mxu0 %v1512
    %1961 = vmatprep.subr.mxu0 0.0
    %1962 = vmatpush1.msra.mxu0 %v1511
    %1963 = vmatprep.subr.mxu0 0.0
    %1964 = vmatpush1.msra.mxu0 %v1510
    %1965 = vmatprep.subr.mxu0 0.0
    %1966 = vmatpush1.msra.mxu0 %v1509
    %1967 = vmatprep.subr.mxu0 0.0
    %1968 = vmatpush1.msra.mxu0 %v1508
    %1969 = vmatprep.subr.mxu0 0.0
    %1970 = vmatpush1.msra.mxu0 %v1507
    %1971 = vmatprep.subr.mxu0 0.0
    %1972 = vmatpush1.msra.mxu0 %v1506
    %1973 = vmatprep.subr.mxu0 0.0
    %1974 = vmatpush2.msra.mxu0 0.0
    %1975 = vmatprep.subr.mxu0 0.0
    %1976 = vmatpush2.msra.mxu0 0.0
    %1977 = vmatprep.subr.mxu0 0.0
    %1978 = vmatpush2.msra.mxu0 0.0
    %1979 = vmatprep.subr.mxu0 0.0
    %1980 = vmatpush2.msra.mxu0 0.0
    %1981 = vmatprep.subr.mxu0 0.0
    %1982 = vmatpush2.msra.mxu0 0.0
    %1983 = vmatprep.subr.mxu0 0.0
    %1984 = vmatpush2.msra.mxu0 0.0
    %1985 = vmatprep.subr.mxu0 0.0
    %1986 = vmatpush2.msra.mxu0 0.0
    %1987 = vmatprep.subr.mxu0 0.0
    %1988 = vmatpush2.msra.mxu0 0.0
    %1989 = vmatprep.subr.mxu0 0.0
    %1990 = vmatpush2.msra.mxu0 0.0
    %1991 = vmatprep.subr.mxu0 0.0
    %1992 = vmatpush2.msra.mxu0 0.0
    %1993 = vmatprep.subr.mxu0 0.0
    %1994 = vmatpush2.msra.mxu0 0.0
    %1995 = vmatprep.subr.mxu0 0.0
    %1996 = vmatpush2.msra.mxu0 0.0
    %1997 = vmatprep.subr.mxu0 0.0
    %1998 = vmatpush2.msra.mxu0 0.0
    %1999 = vmatprep.subr.mxu0 0.0
    %2000 = vmatpush2.msra.mxu0 0.0
    %2001 = vmatprep.subr.mxu0 0.0
    %2002 = vmatpush2.msra.mxu0 0.0
    %2003 = vmatprep.subr.mxu0 0.0
    %2004 = vmatpush2.msra.mxu0 0.0
    %2005 = vmatprep.mubr.f32.mxu0 0.0
    %2006 = vmatmul.mubr.f32.gmra.mxu0 %v1846
    %v2007 = vpop.f32.mrf.mxu0
    %v2008 = vadd.f32 %v1687, %v2007
    %v2009 = vpop.f32.mrf.mxu0
    %2010 = vmatprep.mubr.f32.mxu0 0.0
    %2011 = vmatmul.mubr.f32.gmra.mxu0 %v1849
    %v2012 = vpop.f32.mrf.mxu0
    %v2013 = vadd.f32 %v1692, %v2012
    %v2014 = vpop.f32.mrf.mxu0
    %2015 = vmatprep.mubr.f32.mxu0 0.0
    %2016 = vmatmul.mubr.f32.gmra.mxu0 %v1852
    %v2017 = vpop.f32.mrf.mxu0
    %v2018 = vadd.f32 %v1697, %v2017
    %v2019 = vpop.f32.mrf.mxu0
    %2020 = vmatprep.mubr.f32.mxu0 0.0
    %2021 = vmatmul.mubr.f32.gmra.mxu0 %v1855
    %v2022 = vpop.f32.mrf.mxu0
    %v2023 = vadd.f32 %v1702, %v2022
    %v2024 = vpop.f32.mrf.mxu0
    %2025 = vmatprep.mubr.f32.mxu0 0.0
    %2026 = vmatmul.mubr.f32.gmra.mxu0 %v1858
    %v2027 = vpop.f32.mrf.mxu0
    %v2028 = vadd.f32 %v1707, %v2027
    %v2029 = vpop.f32.mrf.mxu0
    %2030 = vmatprep.mubr.f32.mxu0 0.0
    %2031 = vmatmul.mubr.f32.gmra.mxu0 %v1861
    %v2032 = vpop.f32.mrf.mxu0
    %v2033 = vadd.f32 %v1712, %v2032
    %v2034 = vpop.f32.mrf.mxu0
    %2035 = vmatprep.mubr.f32.mxu0 0.0
    %2036 = vmatmul.mubr.f32.gmra.mxu0 %v1864
    %v2037 = vpop.f32.mrf.mxu0
    %v2038 = vadd.f32 %v1717, %v2037
    %v2039 = vpop.f32.mrf.mxu0
    %2040 = vmatprep.mubr.f32.mxu0 0.0
    %2041 = vmatmul.mubr.f32.gmra.mxu0 %v1867
    %v2042 = vpop.f32.mrf.mxu0
    %v2043 = vadd.f32 %v1722, %v2042
    %v2044 = vpop.f32.mrf.mxu0
    %2045 = vmatprep.mubr.f32.mxu0 0.0
    %2046 = vmatmul.mubr.f32.gmra.mxu0 %v1870
    %v2047 = vpop.f32.mrf.mxu0
    %v2048 = vadd.f32 %v1727, %v2047
    %v2049 = vpop.f32.mrf.mxu0
    %2050 = vmatprep.mubr.f32.mxu0 0.0
    %2051 = vmatmul.mubr.f32.gmra.mxu0 %v1873
    %v2052 = vpop.f32.mrf.mxu0
    %v2053 = vadd.f32 %v1732, %v2052
    %v2054 = vpop.f32.mrf.mxu0
    %2055 = vmatprep.mubr.f32.mxu0 0.0
    %2056 = vmatmul.mubr.f32.gmra.mxu0 %v1876
    %v2057 = vpop.f32.mrf.mxu0
    %v2058 = vadd.f32 %v1737, %v2057
    %v2059 = vpop.f32.mrf.mxu0
    %2060 = vmatprep.mubr.f32.mxu0 0.0
    %2061 = vmatmul.mubr.f32.gmra.mxu0 %v1879
    %v2062 = vpop.f32.mrf.mxu0
    %v2063 = vadd.f32 %v1742, %v2062
    %v2064 = vpop.f32.mrf.mxu0
    %2065 = vmatprep.mubr.f32.mxu0 0.0
    %2066 = vmatmul.mubr.f32.gmra.mxu0 %v1882
    %v2067 = vpop.f32.mrf.mxu0
    %v2068 = vadd.f32 %v1747, %v2067
    %v2069 = vpop.f32.mrf.mxu0
    %2070 = vmatprep.mubr.f32.mxu0 0.0
    %2071 = vmatmul.mubr.f32.gmra.mxu0 %v1885
    %v2072 = vpop.f32.mrf.mxu0
    %v2073 = vadd.f32 %v1752, %v2072
    %v2074 = vpop.f32.mrf.mxu0
    %2075 = vmatprep.mubr.f32.mxu0 0.0
    %2076 = vmatmul.mubr.f32.gmra.mxu0 %v1888
    %v2077 = vpop.f32.mrf.mxu0
    %v2078 = vadd.f32 %v1757, %v2077
    %v2079 = vpop.f32.mrf.mxu0
    %2080 = vmatprep.mubr.f32.mxu0 0.0
    %2081 = vmatmul.mubr.f32.gmra.mxu0 %v1891
    %v2082 = vpop.f32.mrf.mxu0
    %v2083 = vadd.f32 %v1762, %v2082
    %v2084 = vpop.f32.mrf.mxu0
    %2085 = vmatprep.mubr.f32.mxu0 0.0
    %2086 = vmatmul.mubr.f32.gmra.mxu0 %v1894
    %v2087 = vpop.f32.mrf.mxu0
    %v2088 = vadd.f32 %v1767, %v2087
    %v2089 = vpop.f32.mrf.mxu0
    %2090 = vmatprep.mubr.f32.mxu0 0.0
    %2091 = vmatmul.mubr.f32.gmra.mxu0 %v1897
    %v2092 = vpop.f32.mrf.mxu0
    %v2093 = vadd.f32 %v1772, %v2092
    %v2094 = vpop.f32.mrf.mxu0
    %2095 = vmatprep.mubr.f32.mxu0 0.0
    %2096 = vmatmul.mubr.f32.gmra.mxu0 %v1900
    %v2097 = vpop.f32.mrf.mxu0
    %v2098 = vadd.f32 %v1777, %v2097
    %v2099 = vpop.f32.mrf.mxu0
    %2100 = vmatprep.mubr.f32.mxu0 0.0
    %2101 = vmatmul.mubr.f32.gmra.mxu0 %v1903
    %v2102 = vpop.f32.mrf.mxu0
    %v2103 = vadd.f32 %v1782, %v2102
    %v2104 = vpop.f32.mrf.mxu0
    %2105 = vmatprep.mubr.f32.mxu0 0.0
    %2106 = vmatmul.mubr.f32.gmra.mxu0 %v1906
    %v2107 = vpop.f32.mrf.mxu0
    %v2108 = vadd.f32 %v1787, %v2107
    %v2109 = vpop.f32.mrf.mxu0
    %2110 = vmatprep.mubr.f32.mxu0 0.0
    %2111 = vmatmul.mubr.f32.gmra.mxu0 %v1909
    %v2112 = vpop.f32.mrf.mxu0
    %v2113 = vadd.f32 %v1792, %v2112
    %v2114 = vpop.f32.mrf.mxu0
    %2115 = vmatprep.mubr.f32.mxu0 0.0
    %2116 = vmatmul.mubr.f32.gmra.mxu0 %v1912
    %v2117 = vpop.f32.mrf.mxu0
    %v2118 = vadd.f32 %v1797, %v2117
    %v2119 = vpop.f32.mrf.mxu0
    %2120 = vmatprep.mubr.f32.mxu0 0.0
    %2121 = vmatmul.mubr.f32.gmra.mxu0 %v1915
    %v2122 = vpop.f32.mrf.mxu0
    %v2123 = vadd.f32 %v1802, %v2122
    %v2124 = vpop.f32.mrf.mxu0
    %2125 = vmatprep.mubr.f32.mxu0 0.0
    %2126 = vmatmul.mubr.f32.gmra.mxu0 %v1918
    %v2127 = vpop.f32.mrf.mxu0
    %v2128 = vadd.f32 %v1807, %v2127
    %v2129 = vpop.f32.mrf.mxu0
    %2130 = vmatprep.mubr.f32.mxu0 0.0
    %2131 = vmatmul.mubr.f32.gmra.mxu0 %v1921
    %v2132 = vpop.f32.mrf.mxu0
    %v2133 = vadd.f32 %v1812, %v2132
    %v2134 = vpop.f32.mrf.mxu0
    %2135 = vmatprep.mubr.f32.mxu0 0.0
    %2136 = vmatmul.mubr.f32.gmra.mxu0 %v1924
    %v2137 = vpop.f32.mrf.mxu0
    %v2138 = vadd.f32 %v1817, %v2137
    %v2139 = vpop.f32.mrf.mxu0
    %2140 = vmatprep.mubr.f32.mxu0 0.0
    %2141 = vmatmul.mubr.f32.gmra.mxu0 %v1927
    %v2142 = vpop.f32.mrf.mxu0
    %v2143 = vadd.f32 %v1822, %v2142
    %v2144 = vpop.f32.mrf.mxu0
    %2145 = vmatprep.mubr.f32.mxu0 0.0
    %2146 = vmatmul.mubr.f32.gmra.mxu0 %v1930
    %v2147 = vpop.f32.mrf.mxu0
    %v2148 = vadd.f32 %v1827, %v2147
    %v2149 = vpop.f32.mrf.mxu0
    %2150 = vmatprep.mubr.f32.mxu0 0.0
    %2151 = vmatmul.mubr.f32.gmra.mxu0 %v1933
    %v2152 = vpop.f32.mrf.mxu0
    %v2153 = vadd.f32 %v1832, %v2152
    %v2154 = vpop.f32.mrf.mxu0
    %2155 = vmatprep.mubr.f32.mxu0 0.0
    %2156 = vmatmul.mubr.f32.gmra.mxu0 %v1936
    %v2157 = vpop.f32.mrf.mxu0
    %v2158 = vadd.f32 %v1837, %v2157
    %v2159 = vpop.f32.mrf.mxu0
    %2160 = vmatprep.mubr.f32.mxu0 0.0
    %2161 = vmatmul.mubr.f32.gmra.mxu0 %v1939
    %v2162 = vpop.f32.mrf.mxu0
    %v2163 = vadd.f32 %v1842, %v2162
    %v2164 = vpop.f32.mrf.mxu0
    %2165 = vdwg.mxu0
    %s2166 = scalar_lea.vmem %s3, 128
    %v2167 = vld [vmem:[%s2166] sm:$0xff]
    %v2168 = vld [vmem:[%s2166 + $0x8] sm:$0xff]
    %v2169 = vld [vmem:[%s2166 + $0x10] sm:$0xff]
    %v2170 = vld [vmem:[%s2166 + $0x18] sm:$0xff]
    %v2171 = vld [vmem:[%s2166 + $0x20] sm:$0xff]
    %v2172 = vld [vmem:[%s2166 + $0x28] sm:$0xff]
    %v2173 = vld [vmem:[%s2166 + $0x30] sm:$0xff]
    %v2174 = vld [vmem:[%s2166 + $0x38] sm:$0xff]
    %v2176 = vsel %vm1523, %v1474, 0
    %v2179 = vsel %vm1523, %v1475, 0
    %v2182 = vsel %vm1523, %v1476, 0
    %v2185 = vsel %vm1523, %v1477, 0
    %v2188 = vsel %vm1523, %v1478, 0
    %v2191 = vsel %vm1523, %v1479, 0
    %v2194 = vsel %vm1523, %v1480, 0
    %v2197 = vsel %vm1523, %v1481, 0
    %v2200 = vsel %vm1523, %v1482, 0
    %v2203 = vsel %vm1523, %v1483, 0
    %v2206 = vsel %vm1523, %v1484, 0
    %v2209 = vsel %vm1523, %v1485, 0
    %v2212 = vsel %vm1523, %v1486, 0
    %v2215 = vsel %vm1523, %v1487, 0
    %v2218 = vsel %vm1523, %v1488, 0
    %v2221 = vsel %vm1523, %v1489, 0
    %v2224 = vsel %vm1523, %v1490, 0
    %v2227 = vsel %vm1523, %v1491, 0
    %v2230 = vsel %vm1523, %v1492, 0
    %v2233 = vsel %vm1523, %v1493, 0
    %v2236 = vsel %vm1523, %v1494, 0
    %v2239 = vsel %vm1523, %v1495, 0
    %v2242 = vsel %vm1523, %v1496, 0
    %v2245 = vsel %vm1523, %v1497, 0
    %v2248 = vsel %vm1523, %v1498, 0
    %v2251 = vsel %vm1523, %v1499, 0
    %v2254 = vsel %vm1523, %v1500, 0
    %v2257 = vsel %vm1523, %v1501, 0
    %v2260 = vsel %vm1523, %v1502, 0
    %v2263 = vsel %vm1523, %v1503, 0
    %v2266 = vsel %vm1523, %v1504, 0
    %v2269 = vsel %vm1523, %v1505, 0
    %2271 = vmatprep.subr.mxu0 0.0
    %2272 = vmatpush1.msra.mxu0 0.0
    %2273 = vmatprep.subr.mxu0 0.0
    %2274 = vmatpush1.msra.mxu0 0.0
    %2275 = vmatprep.subr.mxu0 0.0
    %2276 = vmatpush1.msra.mxu0 0.0
    %2277 = vmatprep.subr.mxu0 0.0
    %2278 = vmatpush1.msra.mxu0 0.0
    %2279 = vmatprep.subr.mxu0 0.0
    %2280 = vmatpush1.msra.mxu0 0.0
    %2281 = vmatprep.subr.mxu0 0.0
    %2282 = vmatpush1.msra.mxu0 0.0
    %2283 = vmatprep.subr.mxu0 0.0
    %2284 = vmatpush1.msra.mxu0 0.0
    %2285 = vmatprep.subr.mxu0 0.0
    %2286 = vmatpush1.msra.mxu0 0.0
    %2287 = vmatprep.subr.mxu0 0.0
    %2288 = vmatpush1.msra.mxu0 %v2174
    %2289 = vmatprep.subr.mxu0 0.0
    %2290 = vmatpush1.msra.mxu0 %v2173
    %2291 = vmatprep.subr.mxu0 0.0
    %2292 = vmatpush1.msra.mxu0 %v2172
    %2293 = vmatprep.subr.mxu0 0.0
    %2294 = vmatpush1.msra.mxu0 %v2171
    %2295 = vmatprep.subr.mxu0 0.0
    %2296 = vmatpush1.msra.mxu0 %v2170
    %2297 = vmatprep.subr.mxu0 0.0
    %2298 = vmatpush1.msra.mxu0 %v2169
    %2299 = vmatprep.subr.mxu0 0.0
    %2300 = vmatpush1.msra.mxu0 %v2168
    %2301 = vmatprep.subr.mxu0 0.0
    %2302 = vmatpush1.msra.mxu0 %v2167
    %2303 = vmatprep.subr.mxu0 0.0
    %2304 = vmatpush2.msra.mxu0 0.0
    %2305 = vmatprep.subr.mxu0 0.0
    %2306 = vmatpush2.msra.mxu0 0.0
    %2307 = vmatprep.subr.mxu0 0.0
    %2308 = vmatpush2.msra.mxu0 0.0
    %2309 = vmatprep.subr.mxu0 0.0
    %2310 = vmatpush2.msra.mxu0 0.0
    %2311 = vmatprep.subr.mxu0 0.0
    %2312 = vmatpush2.msra.mxu0 0.0
    %2313 = vmatprep.subr.mxu0 0.0
    %2314 = vmatpush2.msra.mxu0 0.0
    %2315 = vmatprep.subr.mxu0 0.0
    %2316 = vmatpush2.msra.mxu0 0.0
    %2317 = vmatprep.subr.mxu0 0.0
    %2318 = vmatpush2.msra.mxu0 0.0
    %2319 = vmatprep.subr.mxu0 0.0
    %2320 = vmatpush2.msra.mxu0 0.0
    %2321 = vmatprep.subr.mxu0 0.0
    %2322 = vmatpush2.msra.mxu0 0.0
    %2323 = vmatprep.subr.mxu0 0.0
    %2324 = vmatpush2.msra.mxu0 0.0
    %2325 = vmatprep.subr.mxu0 0.0
    %2326 = vmatpush2.msra.mxu0 0.0
    %2327 = vmatprep.subr.mxu0 0.0
    %2328 = vmatpush2.msra.mxu0 0.0
    %2329 = vmatprep.subr.mxu0 0.0
    %2330 = vmatpush2.msra.mxu0 0.0
    %2331 = vmatprep.subr.mxu0 0.0
    %2332 = vmatpush2.msra.mxu0 0.0
    %2333 = vmatprep.subr.mxu0 0.0
    %2334 = vmatpush2.msra.mxu0 0.0
    %2335 = vmatprep.mubr.f32.mxu0 0.0
    %2336 = vmatmul.mubr.f32.gmra.mxu0 %v2176
    %v2337 = vpop.f32.mrf.mxu0
    %v2338 = vadd.f32 0.0, %v2337
    %v2339 = vpop.f32.mrf.mxu0
    %2340 = vmatprep.mubr.f32.mxu0 0.0
    %2341 = vmatmul.mubr.f32.gmra.mxu0 %v2179
    %v2342 = vpop.f32.mrf.mxu0
    %v2343 = vadd.f32 0.0, %v2342
    %v2344 = vpop.f32.mrf.mxu0
    %2345 = vmatprep.mubr.f32.mxu0 0.0
    %2346 = vmatmul.mubr.f32.gmra.mxu0 %v2182
    %v2347 = vpop.f32.mrf.mxu0
    %v2348 = vadd.f32 0.0, %v2347
    %v2349 = vpop.f32.mrf.mxu0
    %2350 = vmatprep.mubr.f32.mxu0 0.0
    %2351 = vmatmul.mubr.f32.gmra.mxu0 %v2185
    %v2352 = vpop.f32.mrf.mxu0
    %v2353 = vadd.f32 0.0, %v2352
    %v2354 = vpop.f32.mrf.mxu0
    %2355 = vmatprep.mubr.f32.mxu0 0.0
    %2356 = vmatmul.mubr.f32.gmra.mxu0 %v2188
    %v2357 = vpop.f32.mrf.mxu0
    %v2358 = vadd.f32 0.0, %v2357
    %v2359 = vpop.f32.mrf.mxu0
    %2360 = vmatprep.mubr.f32.mxu0 0.0
    %2361 = vmatmul.mubr.f32.gmra.mxu0 %v2191
    %v2362 = vpop.f32.mrf.mxu0
    %v2363 = vadd.f32 0.0, %v2362
    %v2364 = vpop.f32.mrf.mxu0
    %2365 = vmatprep.mubr.f32.mxu0 0.0
    %2366 = vmatmul.mubr.f32.gmra.mxu0 %v2194
    %v2367 = vpop.f32.mrf.mxu0
    %v2368 = vadd.f32 0.0, %v2367
    %v2369 = vpop.f32.mrf.mxu0
    %2370 = vmatprep.mubr.f32.mxu0 0.0
    %2371 = vmatmul.mubr.f32.gmra.mxu0 %v2197
    %v2372 = vpop.f32.mrf.mxu0
    %v2373 = vadd.f32 0.0, %v2372
    %v2374 = vpop.f32.mrf.mxu0
    %2375 = vmatprep.mubr.f32.mxu0 0.0
    %2376 = vmatmul.mubr.f32.gmra.mxu0 %v2200
    %v2377 = vpop.f32.mrf.mxu0
    %v2378 = vadd.f32 0.0, %v2377
    %v2379 = vpop.f32.mrf.mxu0
    %2380 = vmatprep.mubr.f32.mxu0 0.0
    %2381 = vmatmul.mubr.f32.gmra.mxu0 %v2203
    %v2382 = vpop.f32.mrf.mxu0
    %v2383 = vadd.f32 0.0, %v2382
    %v2384 = vpop.f32.mrf.mxu0
    %2385 = vmatprep.mubr.f32.mxu0 0.0
    %2386 = vmatmul.mubr.f32.gmra.mxu0 %v2206
    %v2387 = vpop.f32.mrf.mxu0
    %v2388 = vadd.f32 0.0, %v2387
    %v2389 = vpop.f32.mrf.mxu0
    %2390 = vmatprep.mubr.f32.mxu0 0.0
    %2391 = vmatmul.mubr.f32.gmra.mxu0 %v2209
    %v2392 = vpop.f32.mrf.mxu0
    %v2393 = vadd.f32 0.0, %v2392
    %v2394 = vpop.f32.mrf.mxu0
    %2395 = vmatprep.mubr.f32.mxu0 0.0
    %2396 = vmatmul.mubr.f32.gmra.mxu0 %v2212
    %v2397 = vpop.f32.mrf.mxu0
    %v2398 = vadd.f32 0.0, %v2397
    %v2399 = vpop.f32.mrf.mxu0
    %2400 = vmatprep.mubr.f32.mxu0 0.0
    %2401 = vmatmul.mubr.f32.gmra.mxu0 %v2215
    %v2402 = vpop.f32.mrf.mxu0
    %v2403 = vadd.f32 0.0, %v2402
    %v2404 = vpop.f32.mrf.mxu0
    %2405 = vmatprep.mubr.f32.mxu0 0.0
    %2406 = vmatmul.mubr.f32.gmra.mxu0 %v2218
    %v2407 = vpop.f32.mrf.mxu0
    %v2408 = vadd.f32 0.0, %v2407
    %v2409 = vpop.f32.mrf.mxu0
    %2410 = vmatprep.mubr.f32.mxu0 0.0
    %2411 = vmatmul.mubr.f32.gmra.mxu0 %v2221
    %v2412 = vpop.f32.mrf.mxu0
    %v2413 = vadd.f32 0.0, %v2412
    %v2414 = vpop.f32.mrf.mxu0
    %2415 = vmatprep.mubr.f32.mxu0 0.0
    %2416 = vmatmul.mubr.f32.gmra.mxu0 %v2224
    %v2417 = vpop.f32.mrf.mxu0
    %v2418 = vadd.f32 0.0, %v2417
    %v2419 = vpop.f32.mrf.mxu0
    %2420 = vmatprep.mubr.f32.mxu0 0.0
    %2421 = vmatmul.mubr.f32.gmra.mxu0 %v2227
    %v2422 = vpop.f32.mrf.mxu0
    %v2423 = vadd.f32 0.0, %v2422
    %v2424 = vpop.f32.mrf.mxu0
    %2425 = vmatprep.mubr.f32.mxu0 0.0
    %2426 = vmatmul.mubr.f32.gmra.mxu0 %v2230
    %v2427 = vpop.f32.mrf.mxu0
    %v2428 = vadd.f32 0.0, %v2427
    %v2429 = vpop.f32.mrf.mxu0
    %2430 = vmatprep.mubr.f32.mxu0 0.0
    %2431 = vmatmul.mubr.f32.gmra.mxu0 %v2233
    %v2432 = vpop.f32.mrf.mxu0
    %v2433 = vadd.f32 0.0, %v2432
    %v2434 = vpop.f32.mrf.mxu0
    %2435 = vmatprep.mubr.f32.mxu0 0.0
    %2436 = vmatmul.mubr.f32.gmra.mxu0 %v2236
    %v2437 = vpop.f32.mrf.mxu0
    %v2438 = vadd.f32 0.0, %v2437
    %v2439 = vpop.f32.mrf.mxu0
    %2440 = vmatprep.mubr.f32.mxu0 0.0
    %2441 = vmatmul.mubr.f32.gmra.mxu0 %v2239
    %v2442 = vpop.f32.mrf.mxu0
    %v2443 = vadd.f32 0.0, %v2442
    %v2444 = vpop.f32.mrf.mxu0
    %2445 = vmatprep.mubr.f32.mxu0 0.0
    %2446 = vmatmul.mubr.f32.gmra.mxu0 %v2242
    %v2447 = vpop.f32.mrf.mxu0
    %v2448 = vadd.f32 0.0, %v2447
    %v2449 = vpop.f32.mrf.mxu0
    %2450 = vmatprep.mubr.f32.mxu0 0.0
    %2451 = vmatmul.mubr.f32.gmra.mxu0 %v2245
    %v2452 = vpop.f32.mrf.mxu0
    %v2453 = vadd.f32 0.0, %v2452
    %v2454 = vpop.f32.mrf.mxu0
    %2455 = vmatprep.mubr.f32.mxu0 0.0
    %2456 = vmatmul.mubr.f32.gmra.mxu0 %v2248
    %v2457 = vpop.f32.mrf.mxu0
    %v2458 = vadd.f32 0.0, %v2457
    %v2459 = vpop.f32.mrf.mxu0
    %2460 = vmatprep.mubr.f32.mxu0 0.0
    %2461 = vmatmul.mubr.f32.gmra.mxu0 %v2251
    %v2462 = vpop.f32.mrf.mxu0
    %v2463 = vadd.f32 0.0, %v2462
    %v2464 = vpop.f32.mrf.mxu0
    %2465 = vmatprep.mubr.f32.mxu0 0.0
    %2466 = vmatmul.mubr.f32.gmra.mxu0 %v2254
    %v2467 = vpop.f32.mrf.mxu0
    %v2468 = vadd.f32 0.0, %v2467
    %v2469 = vpop.f32.mrf.mxu0
    %2470 = vmatprep.mubr.f32.mxu0 0.0
    %2471 = vmatmul.mubr.f32.gmra.mxu0 %v2257
    %v2472 = vpop.f32.mrf.mxu0
    %v2473 = vadd.f32 0.0, %v2472
    %v2474 = vpop.f32.mrf.mxu0
    %2475 = vmatprep.mubr.f32.mxu0 0.0
    %2476 = vmatmul.mubr.f32.gmra.mxu0 %v2260
    %v2477 = vpop.f32.mrf.mxu0
    %v2478 = vadd.f32 0.0, %v2477
    %v2479 = vpop.f32.mrf.mxu0
    %2480 = vmatprep.mubr.f32.mxu0 0.0
    %2481 = vmatmul.mubr.f32.gmra.mxu0 %v2263
    %v2482 = vpop.f32.mrf.mxu0
    %v2483 = vadd.f32 0.0, %v2482
    %v2484 = vpop.f32.mrf.mxu0
    %2485 = vmatprep.mubr.f32.mxu0 0.0
    %2486 = vmatmul.mubr.f32.gmra.mxu0 %v2266
    %v2487 = vpop.f32.mrf.mxu0
    %v2488 = vadd.f32 0.0, %v2487
    %v2489 = vpop.f32.mrf.mxu0
    %2490 = vmatprep.mubr.f32.mxu0 0.0
    %2491 = vmatmul.mubr.f32.gmra.mxu0 %v2269
    %v2492 = vpop.f32.mrf.mxu0
    %v2493 = vadd.f32 0.0, %v2492
    %v2494 = vpop.f32.mrf.mxu0
    %2495 = vdwg.mxu0
    %v2496 = vadd.f32 %v2008, %v2338
    %v2497 = vadd.f32 %v2013, %v2343
    %v2498 = vadd.f32 %v2018, %v2348
    %v2499 = vadd.f32 %v2023, %v2353
    %v2500 = vadd.f32 %v2028, %v2358
    %v2501 = vadd.f32 %v2033, %v2363
    %v2502 = vadd.f32 %v2038, %v2368
    %v2503 = vadd.f32 %v2043, %v2373
    %v2504 = vadd.f32 %v2048, %v2378
    %v2505 = vadd.f32 %v2053, %v2383
    %v2506 = vadd.f32 %v2058, %v2388
    %v2507 = vadd.f32 %v2063, %v2393
    %v2508 = vadd.f32 %v2068, %v2398
    %v2509 = vadd.f32 %v2073, %v2403
    %v2510 = vadd.f32 %v2078, %v2408
    %v2511 = vadd.f32 %v2083, %v2413
    %v2512 = vadd.f32 %v2088, %v2418
    %v2513 = vadd.f32 %v2093, %v2423
    %v2514 = vadd.f32 %v2098, %v2428
    %v2515 = vadd.f32 %v2103, %v2433
    %v2516 = vadd.f32 %v2108, %v2438
    %v2517 = vadd.f32 %v2113, %v2443
    %v2518 = vadd.f32 %v2118, %v2448
    %v2519 = vadd.f32 %v2123, %v2453
    %v2520 = vadd.f32 %v2128, %v2458
    %v2521 = vadd.f32 %v2133, %v2463
    %v2522 = vadd.f32 %v2138, %v2468
    %v2523 = vadd.f32 %v2143, %v2473
    %v2524 = vadd.f32 %v2148, %v2478
    %v2525 = vadd.f32 %v2153, %v2483
    %v2526 = vadd.f32 %v2158, %v2488
    %v2527 = vadd.f32 %v2163, %v2493
    %v2528 = vld [vmem:[%s4] sm:$0x1]
    %v2530 = vlaneseq
    %v2531 = vshrl.u32 %v2530, 7
    %v2532 = vsub.s32 0, %v2531
    %v2533 = vrot.slane %v2528, %v2532
    %v2535 = vadd.f32 %v2496, %v2533
    %v2536 = vadd.f32 %v2497, %v2533
    %v2537 = vadd.f32 %v2498, %v2533
    %v2538 = vadd.f32 %v2499, %v2533
    %v2539 = vadd.f32 %v2500, %v2533
    %v2540 = vadd.f32 %v2501, %v2533
    %v2541 = vadd.f32 %v2502, %v2533
    %v2542 = vadd.f32 %v2503, %v2533
    %v2543 = vadd.f32 %v2504, %v2533
    %v2544 = vadd.f32 %v2505, %v2533
    %v2545 = vadd.f32 %v2506, %v2533
    %v2546 = vadd.f32 %v2507, %v2533
    %v2547 = vadd.f32 %v2508, %v2533
    %v2548 = vadd.f32 %v2509, %v2533
    %v2549 = vadd.f32 %v2510, %v2533
    %v2550 = vadd.f32 %v2511, %v2533
    %v2551 = vadd.f32 %v2512, %v2533
    %v2552 = vadd.f32 %v2513, %v2533
    %v2553 = vadd.f32 %v2514, %v2533
    %v2554 = vadd.f32 %v2515, %v2533
    %v2555 = vadd.f32 %v2516, %v2533
    %v2556 = vadd.f32 %v2517, %v2533
    %v2557 = vadd.f32 %v2518, %v2533
    %v2558 = vadd.f32 %v2519, %v2533
    %v2559 = vadd.f32 %v2520, %v2533
    %v2560 = vadd.f32 %v2521, %v2533
    %v2561 = vadd.f32 %v2522, %v2533
    %v2562 = vadd.f32 %v2523, %v2533
    %v2563 = vadd.f32 %v2524, %v2533
    %v2564 = vadd.f32 %v2525, %v2533
    %v2565 = vadd.f32 %v2526, %v2533
    %v2566 = vadd.f32 %v2527, %v2533
    %v2567 = vmax.f32 %v2535, 0.0
    %v2568 = vmax.f32 %v2536, 0.0
    %v2569 = vmax.f32 %v2537, 0.0
    %v2570 = vmax.f32 %v2538, 0.0
    %v2571 = vmax.f32 %v2539, 0.0
    %v2572 = vmax.f32 %v2540, 0.0
    %v2573 = vmax.f32 %v2541, 0.0
    %v2574 = vmax.f32 %v2542, 0.0
    %v2575 = vmax.f32 %v2543, 0.0
    %v2576 = vmax.f32 %v2544, 0.0
    %v2577 = vmax.f32 %v2545, 0.0
    %v2578 = vmax.f32 %v2546, 0.0
    %v2579 = vmax.f32 %v2547, 0.0
    %v2580 = vmax.f32 %v2548, 0.0
    %v2581 = vmax.f32 %v2549, 0.0
    %v2582 = vmax.f32 %v2550, 0.0
    %v2583 = vmax.f32 %v2551, 0.0
    %v2584 = vmax.f32 %v2552, 0.0
    %v2585 = vmax.f32 %v2553, 0.0
    %v2586 = vmax.f32 %v2554, 0.0
    %v2587 = vmax.f32 %v2555, 0.0
    %v2588 = vmax.f32 %v2556, 0.0
    %v2589 = vmax.f32 %v2557, 0.0
    %v2590 = vmax.f32 %v2558, 0.0
    %v2591 = vmax.f32 %v2559, 0.0
    %v2592 = vmax.f32 %v2560, 0.0
    %v2593 = vmax.f32 %v2561, 0.0
    %v2594 = vmax.f32 %v2562, 0.0
    %v2595 = vmax.f32 %v2563, 0.0
    %v2596 = vmax.f32 %v2564, 0.0
    %v2597 = vmax.f32 %v2565, 0.0
    %v2598 = vmax.f32 %v2566, 0.0
    %v2599 = vsel %vm194, %v2598, 0.0
    %v2600 = vsel %vm195, %v2567, 0.0
    %v2601 = vsel %vm196, %v2568, 0.0
    %v2602 = vsel %vm197, %v2569, 0.0
    %v2603 = vsel %vm198, %v2570, 0.0
    %v2604 = vsel %vm199, %v2571, 0.0
    %v2605 = vsel %vm200, %v2572, 0.0
    %v2606 = vsel %vm201, %v2573, 0.0
    %v2607 = vsel %vm202, %v2574, 0.0
    %v2608 = vsel %vm203, %v2575, 0.0
    %v2609 = vsel %vm204, %v2576, 0.0
    %v2610 = vsel %vm205, %v2577, 0.0
    %v2611 = vsel %vm206, %v2578, 0.0
    %v2612 = vsel %vm207, %v2579, 0.0
    %v2613 = vsel %vm208, %v2580, 0.0
    %v2614 = vsel %vm209, %v2581, 0.0
    %v2615 = vsel %vm210, %v2582, 0.0
    %v2616 = vsel %vm211, %v2583, 0.0
    %v2617 = vsel %vm212, %v2584, 0.0
    %v2618 = vsel %vm213, %v2585, 0.0
    %v2619 = vsel %vm214, %v2586, 0.0
    %v2620 = vsel %vm215, %v2587, 0.0
    %v2621 = vsel %vm216, %v2588, 0.0
    %v2622 = vsel %vm217, %v2589, 0.0
    %v2623 = vsel %vm218, %v2590, 0.0
    %v2624 = vsel %vm219, %v2591, 0.0
    %v2625 = vsel %vm220, %v2592, 0.0
    %v2626 = vsel %vm221, %v2593, 0.0
    %v2627 = vsel %vm222, %v2594, 0.0
    %v2628 = vsel %vm223, %v2595, 0.0
    %v2629 = vsel %vm224, %v2596, 0.0
    %v2630 = vsel %vm225, %v2597, 0.0
    %v2631 = vsel %vm290, %v2568, 0.0
    %v2632 = vsel %vm291, %v2569, 0.0
    %v2633 = vsel %vm292, %v2570, 0.0
    %v2634 = vsel %vm293, %v2571, 0.0
    %v2635 = vsel %vm294, %v2572, 0.0
    %v2636 = vsel %vm295, %v2573, 0.0
    %v2637 = vsel %vm296, %v2574, 0.0
    %v2638 = vsel %vm297, %v2575, 0.0
    %v2639 = vsel %vm298, %v2576, 0.0
    %v2640 = vsel %vm299, %v2577, 0.0
    %v2641 = vsel %vm300, %v2578, 0.0
    %v2642 = vsel %vm301, %v2579, 0.0
    %v2643 = vsel %vm302, %v2580, 0.0
    %v2644 = vsel %vm303, %v2581, 0.0
    %v2645 = vsel %vm304, %v2582, 0.0
    %v2646 = vsel %vm305, %v2583, 0.0
    %v2647 = vsel %vm306, %v2584, 0.0
    %v2648 = vsel %vm307, %v2585, 0.0
    %v2649 = vsel %vm308, %v2586, 0.0
    %v2650 = vsel %vm309, %v2587, 0.0
    %v2651 = vsel %vm310, %v2588, 0.0
    %v2652 = vsel %vm311, %v2589, 0.0
    %v2653 = vsel %vm312, %v2590, 0.0
    %v2654 = vsel %vm313, %v2591, 0.0
    %v2655 = vsel %vm314, %v2592, 0.0
    %v2656 = vsel %vm315, %v2593, 0.0
    %v2657 = vsel %vm316, %v2594, 0.0
    %v2658 = vsel %vm317, %v2595, 0.0
    %v2659 = vsel %vm318, %v2596, 0.0
    %v2660 = vsel %vm319, %v2597, 0.0
    %v2661 = vsel %vm320, %v2598, 0.0
    %v2662 = vsel %vm321, %v2567, 0.0
    %v2663 = vld [vmem:[%s5] sm:$0xff]
    %v2664 = vld [vmem:[%s5 + $0x8] sm:$0xff]
    %v2665 = vld [vmem:[%s5 + $0x10] sm:$0xff]
    %v2666 = vld [vmem:[%s5 + $0x18] sm:$0xff]
    %v2667 = vld [vmem:[%s5 + $0x20] sm:$0xff]
    %v2668 = vld [vmem:[%s5 + $0x28] sm:$0xff]
    %v2669 = vld [vmem:[%s5 + $0x30] sm:$0xff]
    %v2670 = vld [vmem:[%s5 + $0x38] sm:$0xff]
    %v2671 = vld [vmem:[%s5 + $0x40] sm:$0xff]
    %v2672 = vld [vmem:[%s5 + $0x48] sm:$0xff]
    %v2673 = vld [vmem:[%s5 + $0x50] sm:$0xff]
    %v2674 = vld [vmem:[%s5 + $0x58] sm:$0xff]
    %v2675 = vld [vmem:[%s5 + $0x60] sm:$0xff]
    %v2676 = vld [vmem:[%s5 + $0x68] sm:$0xff]
    %v2677 = vld [vmem:[%s5 + $0x70] sm:$0xff]
    %v2678 = vld [vmem:[%s5 + $0x78] sm:$0xff]
    %s2679 = scalar_lea.vmem %s5, 128
    %v2680 = vld [vmem:[%s2679] sm:$0xff]
    %v2681 = vld [vmem:[%s2679 + $0x8] sm:$0xff]
    %v2682 = vld [vmem:[%s2679 + $0x10] sm:$0xff]
    %v2683 = vld [vmem:[%s2679 + $0x18] sm:$0xff]
    %v2684 = vld [vmem:[%s2679 + $0x20] sm:$0xff]
    %v2685 = vld [vmem:[%s2679 + $0x28] sm:$0xff]
    %v2686 = vld [vmem:[%s2679 + $0x30] sm:$0xff]
    %v2687 = vld [vmem:[%s2679 + $0x38] sm:$0xff]
    %v2688 = vld [vmem:[%s2679 + $0x40] sm:$0xff]
    %v2689 = vld [vmem:[%s2679 + $0x48] sm:$0xff]
    %v2690 = vld [vmem:[%s2679 + $0x50] sm:$0xff]
    %v2691 = vld [vmem:[%s2679 + $0x58] sm:$0xff]
    %v2692 = vld [vmem:[%s2679 + $0x60] sm:$0xff]
    %v2693 = vld [vmem:[%s2679 + $0x68] sm:$0xff]
    %v2694 = vld [vmem:[%s2679 + $0x70] sm:$0xff]
    %v2695 = vld [vmem:[%s2679 + $0x78] sm:$0xff]
    %2696 = vmatprep.subr.mxu0 0.0
    %2697 = vmatpush1.msra.mxu0 %v2695
    %2698 = vmatprep.subr.mxu0 0.0
    %2699 = vmatpush1.msra.mxu0 %v2694
    %2700 = vmatprep.subr.mxu0 0.0
    %2701 = vmatpush1.msra.mxu0 %v2693
    %2702 = vmatprep.subr.mxu0 0.0
    %2703 = vmatpush1.msra.mxu0 %v2692
    %2704 = vmatprep.subr.mxu0 0.0
    %2705 = vmatpush1.msra.mxu0 %v2691
    %2706 = vmatprep.subr.mxu0 0.0
    %2707 = vmatpush1.msra.mxu0 %v2690
    %2708 = vmatprep.subr.mxu0 0.0
    %2709 = vmatpush1.msra.mxu0 %v2689
    %2710 = vmatprep.subr.mxu0 0.0
    %2711 = vmatpush1.msra.mxu0 %v2688
    %2712 = vmatprep.subr.mxu0 0.0
    %2713 = vmatpush1.msra.mxu0 %v2687
    %2714 = vmatprep.subr.mxu0 0.0
    %2715 = vmatpush1.msra.mxu0 %v2686
    %2716 = vmatprep.subr.mxu0 0.0
    %2717 = vmatpush1.msra.mxu0 %v2685
    %2718 = vmatprep.subr.mxu0 0.0
    %2719 = vmatpush1.msra.mxu0 %v2684
    %2720 = vmatprep.subr.mxu0 0.0
    %2721 = vmatpush1.msra.mxu0 %v2683
    %2722 = vmatprep.subr.mxu0 0.0
    %2723 = vmatpush1.msra.mxu0 %v2682
    %2724 = vmatprep.subr.mxu0 0.0
    %2725 = vmatpush1.msra.mxu0 %v2681
    %2726 = vmatprep.subr.mxu0 0.0
    %2727 = vmatpush1.msra.mxu0 %v2680
    %2728 = vmatprep.subr.mxu0 0.0
    %2729 = vmatpush2.msra.mxu0 0.0
    %2730 = vmatprep.subr.mxu0 0.0
    %2731 = vmatpush2.msra.mxu0 0.0
    %2732 = vmatprep.subr.mxu0 0.0
    %2733 = vmatpush2.msra.mxu0 0.0
    %2734 = vmatprep.subr.mxu0 0.0
    %2735 = vmatpush2.msra.mxu0 0.0
    %2736 = vmatprep.subr.mxu0 0.0
    %2737 = vmatpush2.msra.mxu0 0.0
    %2738 = vmatprep.subr.mxu0 0.0
    %2739 = vmatpush2.msra.mxu0 0.0
    %2740 = vmatprep.subr.mxu0 0.0
    %2741 = vmatpush2.msra.mxu0 0.0
    %2742 = vmatprep.subr.mxu0 0.0
    %2743 = vmatpush2.msra.mxu0 0.0
    %2744 = vmatprep.subr.mxu0 0.0
    %2745 = vmatpush2.msra.mxu0 0.0
    %2746 = vmatprep.subr.mxu0 0.0
    %2747 = vmatpush2.msra.mxu0 0.0
    %2748 = vmatprep.subr.mxu0 0.0
    %2749 = vmatpush2.msra.mxu0 0.0
    %2750 = vmatprep.subr.mxu0 0.0
    %2751 = vmatpush2.msra.mxu0 0.0
    %2752 = vmatprep.subr.mxu0 0.0
    %2753 = vmatpush2.msra.mxu0 0.0
    %2754 = vmatprep.subr.mxu0 0.0
    %2755 = vmatpush2.msra.mxu0 0.0
    %2756 = vmatprep.subr.mxu0 0.0
    %2757 = vmatpush2.msra.mxu0 0.0
    %2758 = vmatprep.subr.mxu0 0.0
    %2759 = vmatpush2.msra.mxu0 0.0
    %2760 = vmatprep.mubr.f32.mxu0 0.0
    %2761 = vmatmul.mubr.f32.gmra.mxu0 %v2567
    %v2762 = vpop.f32.mrf.mxu0
    %v2763 = vadd.f32 0.0, %v2762
    %v2764 = vpop.f32.mrf.mxu0
    %2765 = vmatprep.mubr.f32.mxu0 0.0
    %2766 = vmatmul.mubr.f32.gmra.mxu0 %v2568
    %v2767 = vpop.f32.mrf.mxu0
    %v2768 = vadd.f32 0.0, %v2767
    %v2769 = vpop.f32.mrf.mxu0
    %2770 = vmatprep.mubr.f32.mxu0 0.0
    %2771 = vmatmul.mubr.f32.gmra.mxu0 %v2569
    %v2772 = vpop.f32.mrf.mxu0
    %v2773 = vadd.f32 0.0, %v2772
    %v2774 = vpop.f32.mrf.mxu0
    %2775 = vmatprep.mubr.f32.mxu0 0.0
    %2776 = vmatmul.mubr.f32.gmra.mxu0 %v2570
    %v2777 = vpop.f32.mrf.mxu0
    %v2778 = vadd.f32 0.0, %v2777
    %v2779 = vpop.f32.mrf.mxu0
    %2780 = vmatprep.mubr.f32.mxu0 0.0
    %2781 = vmatmul.mubr.f32.gmra.mxu0 %v2571
    %v2782 = vpop.f32.mrf.mxu0
    %v2783 = vadd.f32 0.0, %v2782
    %v2784 = vpop.f32.mrf.mxu0
    %2785 = vmatprep.mubr.f32.mxu0 0.0
    %2786 = vmatmul.mubr.f32.gmra.mxu0 %v2572
    %v2787 = vpop.f32.mrf.mxu0
    %v2788 = vadd.f32 0.0, %v2787
    %v2789 = vpop.f32.mrf.mxu0
    %2790 = vmatprep.mubr.f32.mxu0 0.0
    %2791 = vmatmul.mubr.f32.gmra.mxu0 %v2573
    %v2792 = vpop.f32.mrf.mxu0
    %v2793 = vadd.f32 0.0, %v2792
    %v2794 = vpop.f32.mrf.mxu0
    %2795 = vmatprep.mubr.f32.mxu0 0.0
    %2796 = vmatmul.mubr.f32.gmra.mxu0 %v2574
    %v2797 = vpop.f32.mrf.mxu0
    %v2798 = vadd.f32 0.0, %v2797
    %v2799 = vpop.f32.mrf.mxu0
    %2800 = vmatprep.mubr.f32.mxu0 0.0
    %2801 = vmatmul.mubr.f32.gmra.mxu0 %v2575
    %v2802 = vpop.f32.mrf.mxu0
    %v2803 = vadd.f32 0.0, %v2802
    %v2804 = vpop.f32.mrf.mxu0
    %2805 = vmatprep.mubr.f32.mxu0 0.0
    %2806 = vmatmul.mubr.f32.gmra.mxu0 %v2576
    %v2807 = vpop.f32.mrf.mxu0
    %v2808 = vadd.f32 0.0, %v2807
    %v2809 = vpop.f32.mrf.mxu0
    %2810 = vmatprep.mubr.f32.mxu0 0.0
    %2811 = vmatmul.mubr.f32.gmra.mxu0 %v2577
    %v2812 = vpop.f32.mrf.mxu0
    %v2813 = vadd.f32 0.0, %v2812
    %v2814 = vpop.f32.mrf.mxu0
    %2815 = vmatprep.mubr.f32.mxu0 0.0
    %2816 = vmatmul.mubr.f32.gmra.mxu0 %v2578
    %v2817 = vpop.f32.mrf.mxu0
    %v2818 = vadd.f32 0.0, %v2817
    %v2819 = vpop.f32.mrf.mxu0
    %2820 = vmatprep.mubr.f32.mxu0 0.0
    %2821 = vmatmul.mubr.f32.gmra.mxu0 %v2579
    %v2822 = vpop.f32.mrf.mxu0
    %v2823 = vadd.f32 0.0, %v2822
    %v2824 = vpop.f32.mrf.mxu0
    %2825 = vmatprep.mubr.f32.mxu0 0.0
    %2826 = vmatmul.mubr.f32.gmra.mxu0 %v2580
    %v2827 = vpop.f32.mrf.mxu0
    %v2828 = vadd.f32 0.0, %v2827
    %v2829 = vpop.f32.mrf.mxu0
    %2830 = vmatprep.mubr.f32.mxu0 0.0
    %2831 = vmatmul.mubr.f32.gmra.mxu0 %v2581
    %v2832 = vpop.f32.mrf.mxu0
    %v2833 = vadd.f32 0.0, %v2832
    %v2834 = vpop.f32.mrf.mxu0
    %2835 = vmatprep.mubr.f32.mxu0 0.0
    %2836 = vmatmul.mubr.f32.gmra.mxu0 %v2582
    %v2837 = vpop.f32.mrf.mxu0
    %v2838 = vadd.f32 0.0, %v2837
    %v2839 = vpop.f32.mrf.mxu0
    %2840 = vmatprep.mubr.f32.mxu0 0.0
    %2841 = vmatmul.mubr.f32.gmra.mxu0 %v2583
    %v2842 = vpop.f32.mrf.mxu0
    %v2843 = vadd.f32 0.0, %v2842
    %v2844 = vpop.f32.mrf.mxu0
    %2845 = vmatprep.mubr.f32.mxu0 0.0
    %2846 = vmatmul.mubr.f32.gmra.mxu0 %v2584
    %v2847 = vpop.f32.mrf.mxu0
    %v2848 = vadd.f32 0.0, %v2847
    %v2849 = vpop.f32.mrf.mxu0
    %2850 = vmatprep.mubr.f32.mxu0 0.0
    %2851 = vmatmul.mubr.f32.gmra.mxu0 %v2585
    %v2852 = vpop.f32.mrf.mxu0
    %v2853 = vadd.f32 0.0, %v2852
    %v2854 = vpop.f32.mrf.mxu0
    %2855 = vmatprep.mubr.f32.mxu0 0.0
    %2856 = vmatmul.mubr.f32.gmra.mxu0 %v2586
    %v2857 = vpop.f32.mrf.mxu0
    %v2858 = vadd.f32 0.0, %v2857
    %v2859 = vpop.f32.mrf.mxu0
    %2860 = vmatprep.mubr.f32.mxu0 0.0
    %2861 = vmatmul.mubr.f32.gmra.mxu0 %v2587
    %v2862 = vpop.f32.mrf.mxu0
    %v2863 = vadd.f32 0.0, %v2862
    %v2864 = vpop.f32.mrf.mxu0
    %2865 = vmatprep.mubr.f32.mxu0 0.0
    %2866 = vmatmul.mubr.f32.gmra.mxu0 %v2588
    %v2867 = vpop.f32.mrf.mxu0
    %v2868 = vadd.f32 0.0, %v2867
    %v2869 = vpop.f32.mrf.mxu0
    %2870 = vmatprep.mubr.f32.mxu0 0.0
    %2871 = vmatmul.mubr.f32.gmra.mxu0 %v2589
    %v2872 = vpop.f32.mrf.mxu0
    %v2873 = vadd.f32 0.0, %v2872
    %v2874 = vpop.f32.mrf.mxu0
    %2875 = vmatprep.mubr.f32.mxu0 0.0
    %2876 = vmatmul.mubr.f32.gmra.mxu0 %v2590
    %v2877 = vpop.f32.mrf.mxu0
    %v2878 = vadd.f32 0.0, %v2877
    %v2879 = vpop.f32.mrf.mxu0
    %2880 = vmatprep.mubr.f32.mxu0 0.0
    %2881 = vmatmul.mubr.f32.gmra.mxu0 %v2591
    %v2882 = vpop.f32.mrf.mxu0
    %v2883 = vadd.f32 0.0, %v2882
    %v2884 = vpop.f32.mrf.mxu0
    %2885 = vmatprep.mubr.f32.mxu0 0.0
    %2886 = vmatmul.mubr.f32.gmra.mxu0 %v2592
    %v2887 = vpop.f32.mrf.mxu0
    %v2888 = vadd.f32 0.0, %v2887
    %v2889 = vpop.f32.mrf.mxu0
    %2890 = vmatprep.mubr.f32.mxu0 0.0
    %2891 = vmatmul.mubr.f32.gmra.mxu0 %v2593
    %v2892 = vpop.f32.mrf.mxu0
    %v2893 = vadd.f32 0.0, %v2892
    %v2894 = vpop.f32.mrf.mxu0
    %2895 = vmatprep.mubr.f32.mxu0 0.0
    %2896 = vmatmul.mubr.f32.gmra.mxu0 %v2594
    %v2897 = vpop.f32.mrf.mxu0
    %v2898 = vadd.f32 0.0, %v2897
    %v2899 = vpop.f32.mrf.mxu0
    %2900 = vmatprep.mubr.f32.mxu0 0.0
    %2901 = vmatmul.mubr.f32.gmra.mxu0 %v2595
    %v2902 = vpop.f32.mrf.mxu0
    %v2903 = vadd.f32 0.0, %v2902
    %v2904 = vpop.f32.mrf.mxu0
    %2905 = vmatprep.mubr.f32.mxu0 0.0
    %2906 = vmatmul.mubr.f32.gmra.mxu0 %v2596
    %v2907 = vpop.f32.mrf.mxu0
    %v2908 = vadd.f32 0.0, %v2907
    %v2909 = vpop.f32.mrf.mxu0
    %2910 = vmatprep.mubr.f32.mxu0 0.0
    %2911 = vmatmul.mubr.f32.gmra.mxu0 %v2597
    %v2912 = vpop.f32.mrf.mxu0
    %v2913 = vadd.f32 0.0, %v2912
    %v2914 = vpop.f32.mrf.mxu0
    %2915 = vmatprep.mubr.f32.mxu0 0.0
    %2916 = vmatmul.mubr.f32.gmra.mxu0 %v2598
    %v2917 = vpop.f32.mrf.mxu0
    %v2918 = vadd.f32 0.0, %v2917
    %v2919 = vpop.f32.mrf.mxu0
    %2920 = vdwg.mxu0
    %2921 = vmatprep.subr.mxu0 0.0
    %2922 = vmatpush1.msra.mxu0 %v2678
    %2923 = vmatprep.subr.mxu0 0.0
    %2924 = vmatpush1.msra.mxu0 %v2677
    %2925 = vmatprep.subr.mxu0 0.0
    %2926 = vmatpush1.msra.mxu0 %v2676
    %2927 = vmatprep.subr.mxu0 0.0
    %2928 = vmatpush1.msra.mxu0 %v2675
    %2929 = vmatprep.subr.mxu0 0.0
    %2930 = vmatpush1.msra.mxu0 %v2674
    %2931 = vmatprep.subr.mxu0 0.0
    %2932 = vmatpush1.msra.mxu0 %v2673
    %2933 = vmatprep.subr.mxu0 0.0
    %2934 = vmatpush1.msra.mxu0 %v2672
    %2935 = vmatprep.subr.mxu0 0.0
    %2936 = vmatpush1.msra.mxu0 %v2671
    %2937 = vmatprep.subr.mxu0 0.0
    %2938 = vmatpush1.msra.mxu0 %v2670
    %2939 = vmatprep.subr.mxu0 0.0
    %2940 = vmatpush1.msra.mxu0 %v2669
    %2941 = vmatprep.subr.mxu0 0.0
    %2942 = vmatpush1.msra.mxu0 %v2668
    %2943 = vmatprep.subr.mxu0 0.0
    %2944 = vmatpush1.msra.mxu0 %v2667
    %2945 = vmatprep.subr.mxu0 0.0
    %2946 = vmatpush1.msra.mxu0 %v2666
    %2947 = vmatprep.subr.mxu0 0.0
    %2948 = vmatpush1.msra.mxu0 %v2665
    %2949 = vmatprep.subr.mxu0 0.0
    %2950 = vmatpush1.msra.mxu0 %v2664
    %2951 = vmatprep.subr.mxu0 0.0
    %2952 = vmatpush1.msra.mxu0 %v2663
    %2953 = vmatprep.subr.mxu0 0.0
    %2954 = vmatpush2.msra.mxu0 0.0
    %2955 = vmatprep.subr.mxu0 0.0
    %2956 = vmatpush2.msra.mxu0 0.0
    %2957 = vmatprep.subr.mxu0 0.0
    %2958 = vmatpush2.msra.mxu0 0.0
    %2959 = vmatprep.subr.mxu0 0.0
    %2960 = vmatpush2.msra.mxu0 0.0
    %2961 = vmatprep.subr.mxu0 0.0
    %2962 = vmatpush2.msra.mxu0 0.0
    %2963 = vmatprep.subr.mxu0 0.0
    %2964 = vmatpush2.msra.mxu0 0.0
    %2965 = vmatprep.subr.mxu0 0.0
    %2966 = vmatpush2.msra.mxu0 0.0
    %2967 = vmatprep.subr.mxu0 0.0
    %2968 = vmatpush2.msra.mxu0 0.0
    %2969 = vmatprep.subr.mxu0 0.0
    %2970 = vmatpush2.msra.mxu0 0.0
    %2971 = vmatprep.subr.mxu0 0.0
    %2972 = vmatpush2.msra.mxu0 0.0
    %2973 = vmatprep.subr.mxu0 0.0
    %2974 = vmatpush2.msra.mxu0 0.0
    %2975 = vmatprep.subr.mxu0 0.0
    %2976 = vmatpush2.msra.mxu0 0.0
    %2977 = vmatprep.subr.mxu0 0.0
    %2978 = vmatpush2.msra.mxu0 0.0
    %2979 = vmatprep.subr.mxu0 0.0
    %2980 = vmatpush2.msra.mxu0 0.0
    %2981 = vmatprep.subr.mxu0 0.0
    %2982 = vmatpush2.msra.mxu0 0.0
    %2983 = vmatprep.subr.mxu0 0.0
    %2984 = vmatpush2.msra.mxu0 0.0
    %2985 = vmatprep.mubr.f32.mxu0 0.0
    %2986 = vmatmul.mubr.f32.gmra.mxu0 %v2599
    %v2987 = vpop.f32.mrf.mxu0
    %v2988 = vadd.f32 %v2763, %v2987
    %v2989 = vpop.f32.mrf.mxu0
    %2990 = vmatprep.mubr.f32.mxu0 0.0
    %2991 = vmatmul.mubr.f32.gmra.mxu0 %v2600
    %v2992 = vpop.f32.mrf.mxu0
    %v2993 = vadd.f32 %v2768, %v2992
    %v2994 = vpop.f32.mrf.mxu0
    %2995 = vmatprep.mubr.f32.mxu0 0.0
    %2996 = vmatmul.mubr.f32.gmra.mxu0 %v2601
    %v2997 = vpop.f32.mrf.mxu0
    %v2998 = vadd.f32 %v2773, %v2997
    %v2999 = vpop.f32.mrf.mxu0
    %3000 = vmatprep.mubr.f32.mxu0 0.0
    %3001 = vmatmul.mubr.f32.gmra.mxu0 %v2602
    %v3002 = vpop.f32.mrf.mxu0
    %v3003 = vadd.f32 %v2778, %v3002
    %v3004 = vpop.f32.mrf.mxu0
    %3005 = vmatprep.mubr.f32.mxu0 0.0
    %3006 = vmatmul.mubr.f32.gmra.mxu0 %v2603
    %v3007 = vpop.f32.mrf.mxu0
    %v3008 = vadd.f32 %v2783, %v3007
    %v3009 = vpop.f32.mrf.mxu0
    %3010 = vmatprep.mubr.f32.mxu0 0.0
    %3011 = vmatmul.mubr.f32.gmra.mxu0 %v2604
    %v3012 = vpop.f32.mrf.mxu0
    %v3013 = vadd.f32 %v2788, %v3012
    %v3014 = vpop.f32.mrf.mxu0
    %3015 = vmatprep.mubr.f32.mxu0 0.0
    %3016 = vmatmul.mubr.f32.gmra.mxu0 %v2605
    %v3017 = vpop.f32.mrf.mxu0
    %v3018 = vadd.f32 %v2793, %v3017
    %v3019 = vpop.f32.mrf.mxu0
    %3020 = vmatprep.mubr.f32.mxu0 0.0
    %3021 = vmatmul.mubr.f32.gmra.mxu0 %v2606
    %v3022 = vpop.f32.mrf.mxu0
    %v3023 = vadd.f32 %v2798, %v3022
    %v3024 = vpop.f32.mrf.mxu0
    %3025 = vmatprep.mubr.f32.mxu0 0.0
    %3026 = vmatmul.mubr.f32.gmra.mxu0 %v2607
    %v3027 = vpop.f32.mrf.mxu0
    %v3028 = vadd.f32 %v2803, %v3027
    %v3029 = vpop.f32.mrf.mxu0
    %3030 = vmatprep.mubr.f32.mxu0 0.0
    %3031 = vmatmul.mubr.f32.gmra.mxu0 %v2608
    %v3032 = vpop.f32.mrf.mxu0
    %v3033 = vadd.f32 %v2808, %v3032
    %v3034 = vpop.f32.mrf.mxu0
    %3035 = vmatprep.mubr.f32.mxu0 0.0
    %3036 = vmatmul.mubr.f32.gmra.mxu0 %v2609
    %v3037 = vpop.f32.mrf.mxu0
    %v3038 = vadd.f32 %v2813, %v3037
    %v3039 = vpop.f32.mrf.mxu0
    %3040 = vmatprep.mubr.f32.mxu0 0.0
    %3041 = vmatmul.mubr.f32.gmra.mxu0 %v2610
    %v3042 = vpop.f32.mrf.mxu0
    %v3043 = vadd.f32 %v2818, %v3042
    %v3044 = vpop.f32.mrf.mxu0
    %3045 = vmatprep.mubr.f32.mxu0 0.0
    %3046 = vmatmul.mubr.f32.gmra.mxu0 %v2611
    %v3047 = vpop.f32.mrf.mxu0
    %v3048 = vadd.f32 %v2823, %v3047
    %v3049 = vpop.f32.mrf.mxu0
    %3050 = vmatprep.mubr.f32.mxu0 0.0
    %3051 = vmatmul.mubr.f32.gmra.mxu0 %v2612
    %v3052 = vpop.f32.mrf.mxu0
    %v3053 = vadd.f32 %v2828, %v3052
    %v3054 = vpop.f32.mrf.mxu0
    %3055 = vmatprep.mubr.f32.mxu0 0.0
    %3056 = vmatmul.mubr.f32.gmra.mxu0 %v2613
    %v3057 = vpop.f32.mrf.mxu0
    %v3058 = vadd.f32 %v2833, %v3057
    %v3059 = vpop.f32.mrf.mxu0
    %3060 = vmatprep.mubr.f32.mxu0 0.0
    %3061 = vmatmul.mubr.f32.gmra.mxu0 %v2614
    %v3062 = vpop.f32.mrf.mxu0
    %v3063 = vadd.f32 %v2838, %v3062
    %v3064 = vpop.f32.mrf.mxu0
    %3065 = vmatprep.mubr.f32.mxu0 0.0
    %3066 = vmatmul.mubr.f32.gmra.mxu0 %v2615
    %v3067 = vpop.f32.mrf.mxu0
    %v3068 = vadd.f32 %v2843, %v3067
    %v3069 = vpop.f32.mrf.mxu0
    %3070 = vmatprep.mubr.f32.mxu0 0.0
    %3071 = vmatmul.mubr.f32.gmra.mxu0 %v2616
    %v3072 = vpop.f32.mrf.mxu0
    %v3073 = vadd.f32 %v2848, %v3072
    %v3074 = vpop.f32.mrf.mxu0
    %3075 = vmatprep.mubr.f32.mxu0 0.0
    %3076 = vmatmul.mubr.f32.gmra.mxu0 %v2617
    %v3077 = vpop.f32.mrf.mxu0
    %v3078 = vadd.f32 %v2853, %v3077
    %v3079 = vpop.f32.mrf.mxu0
    %3080 = vmatprep.mubr.f32.mxu0 0.0
    %3081 = vmatmul.mubr.f32.gmra.mxu0 %v2618
    %v3082 = vpop.f32.mrf.mxu0
    %v3083 = vadd.f32 %v2858, %v3082
    %v3084 = vpop.f32.mrf.mxu0
    %3085 = vmatprep.mubr.f32.mxu0 0.0
    %3086 = vmatmul.mubr.f32.gmra.mxu0 %v2619
    %v3087 = vpop.f32.mrf.mxu0
    %v3088 = vadd.f32 %v2863, %v3087
    %v3089 = vpop.f32.mrf.mxu0
    %3090 = vmatprep.mubr.f32.mxu0 0.0
    %3091 = vmatmul.mubr.f32.gmra.mxu0 %v2620
    %v3092 = vpop.f32.mrf.mxu0
    %v3093 = vadd.f32 %v2868, %v3092
    %v3094 = vpop.f32.mrf.mxu0
    %3095 = vmatprep.mubr.f32.mxu0 0.0
    %3096 = vmatmul.mubr.f32.gmra.mxu0 %v2621
    %v3097 = vpop.f32.mrf.mxu0
    %v3098 = vadd.f32 %v2873, %v3097
    %v3099 = vpop.f32.mrf.mxu0
    %3100 = vmatprep.mubr.f32.mxu0 0.0
    %3101 = vmatmul.mubr.f32.gmra.mxu0 %v2622
    %v3102 = vpop.f32.mrf.mxu0
    %v3103 = vadd.f32 %v2878, %v3102
    %v3104 = vpop.f32.mrf.mxu0
    %3105 = vmatprep.mubr.f32.mxu0 0.0
    %3106 = vmatmul.mubr.f32.gmra.mxu0 %v2623
    %v3107 = vpop.f32.mrf.mxu0
    %v3108 = vadd.f32 %v2883, %v3107
    %v3109 = vpop.f32.mrf.mxu0
    %3110 = vmatprep.mubr.f32.mxu0 0.0
    %3111 = vmatmul.mubr.f32.gmra.mxu0 %v2624
    %v3112 = vpop.f32.mrf.mxu0
    %v3113 = vadd.f32 %v2888, %v3112
    %v3114 = vpop.f32.mrf.mxu0
    %3115 = vmatprep.mubr.f32.mxu0 0.0
    %3116 = vmatmul.mubr.f32.gmra.mxu0 %v2625
    %v3117 = vpop.f32.mrf.mxu0
    %v3118 = vadd.f32 %v2893, %v3117
    %v3119 = vpop.f32.mrf.mxu0
    %3120 = vmatprep.mubr.f32.mxu0 0.0
    %3121 = vmatmul.mubr.f32.gmra.mxu0 %v2626
    %v3122 = vpop.f32.mrf.mxu0
    %v3123 = vadd.f32 %v2898, %v3122
    %v3124 = vpop.f32.mrf.mxu0
    %3125 = vmatprep.mubr.f32.mxu0 0.0
    %3126 = vmatmul.mubr.f32.gmra.mxu0 %v2627
    %v3127 = vpop.f32.mrf.mxu0
    %v3128 = vadd.f32 %v2903, %v3127
    %v3129 = vpop.f32.mrf.mxu0
    %3130 = vmatprep.mubr.f32.mxu0 0.0
    %3131 = vmatmul.mubr.f32.gmra.mxu0 %v2628
    %v3132 = vpop.f32.mrf.mxu0
    %v3133 = vadd.f32 %v2908, %v3132
    %v3134 = vpop.f32.mrf.mxu0
    %3135 = vmatprep.mubr.f32.mxu0 0.0
    %3136 = vmatmul.mubr.f32.gmra.mxu0 %v2629
    %v3137 = vpop.f32.mrf.mxu0
    %v3138 = vadd.f32 %v2913, %v3137
    %v3139 = vpop.f32.mrf.mxu0
    %3140 = vmatprep.mubr.f32.mxu0 0.0
    %3141 = vmatmul.mubr.f32.gmra.mxu0 %v2630
    %v3142 = vpop.f32.mrf.mxu0
    %v3143 = vadd.f32 %v2918, %v3142
    %v3144 = vpop.f32.mrf.mxu0
    %3145 = vdwg.mxu0
    %s3146 = scalar_lea.vmem %s5, 256
    %v3147 = vld [vmem:[%s3146] sm:$0xff]
    %v3148 = vld [vmem:[%s3146 + $0x8] sm:$0xff]
    %v3149 = vld [vmem:[%s3146 + $0x10] sm:$0xff]
    %v3150 = vld [vmem:[%s3146 + $0x18] sm:$0xff]
    %v3151 = vld [vmem:[%s3146 + $0x20] sm:$0xff]
    %v3152 = vld [vmem:[%s3146 + $0x28] sm:$0xff]
    %v3153 = vld [vmem:[%s3146 + $0x30] sm:$0xff]
    %v3154 = vld [vmem:[%s3146 + $0x38] sm:$0xff]
    %v3155 = vld [vmem:[%s3146 + $0x40] sm:$0xff]
    %v3156 = vld [vmem:[%s3146 + $0x48] sm:$0xff]
    %v3157 = vld [vmem:[%s3146 + $0x50] sm:$0xff]
    %v3158 = vld [vmem:[%s3146 + $0x58] sm:$0xff]
    %v3159 = vld [vmem:[%s3146 + $0x60] sm:$0xff]
    %v3160 = vld [vmem:[%s3146 + $0x68] sm:$0xff]
    %v3161 = vld [vmem:[%s3146 + $0x70] sm:$0xff]
    %v3162 = vld [vmem:[%s3146 + $0x78] sm:$0xff]
    %3163 = vmatprep.subr.mxu0 0.0
    %3164 = vmatpush1.msra.mxu0 %v3162
    %3165 = vmatprep.subr.mxu0 0.0
    %3166 = vmatpush1.msra.mxu0 %v3161
    %3167 = vmatprep.subr.mxu0 0.0
    %3168 = vmatpush1.msra.mxu0 %v3160
    %3169 = vmatprep.subr.mxu0 0.0
    %3170 = vmatpush1.msra.mxu0 %v3159
    %3171 = vmatprep.subr.mxu0 0.0
    %3172 = vmatpush1.msra.mxu0 %v3158
    %3173 = vmatprep.subr.mxu0 0.0
    %3174 = vmatpush1.msra.mxu0 %v3157
    %3175 = vmatprep.subr.mxu0 0.0
    %3176 = vmatpush1.msra.mxu0 %v3156
    %3177 = vmatprep.subr.mxu0 0.0
    %3178 = vmatpush1.msra.mxu0 %v3155
    %3179 = vmatprep.subr.mxu0 0.0
    %3180 = vmatpush1.msra.mxu0 %v3154
    %3181 = vmatprep.subr.mxu0 0.0
    %3182 = vmatpush1.msra.mxu0 %v3153
    %3183 = vmatprep.subr.mxu0 0.0
    %3184 = vmatpush1.msra.mxu0 %v3152
    %3185 = vmatprep.subr.mxu0 0.0
    %3186 = vmatpush1.msra.mxu0 %v3151
    %3187 = vmatprep.subr.mxu0 0.0
    %3188 = vmatpush1.msra.mxu0 %v3150
    %3189 = vmatprep.subr.mxu0 0.0
    %3190 = vmatpush1.msra.mxu0 %v3149
    %3191 = vmatprep.subr.mxu0 0.0
    %3192 = vmatpush1.msra.mxu0 %v3148
    %3193 = vmatprep.subr.mxu0 0.0
    %3194 = vmatpush1.msra.mxu0 %v3147
    %3195 = vmatprep.subr.mxu0 0.0
    %3196 = vmatpush2.msra.mxu0 0.0
    %3197 = vmatprep.subr.mxu0 0.0
    %3198 = vmatpush2.msra.mxu0 0.0
    %3199 = vmatprep.subr.mxu0 0.0
    %3200 = vmatpush2.msra.mxu0 0.0
    %3201 = vmatprep.subr.mxu0 0.0
    %3202 = vmatpush2.msra.mxu0 0.0
    %3203 = vmatprep.subr.mxu0 0.0
    %3204 = vmatpush2.msra.mxu0 0.0
    %3205 = vmatprep.subr.mxu0 0.0
    %3206 = vmatpush2.msra.mxu0 0.0
    %3207 = vmatprep.subr.mxu0 0.0
    %3208 = vmatpush2.msra.mxu0 0.0
    %3209 = vmatprep.subr.mxu0 0.0
    %3210 = vmatpush2.msra.mxu0 0.0
    %3211 = vmatprep.subr.mxu0 0.0
    %3212 = vmatpush2.msra.mxu0 0.0
    %3213 = vmatprep.subr.mxu0 0.0
    %3214 = vmatpush2.msra.mxu0 0.0
    %3215 = vmatprep.subr.mxu0 0.0
    %3216 = vmatpush2.msra.mxu0 0.0
    %3217 = vmatprep.subr.mxu0 0.0
    %3218 = vmatpush2.msra.mxu0 0.0
    %3219 = vmatprep.subr.mxu0 0.0
    %3220 = vmatpush2.msra.mxu0 0.0
    %3221 = vmatprep.subr.mxu0 0.0
    %3222 = vmatpush2.msra.mxu0 0.0
    %3223 = vmatprep.subr.mxu0 0.0
    %3224 = vmatpush2.msra.mxu0 0.0
    %3225 = vmatprep.subr.mxu0 0.0
    %3226 = vmatpush2.msra.mxu0 0.0
    %3227 = vmatprep.mubr.f32.mxu0 0.0
    %3228 = vmatmul.mubr.f32.gmra.mxu0 %v2631
    %v3229 = vpop.f32.mrf.mxu0
    %v3230 = vadd.f32 0.0, %v3229
    %v3231 = vpop.f32.mrf.mxu0
    %3232 = vmatprep.mubr.f32.mxu0 0.0
    %3233 = vmatmul.mubr.f32.gmra.mxu0 %v2632
    %v3234 = vpop.f32.mrf.mxu0
    %v3235 = vadd.f32 0.0, %v3234
    %v3236 = vpop.f32.mrf.mxu0
    %3237 = vmatprep.mubr.f32.mxu0 0.0
    %3238 = vmatmul.mubr.f32.gmra.mxu0 %v2633
    %v3239 = vpop.f32.mrf.mxu0
    %v3240 = vadd.f32 0.0, %v3239
    %v3241 = vpop.f32.mrf.mxu0
    %3242 = vmatprep.mubr.f32.mxu0 0.0
    %3243 = vmatmul.mubr.f32.gmra.mxu0 %v2634
    %v3244 = vpop.f32.mrf.mxu0
    %v3245 = vadd.f32 0.0, %v3244
    %v3246 = vpop.f32.mrf.mxu0
    %3247 = vmatprep.mubr.f32.mxu0 0.0
    %3248 = vmatmul.mubr.f32.gmra.mxu0 %v2635
    %v3249 = vpop.f32.mrf.mxu0
    %v3250 = vadd.f32 0.0, %v3249
    %v3251 = vpop.f32.mrf.mxu0
    %3252 = vmatprep.mubr.f32.mxu0 0.0
    %3253 = vmatmul.mubr.f32.gmra.mxu0 %v2636
    %v3254 = vpop.f32.mrf.mxu0
    %v3255 = vadd.f32 0.0, %v3254
    %v3256 = vpop.f32.mrf.mxu0
    %3257 = vmatprep.mubr.f32.mxu0 0.0
    %3258 = vmatmul.mubr.f32.gmra.mxu0 %v2637
    %v3259 = vpop.f32.mrf.mxu0
    %v3260 = vadd.f32 0.0, %v3259
    %v3261 = vpop.f32.mrf.mxu0
    %3262 = vmatprep.mubr.f32.mxu0 0.0
    %3263 = vmatmul.mubr.f32.gmra.mxu0 %v2638
    %v3264 = vpop.f32.mrf.mxu0
    %v3265 = vadd.f32 0.0, %v3264
    %v3266 = vpop.f32.mrf.mxu0
    %3267 = vmatprep.mubr.f32.mxu0 0.0
    %3268 = vmatmul.mubr.f32.gmra.mxu0 %v2639
    %v3269 = vpop.f32.mrf.mxu0
    %v3270 = vadd.f32 0.0, %v3269
    %v3271 = vpop.f32.mrf.mxu0
    %3272 = vmatprep.mubr.f32.mxu0 0.0
    %3273 = vmatmul.mubr.f32.gmra.mxu0 %v2640
    %v3274 = vpop.f32.mrf.mxu0
    %v3275 = vadd.f32 0.0, %v3274
    %v3276 = vpop.f32.mrf.mxu0
    %3277 = vmatprep.mubr.f32.mxu0 0.0
    %3278 = vmatmul.mubr.f32.gmra.mxu0 %v2641
    %v3279 = vpop.f32.mrf.mxu0
    %v3280 = vadd.f32 0.0, %v3279
    %v3281 = vpop.f32.mrf.mxu0
    %3282 = vmatprep.mubr.f32.mxu0 0.0
    %3283 = vmatmul.mubr.f32.gmra.mxu0 %v2642
    %v3284 = vpop.f32.mrf.mxu0
    %v3285 = vadd.f32 0.0, %v3284
    %v3286 = vpop.f32.mrf.mxu0
    %3287 = vmatprep.mubr.f32.mxu0 0.0
    %3288 = vmatmul.mubr.f32.gmra.mxu0 %v2643
    %v3289 = vpop.f32.mrf.mxu0
    %v3290 = vadd.f32 0.0, %v3289
    %v3291 = vpop.f32.mrf.mxu0
    %3292 = vmatprep.mubr.f32.mxu0 0.0
    %3293 = vmatmul.mubr.f32.gmra.mxu0 %v2644
    %v3294 = vpop.f32.mrf.mxu0
    %v3295 = vadd.f32 0.0, %v3294
    %v3296 = vpop.f32.mrf.mxu0
    %3297 = vmatprep.mubr.f32.mxu0 0.0
    %3298 = vmatmul.mubr.f32.gmra.mxu0 %v2645
    %v3299 = vpop.f32.mrf.mxu0
    %v3300 = vadd.f32 0.0, %v3299
    %v3301 = vpop.f32.mrf.mxu0
    %3302 = vmatprep.mubr.f32.mxu0 0.0
    %3303 = vmatmul.mubr.f32.gmra.mxu0 %v2646
    %v3304 = vpop.f32.mrf.mxu0
    %v3305 = vadd.f32 0.0, %v3304
    %v3306 = vpop.f32.mrf.mxu0
    %3307 = vmatprep.mubr.f32.mxu0 0.0
    %3308 = vmatmul.mubr.f32.gmra.mxu0 %v2647
    %v3309 = vpop.f32.mrf.mxu0
    %v3310 = vadd.f32 0.0, %v3309
    %v3311 = vpop.f32.mrf.mxu0
    %3312 = vmatprep.mubr.f32.mxu0 0.0
    %3313 = vmatmul.mubr.f32.gmra.mxu0 %v2648
    %v3314 = vpop.f32.mrf.mxu0
    %v3315 = vadd.f32 0.0, %v3314
    %v3316 = vpop.f32.mrf.mxu0
    %3317 = vmatprep.mubr.f32.mxu0 0.0
    %3318 = vmatmul.mubr.f32.gmra.mxu0 %v2649
    %v3319 = vpop.f32.mrf.mxu0
    %v3320 = vadd.f32 0.0, %v3319
    %v3321 = vpop.f32.mrf.mxu0
    %3322 = vmatprep.mubr.f32.mxu0 0.0
    %3323 = vmatmul.mubr.f32.gmra.mxu0 %v2650
    %v3324 = vpop.f32.mrf.mxu0
    %v3325 = vadd.f32 0.0, %v3324
    %v3326 = vpop.f32.mrf.mxu0
    %3327 = vmatprep.mubr.f32.mxu0 0.0
    %3328 = vmatmul.mubr.f32.gmra.mxu0 %v2651
    %v3329 = vpop.f32.mrf.mxu0
    %v3330 = vadd.f32 0.0, %v3329
    %v3331 = vpop.f32.mrf.mxu0
    %3332 = vmatprep.mubr.f32.mxu0 0.0
    %3333 = vmatmul.mubr.f32.gmra.mxu0 %v2652
    %v3334 = vpop.f32.mrf.mxu0
    %v3335 = vadd.f32 0.0, %v3334
    %v3336 = vpop.f32.mrf.mxu0
    %3337 = vmatprep.mubr.f32.mxu0 0.0
    %3338 = vmatmul.mubr.f32.gmra.mxu0 %v2653
    %v3339 = vpop.f32.mrf.mxu0
    %v3340 = vadd.f32 0.0, %v3339
    %v3341 = vpop.f32.mrf.mxu0
    %3342 = vmatprep.mubr.f32.mxu0 0.0
    %3343 = vmatmul.mubr.f32.gmra.mxu0 %v2654
    %v3344 = vpop.f32.mrf.mxu0
    %v3345 = vadd.f32 0.0, %v3344
    %v3346 = vpop.f32.mrf.mxu0
    %3347 = vmatprep.mubr.f32.mxu0 0.0
    %3348 = vmatmul.mubr.f32.gmra.mxu0 %v2655
    %v3349 = vpop.f32.mrf.mxu0
    %v3350 = vadd.f32 0.0, %v3349
    %v3351 = vpop.f32.mrf.mxu0
    %3352 = vmatprep.mubr.f32.mxu0 0.0
    %3353 = vmatmul.mubr.f32.gmra.mxu0 %v2656
    %v3354 = vpop.f32.mrf.mxu0
    %v3355 = vadd.f32 0.0, %v3354
    %v3356 = vpop.f32.mrf.mxu0
    %3357 = vmatprep.mubr.f32.mxu0 0.0
    %3358 = vmatmul.mubr.f32.gmra.mxu0 %v2657
    %v3359 = vpop.f32.mrf.mxu0
    %v3360 = vadd.f32 0.0, %v3359
    %v3361 = vpop.f32.mrf.mxu0
    %3362 = vmatprep.mubr.f32.mxu0 0.0
    %3363 = vmatmul.mubr.f32.gmra.mxu0 %v2658
    %v3364 = vpop.f32.mrf.mxu0
    %v3365 = vadd.f32 0.0, %v3364
    %v3366 = vpop.f32.mrf.mxu0
    %3367 = vmatprep.mubr.f32.mxu0 0.0
    %3368 = vmatmul.mubr.f32.gmra.mxu0 %v2659
    %v3369 = vpop.f32.mrf.mxu0
    %v3370 = vadd.f32 0.0, %v3369
    %v3371 = vpop.f32.mrf.mxu0
    %3372 = vmatprep.mubr.f32.mxu0 0.0
    %3373 = vmatmul.mubr.f32.gmra.mxu0 %v2660
    %v3374 = vpop.f32.mrf.mxu0
    %v3375 = vadd.f32 0.0, %v3374
    %v3376 = vpop.f32.mrf.mxu0
    %3377 = vmatprep.mubr.f32.mxu0 0.0
    %3378 = vmatmul.mubr.f32.gmra.mxu0 %v2661
    %v3379 = vpop.f32.mrf.mxu0
    %v3380 = vadd.f32 0.0, %v3379
    %v3381 = vpop.f32.mrf.mxu0
    %3382 = vmatprep.mubr.f32.mxu0 0.0
    %3383 = vmatmul.mubr.f32.gmra.mxu0 %v2662
    %v3384 = vpop.f32.mrf.mxu0
    %v3385 = vadd.f32 0.0, %v3384
    %v3386 = vpop.f32.mrf.mxu0
    %3387 = vdwg.mxu0
    %v3388 = vadd.f32 %v2988, %v3230
    %v3389 = vadd.f32 %v2993, %v3235
    %v3390 = vadd.f32 %v2998, %v3240
    %v3391 = vadd.f32 %v3003, %v3245
    %v3392 = vadd.f32 %v3008, %v3250
    %v3393 = vadd.f32 %v3013, %v3255
    %v3394 = vadd.f32 %v3018, %v3260
    %v3395 = vadd.f32 %v3023, %v3265
    %v3396 = vadd.f32 %v3028, %v3270
    %v3397 = vadd.f32 %v3033, %v3275
    %v3398 = vadd.f32 %v3038, %v3280
    %v3399 = vadd.f32 %v3043, %v3285
    %v3400 = vadd.f32 %v3048, %v3290
    %v3401 = vadd.f32 %v3053, %v3295
    %v3402 = vadd.f32 %v3058, %v3300
    %v3403 = vadd.f32 %v3063, %v3305
    %v3404 = vadd.f32 %v3068, %v3310
    %v3405 = vadd.f32 %v3073, %v3315
    %v3406 = vadd.f32 %v3078, %v3320
    %v3407 = vadd.f32 %v3083, %v3325
    %v3408 = vadd.f32 %v3088, %v3330
    %v3409 = vadd.f32 %v3093, %v3335
    %v3410 = vadd.f32 %v3098, %v3340
    %v3411 = vadd.f32 %v3103, %v3345
    %v3412 = vadd.f32 %v3108, %v3350
    %v3413 = vadd.f32 %v3113, %v3355
    %v3414 = vadd.f32 %v3118, %v3360
    %v3415 = vadd.f32 %v3123, %v3365
    %v3416 = vadd.f32 %v3128, %v3370
    %v3417 = vadd.f32 %v3133, %v3375
    %v3418 = vadd.f32 %v3138, %v3380
    %v3419 = vadd.f32 %v3143, %v3385
    %v3420 = vld [vmem:[%s6] sm:$0x1]
    %v3422 = vlaneseq
    %v3423 = vshrl.u32 %v3422, 7
    %v3424 = vsub.s32 0, %v3423
    %v3425 = vrot.slane %v3420, %v3424
    %v3427 = vadd.f32 %v3388, %v3425
    %v3428 = vadd.f32 %v3389, %v3425
    %v3429 = vadd.f32 %v3390, %v3425
    %v3430 = vadd.f32 %v3391, %v3425
    %v3431 = vadd.f32 %v3392, %v3425
    %v3432 = vadd.f32 %v3393, %v3425
    %v3433 = vadd.f32 %v3394, %v3425
    %v3434 = vadd.f32 %v3395, %v3425
    %v3435 = vadd.f32 %v3396, %v3425
    %v3436 = vadd.f32 %v3397, %v3425
    %v3437 = vadd.f32 %v3398, %v3425
    %v3438 = vadd.f32 %v3399, %v3425
    %v3439 = vadd.f32 %v3400, %v3425
    %v3440 = vadd.f32 %v3401, %v3425
    %v3441 = vadd.f32 %v3402, %v3425
    %v3442 = vadd.f32 %v3403, %v3425
    %v3443 = vadd.f32 %v3404, %v3425
    %v3444 = vadd.f32 %v3405, %v3425
    %v3445 = vadd.f32 %v3406, %v3425
    %v3446 = vadd.f32 %v3407, %v3425
    %v3447 = vadd.f32 %v3408, %v3425
    %v3448 = vadd.f32 %v3409, %v3425
    %v3449 = vadd.f32 %v3410, %v3425
    %v3450 = vadd.f32 %v3411, %v3425
    %v3451 = vadd.f32 %v3412, %v3425
    %v3452 = vadd.f32 %v3413, %v3425
    %v3453 = vadd.f32 %v3414, %v3425
    %v3454 = vadd.f32 %v3415, %v3425
    %v3455 = vadd.f32 %v3416, %v3425
    %v3456 = vadd.f32 %v3417, %v3425
    %v3457 = vadd.f32 %v3418, %v3425
    %v3458 = vadd.f32 %v3419, %v3425
    %v3459 = vmax.f32 %v3427, 0.0
    %v3460 = vmax.f32 %v3428, 0.0
    %v3461 = vmax.f32 %v3429, 0.0
    %v3462 = vmax.f32 %v3430, 0.0
    %v3463 = vmax.f32 %v3431, 0.0
    %v3464 = vmax.f32 %v3432, 0.0
    %v3465 = vmax.f32 %v3433, 0.0
    %v3466 = vmax.f32 %v3434, 0.0
    %v3467 = vmax.f32 %v3435, 0.0
    %v3468 = vmax.f32 %v3436, 0.0
    %v3469 = vmax.f32 %v3437, 0.0
    %v3470 = vmax.f32 %v3438, 0.0
    %v3471 = vmax.f32 %v3439, 0.0
    %v3472 = vmax.f32 %v3440, 0.0
    %v3473 = vmax.f32 %v3441, 0.0
    %v3474 = vmax.f32 %v3442, 0.0
    %v3475 = vmax.f32 %v3443, 0.0
    %v3476 = vmax.f32 %v3444, 0.0
    %v3477 = vmax.f32 %v3445, 0.0
    %v3478 = vmax.f32 %v3446, 0.0
    %v3479 = vmax.f32 %v3447, 0.0
    %v3480 = vmax.f32 %v3448, 0.0
    %v3481 = vmax.f32 %v3449, 0.0
    %v3482 = vmax.f32 %v3450, 0.0
    %v3483 = vmax.f32 %v3451, 0.0
    %v3484 = vmax.f32 %v3452, 0.0
    %v3485 = vmax.f32 %v3453, 0.0
    %v3486 = vmax.f32 %v3454, 0.0
    %v3487 = vmax.f32 %v3455, 0.0
    %v3488 = vmax.f32 %v3456, 0.0
    %v3489 = vmax.f32 %v3457, 0.0
    %v3490 = vmax.f32 %v3458, 0.0
    %v3491 = vld [vmem:[%s7] sm:$0xff]
    %v3492 = vld [vmem:[%s7 + $0x8] sm:$0x3]
    %v3493 = vld [vmem:[%s7 + $0x10] sm:$0xff]
    %v3494 = vld [vmem:[%s7 + $0x18] sm:$0x3]
    %v3495 = vld [vmem:[%s7 + $0x20] sm:$0xff]
    %v3496 = vld [vmem:[%s7 + $0x28] sm:$0x3]
    %v3497 = vld [vmem:[%s7 + $0x30] sm:$0xff]
    %v3498 = vld [vmem:[%s7 + $0x38] sm:$0x3]
    %v3499 = vld [vmem:[%s7 + $0x40] sm:$0xff]
    %v3500 = vld [vmem:[%s7 + $0x48] sm:$0x3]
    %v3501 = vld [vmem:[%s7 + $0x50] sm:$0xff]
    %v3502 = vld [vmem:[%s7 + $0x58] sm:$0x3]
    %v3503 = vld [vmem:[%s7 + $0x60] sm:$0xff]
    %v3504 = vld [vmem:[%s7 + $0x68] sm:$0x3]
    %v3505 = vld [vmem:[%s7 + $0x70] sm:$0xff]
    %v3506 = vld [vmem:[%s7 + $0x78] sm:$0x3]
    %v3507 = vld [vmem:[%s7 + $0x80] sm:$0xff]
    %v3508 = vld [vmem:[%s7 + $0x88] sm:$0x3]
    %v3509 = vld [vmem:[%s7 + $0x90] sm:$0xff]
    %v3510 = vld [vmem:[%s7 + $0x98] sm:$0x3]
    %v3511 = vld [vmem:[%s7 + $0xa0] sm:$0xff]
    %v3512 = vld [vmem:[%s7 + $0xa8] sm:$0x3]
    %v3513 = vld [vmem:[%s7 + $0xb0] sm:$0xff]
    %v3514 = vld [vmem:[%s7 + $0xb8] sm:$0x3]
    %v3515 = vld [vmem:[%s7 + $0xc0] sm:$0xff]
    %v3516 = vld [vmem:[%s7 + $0xc8] sm:$0x3]
    %v3517 = vld [vmem:[%s7 + $0xd0] sm:$0xff]
    %v3518 = vld [vmem:[%s7 + $0xd8] sm:$0x3]
    %v3519 = vld [vmem:[%s7 + $0xe0] sm:$0xff]
    %v3520 = vld [vmem:[%s7 + $0xe8] sm:$0x3]
    %v3521 = vld [vmem:[%s7 + $0xf0] sm:$0xff]
    %v3522 = vld [vmem:[%s7 + $0xf8] sm:$0x3]
    %v3523 = vld [vmem:[%s7 + $0x100] sm:$0xff]
    %v3524 = vld [vmem:[%s7 + $0x108] sm:$0x3]
    %v3525 = vld [vmem:[%s7 + $0x110] sm:$0xff]
    %v3526 = vld [vmem:[%s7 + $0x118] sm:$0x3]
    %v3527 = vld [vmem:[%s7 + $0x120] sm:$0xff]
    %v3528 = vld [vmem:[%s7 + $0x128] sm:$0x3]
    %v3529 = vld [vmem:[%s7 + $0x130] sm:$0xff]
    %v3530 = vld [vmem:[%s7 + $0x138] sm:$0x3]
    %v3531 = vld [vmem:[%s7 + $0x140] sm:$0xff]
    %v3532 = vld [vmem:[%s7 + $0x148] sm:$0x3]
    %v3533 = vld [vmem:[%s7 + $0x150] sm:$0xff]
    %v3534 = vld [vmem:[%s7 + $0x158] sm:$0x3]
    %v3535 = vld [vmem:[%s7 + $0x160] sm:$0xff]
    %v3536 = vld [vmem:[%s7 + $0x168] sm:$0x3]
    %v3537 = vld [vmem:[%s7 + $0x170] sm:$0xff]
    %v3538 = vld [vmem:[%s7 + $0x178] sm:$0x3]
    %v3539 = vld [vmem:[%s7 + $0x180] sm:$0xff]
    %v3540 = vld [vmem:[%s7 + $0x188] sm:$0x3]
    %v3541 = vld [vmem:[%s7 + $0x190] sm:$0xff]
    %v3542 = vld [vmem:[%s7 + $0x198] sm:$0x3]
    %v3543 = vld [vmem:[%s7 + $0x1a0] sm:$0xff]
    %v3544 = vld [vmem:[%s7 + $0x1a8] sm:$0x3]
    %v3545 = vld [vmem:[%s7 + $0x1b0] sm:$0xff]
    %v3546 = vld [vmem:[%s7 + $0x1b8] sm:$0x3]
    %v3547 = vld [vmem:[%s7 + $0x1c0] sm:$0xff]
    %v3548 = vld [vmem:[%s7 + $0x1c8] sm:$0x3]
    %v3549 = vld [vmem:[%s7 + $0x1d0] sm:$0xff]
    %v3550 = vld [vmem:[%s7 + $0x1d8] sm:$0x3]
    %v3551 = vld [vmem:[%s7 + $0x1e0] sm:$0xff]
    %v3552 = vld [vmem:[%s7 + $0x1e8] sm:$0x3]
    %v3553 = vld [vmem:[%s7 + $0x1f0] sm:$0xff]
    %v3554 = vld [vmem:[%s7 + $0x1f8] sm:$0x3]
    %3555 = vmatprep.subr.mxu0 0.0
    %3556 = vmatpush1.xpose.msra.mxu0 0.0
    %3557 = vmatprep.subr.mxu0 0.0
    %3558 = vmatpush1.xpose.msra.mxu0 0.0
    %3559 = vmatprep.subr.mxu0 0.0
    %3560 = vmatpush1.xpose.msra.mxu0 0.0
    %3561 = vmatprep.subr.mxu0 0.0
    %3562 = vmatpush1.xpose.msra.mxu0 0.0
    %3563 = vmatprep.subr.mxu0 0.0
    %3564 = vmatpush1.xpose.msra.mxu0 0.0
    %3565 = vmatprep.subr.mxu0 0.0
    %3566 = vmatpush1.xpose.msra.mxu0 0.0
    %3567 = vmatprep.subr.mxu0 0.0
    %3568 = vmatpush1.xpose.msra.mxu0 0.0
    %3569 = vmatprep.subr.mxu0 0.0
    %3570 = vmatpush1.xpose.msra.mxu0 0.0
    %3571 = vmatprep.subr.mxu0 0.0
    %3572 = vmatpush1.xpose.msra.mxu0 0.0
    %3573 = vmatprep.subr.mxu0 0.0
    %3574 = vmatpush1.xpose.msra.mxu0 0.0
    %3575 = vmatprep.subr.mxu0 0.0
    %3576 = vmatpush1.xpose.msra.mxu0 0.0
    %3577 = vmatprep.subr.mxu0 0.0
    %3578 = vmatpush1.xpose.msra.mxu0 0.0
    %3579 = vmatprep.subr.mxu0 0.0
    %3580 = vmatpush1.xpose.msra.mxu0 0.0
    %3581 = vmatprep.subr.mxu0 0.0
    %3582 = vmatpush1.xpose.msra.mxu0 0.0
    %3583 = vmatprep.subr.mxu0 0.0
    %3584 = vmatpush1.xpose.msra.mxu0 %v3492
    %3585 = vmatprep.subr.mxu0 0.0
    %3586 = vmatpush1.xpose.msra.mxu0 %v3491
    %3587 = vmatprep.subr.mxu0 0.0
    %3588 = vmatpush2.xpose.msra.mxu0 0.0
    %3589 = vmatprep.subr.mxu0 0.0
    %3590 = vmatpush2.xpose.msra.mxu0 0.0
    %3591 = vmatprep.subr.mxu0 0.0
    %3592 = vmatpush2.xpose.msra.mxu0 0.0
    %3593 = vmatprep.subr.mxu0 0.0
    %3594 = vmatpush2.xpose.msra.mxu0 0.0
    %3595 = vmatprep.subr.mxu0 0.0
    %3596 = vmatpush2.xpose.msra.mxu0 0.0
    %3597 = vmatprep.subr.mxu0 0.0
    %3598 = vmatpush2.xpose.msra.mxu0 0.0
    %3599 = vmatprep.subr.mxu0 0.0
    %3600 = vmatpush2.xpose.msra.mxu0 0.0
    %3601 = vmatprep.subr.mxu0 0.0
    %3602 = vmatpush2.xpose.msra.mxu0 0.0
    %3603 = vmatprep.subr.mxu0 0.0
    %3604 = vmatpush2.xpose.msra.mxu0 0.0
    %3605 = vmatprep.subr.mxu0 0.0
    %3606 = vmatpush2.xpose.msra.mxu0 0.0
    %3607 = vmatprep.subr.mxu0 0.0
    %3608 = vmatpush2.xpose.msra.mxu0 0.0
    %3609 = vmatprep.subr.mxu0 0.0
    %3610 = vmatpush2.xpose.msra.mxu0 0.0
    %3611 = vmatprep.subr.mxu0 0.0
    %3612 = vmatpush2.xpose.msra.mxu0 0.0
    %3613 = vmatprep.subr.mxu0 0.0
    %3614 = vmatpush2.xpose.msra.mxu0 0.0
    %3615 = vmatprep.subr.mxu0 0.0
    %3616 = vmatpush2.xpose.msra.mxu0 0.0
    %3617 = vmatprep.subr.mxu0 0.0
    %3618 = vmatpush2.xpose.msra.mxu0 0.0
    %3619 = vmatprep.mubr.f32.mxu0 0.0
    %3620 = vmatmul.mubr.f32.gmra.mxu0 %v3459
    %v3621 = vpop.f32.mrf.mxu0
    %v3622 = vadd.f32 0.0, %v3621
    %v3623 = vpop.f32.mrf.mxu0
    %3624 = vdwg.mxu0
    %3625 = vmatprep.subr.mxu0 0.0
    %3626 = vmatpush1.xpose.msra.mxu0 0.0
    %3627 = vmatprep.subr.mxu0 0.0
    %3628 = vmatpush1.xpose.msra.mxu0 0.0
    %3629 = vmatprep.subr.mxu0 0.0
    %3630 = vmatpush1.xpose.msra.mxu0 0.0
    %3631 = vmatprep.subr.mxu0 0.0
    %3632 = vmatpush1.xpose.msra.mxu0 0.0
    %3633 = vmatprep.subr.mxu0 0.0
    %3634 = vmatpush1.xpose.msra.mxu0 0.0
    %3635 = vmatprep.subr.mxu0 0.0
    %3636 = vmatpush1.xpose.msra.mxu0 0.0
    %3637 = vmatprep.subr.mxu0 0.0
    %3638 = vmatpush1.xpose.msra.mxu0 0.0
    %3639 = vmatprep.subr.mxu0 0.0
    %3640 = vmatpush1.xpose.msra.mxu0 0.0
    %3641 = vmatprep.subr.mxu0 0.0
    %3642 = vmatpush1.xpose.msra.mxu0 0.0
    %3643 = vmatprep.subr.mxu0 0.0
    %3644 = vmatpush1.xpose.msra.mxu0 0.0
    %3645 = vmatprep.subr.mxu0 0.0
    %3646 = vmatpush1.xpose.msra.mxu0 0.0
    %3647 = vmatprep.subr.mxu0 0.0
    %3648 = vmatpush1.xpose.msra.mxu0 0.0
    %3649 = vmatprep.subr.mxu0 0.0
    %3650 = vmatpush1.xpose.msra.mxu0 0.0
    %3651 = vmatprep.subr.mxu0 0.0
    %3652 = vmatpush1.xpose.msra.mxu0 0.0
    %3653 = vmatprep.subr.mxu0 0.0
    %3654 = vmatpush1.xpose.msra.mxu0 %v3494
    %3655 = vmatprep.subr.mxu0 0.0
    %3656 = vmatpush1.xpose.msra.mxu0 %v3493
    %3657 = vmatprep.subr.mxu0 0.0
    %3658 = vmatpush2.xpose.msra.mxu0 0.0
    %3659 = vmatprep.subr.mxu0 0.0
    %3660 = vmatpush2.xpose.msra.mxu0 0.0
    %3661 = vmatprep.subr.mxu0 0.0
    %3662 = vmatpush2.xpose.msra.mxu0 0.0
    %3663 = vmatprep.subr.mxu0 0.0
    %3664 = vmatpush2.xpose.msra.mxu0 0.0
    %3665 = vmatprep.subr.mxu0 0.0
    %3666 = vmatpush2.xpose.msra.mxu0 0.0
    %3667 = vmatprep.subr.mxu0 0.0
    %3668 = vmatpush2.xpose.msra.mxu0 0.0
    %3669 = vmatprep.subr.mxu0 0.0
    %3670 = vmatpush2.xpose.msra.mxu0 0.0
    %3671 = vmatprep.subr.mxu0 0.0
    %3672 = vmatpush2.xpose.msra.mxu0 0.0
    %3673 = vmatprep.subr.mxu0 0.0
    %3674 = vmatpush2.xpose.msra.mxu0 0.0
    %3675 = vmatprep.subr.mxu0 0.0
    %3676 = vmatpush2.xpose.msra.mxu0 0.0
    %3677 = vmatprep.subr.mxu0 0.0
    %3678 = vmatpush2.xpose.msra.mxu0 0.0
    %3679 = vmatprep.subr.mxu0 0.0
    %3680 = vmatpush2.xpose.msra.mxu0 0.0
    %3681 = vmatprep.subr.mxu0 0.0
    %3682 = vmatpush2.xpose.msra.mxu0 0.0
    %3683 = vmatprep.subr.mxu0 0.0
    %3684 = vmatpush2.xpose.msra.mxu0 0.0
    %3685 = vmatprep.subr.mxu0 0.0
    %3686 = vmatpush2.xpose.msra.mxu0 0.0
    %3687 = vmatprep.subr.mxu0 0.0
    %3688 = vmatpush2.xpose.msra.mxu0 0.0
    %3689 = vmatprep.mubr.f32.mxu0 0.0
    %3690 = vmatmul.mubr.f32.gmra.mxu0 %v3460
    %v3691 = vpop.f32.mrf.mxu0
    %v3692 = vadd.f32 0.0, %v3691
    %v3693 = vpop.f32.mrf.mxu0
    %3694 = vdwg.mxu0
    %3695 = vmatprep.subr.mxu0 0.0
    %3696 = vmatpush1.xpose.msra.mxu0 0.0
    %3697 = vmatprep.subr.mxu0 0.0
    %3698 = vmatpush1.xpose.msra.mxu0 0.0
    %3699 = vmatprep.subr.mxu0 0.0
    %3700 = vmatpush1.xpose.msra.mxu0 0.0
    %3701 = vmatprep.subr.mxu0 0.0
    %3702 = vmatpush1.xpose.msra.mxu0 0.0
    %3703 = vmatprep.subr.mxu0 0.0
    %3704 = vmatpush1.xpose.msra.mxu0 0.0
    %3705 = vmatprep.subr.mxu0 0.0
    %3706 = vmatpush1.xpose.msra.mxu0 0.0
    %3707 = vmatprep.subr.mxu0 0.0
    %3708 = vmatpush1.xpose.msra.mxu0 0.0
    %3709 = vmatprep.subr.mxu0 0.0
    %3710 = vmatpush1.xpose.msra.mxu0 0.0
    %3711 = vmatprep.subr.mxu0 0.0
    %3712 = vmatpush1.xpose.msra.mxu0 0.0
    %3713 = vmatprep.subr.mxu0 0.0
    %3714 = vmatpush1.xpose.msra.mxu0 0.0
    %3715 = vmatprep.subr.mxu0 0.0
    %3716 = vmatpush1.xpose.msra.mxu0 0.0
    %3717 = vmatprep.subr.mxu0 0.0
    %3718 = vmatpush1.xpose.msra.mxu0 0.0
    %3719 = vmatprep.subr.mxu0 0.0
    %3720 = vmatpush1.xpose.msra.mxu0 0.0
    %3721 = vmatprep.subr.mxu0 0.0
    %3722 = vmatpush1.xpose.msra.mxu0 0.0
    %3723 = vmatprep.subr.mxu0 0.0
    %3724 = vmatpush1.xpose.msra.mxu0 %v3496
    %3725 = vmatprep.subr.mxu0 0.0
    %3726 = vmatpush1.xpose.msra.mxu0 %v3495
    %3727 = vmatprep.subr.mxu0 0.0
    %3728 = vmatpush2.xpose.msra.mxu0 0.0
    %3729 = vmatprep.subr.mxu0 0.0
    %3730 = vmatpush2.xpose.msra.mxu0 0.0
    %3731 = vmatprep.subr.mxu0 0.0
    %3732 = vmatpush2.xpose.msra.mxu0 0.0
    %3733 = vmatprep.subr.mxu0 0.0
    %3734 = vmatpush2.xpose.msra.mxu0 0.0
    %3735 = vmatprep.subr.mxu0 0.0
    %3736 = vmatpush2.xpose.msra.mxu0 0.0
    %3737 = vmatprep.subr.mxu0 0.0
    %3738 = vmatpush2.xpose.msra.mxu0 0.0
    %3739 = vmatprep.subr.mxu0 0.0
    %3740 = vmatpush2.xpose.msra.mxu0 0.0
    %3741 = vmatprep.subr.mxu0 0.0
    %3742 = vmatpush2.xpose.msra.mxu0 0.0
    %3743 = vmatprep.subr.mxu0 0.0
    %3744 = vmatpush2.xpose.msra.mxu0 0.0
    %3745 = vmatprep.subr.mxu0 0.0
    %3746 = vmatpush2.xpose.msra.mxu0 0.0
    %3747 = vmatprep.subr.mxu0 0.0
    %3748 = vmatpush2.xpose.msra.mxu0 0.0
    %3749 = vmatprep.subr.mxu0 0.0
    %3750 = vmatpush2.xpose.msra.mxu0 0.0
    %3751 = vmatprep.subr.mxu0 0.0
    %3752 = vmatpush2.xpose.msra.mxu0 0.0
    %3753 = vmatprep.subr.mxu0 0.0
    %3754 = vmatpush2.xpose.msra.mxu0 0.0
    %3755 = vmatprep.subr.mxu0 0.0
    %3756 = vmatpush2.xpose.msra.mxu0 0.0
    %3757 = vmatprep.subr.mxu0 0.0
    %3758 = vmatpush2.xpose.msra.mxu0 0.0
    %3759 = vmatprep.mubr.f32.mxu0 0.0
    %3760 = vmatmul.mubr.f32.gmra.mxu0 %v3461
    %v3761 = vpop.f32.mrf.mxu0
    %v3762 = vadd.f32 0.0, %v3761
    %v3763 = vpop.f32.mrf.mxu0
    %3764 = vdwg.mxu0
    %3765 = vmatprep.subr.mxu0 0.0
    %3766 = vmatpush1.xpose.msra.mxu0 0.0
    %3767 = vmatprep.subr.mxu0 0.0
    %3768 = vmatpush1.xpose.msra.mxu0 0.0
    %3769 = vmatprep.subr.mxu0 0.0
    %3770 = vmatpush1.xpose.msra.mxu0 0.0
    %3771 = vmatprep.subr.mxu0 0.0
    %3772 = vmatpush1.xpose.msra.mxu0 0.0
    %3773 = vmatprep.subr.mxu0 0.0
    %3774 = vmatpush1.xpose.msra.mxu0 0.0
    %3775 = vmatprep.subr.mxu0 0.0
    %3776 = vmatpush1.xpose.msra.mxu0 0.0
    %3777 = vmatprep.subr.mxu0 0.0
    %3778 = vmatpush1.xpose.msra.mxu0 0.0
    %3779 = vmatprep.subr.mxu0 0.0
    %3780 = vmatpush1.xpose.msra.mxu0 0.0
    %3781 = vmatprep.subr.mxu0 0.0
    %3782 = vmatpush1.xpose.msra.mxu0 0.0
    %3783 = vmatprep.subr.mxu0 0.0
    %3784 = vmatpush1.xpose.msra.mxu0 0.0
    %3785 = vmatprep.subr.mxu0 0.0
    %3786 = vmatpush1.xpose.msra.mxu0 0.0
    %3787 = vmatprep.subr.mxu0 0.0
    %3788 = vmatpush1.xpose.msra.mxu0 0.0
    %3789 = vmatprep.subr.mxu0 0.0
    %3790 = vmatpush1.xpose.msra.mxu0 0.0
    %3791 = vmatprep.subr.mxu0 0.0
    %3792 = vmatpush1.xpose.msra.mxu0 0.0
    %3793 = vmatprep.subr.mxu0 0.0
    %3794 = vmatpush1.xpose.msra.mxu0 %v3498
    %3795 = vmatprep.subr.mxu0 0.0
    %3796 = vmatpush1.xpose.msra.mxu0 %v3497
    %3797 = vmatprep.subr.mxu0 0.0
    %3798 = vmatpush2.xpose.msra.mxu0 0.0
    %3799 = vmatprep.subr.mxu0 0.0
    %3800 = vmatpush2.xpose.msra.mxu0 0.0
    %3801 = vmatprep.subr.mxu0 0.0
    %3802 = vmatpush2.xpose.msra.mxu0 0.0
    %3803 = vmatprep.subr.mxu0 0.0
    %3804 = vmatpush2.xpose.msra.mxu0 0.0
    %3805 = vmatprep.subr.mxu0 0.0
    %3806 = vmatpush2.xpose.msra.mxu0 0.0
    %3807 = vmatprep.subr.mxu0 0.0
    %3808 = vmatpush2.xpose.msra.mxu0 0.0
    %3809 = vmatprep.subr.mxu0 0.0
    %3810 = vmatpush2.xpose.msra.mxu0 0.0
    %3811 = vmatprep.subr.mxu0 0.0
    %3812 = vmatpush2.xpose.msra.mxu0 0.0
    %3813 = vmatprep.subr.mxu0 0.0
    %3814 = vmatpush2.xpose.msra.mxu0 0.0
    %3815 = vmatprep.subr.mxu0 0.0
    %3816 = vmatpush2.xpose.msra.mxu0 0.0
    %3817 = vmatprep.subr.mxu0 0.0
    %3818 = vmatpush2.xpose.msra.mxu0 0.0
    %3819 = vmatprep.subr.mxu0 0.0
    %3820 = vmatpush2.xpose.msra.mxu0 0.0
    %3821 = vmatprep.subr.mxu0 0.0
    %3822 = vmatpush2.xpose.msra.mxu0 0.0
    %3823 = vmatprep.subr.mxu0 0.0
    %3824 = vmatpush2.xpose.msra.mxu0 0.0
    %3825 = vmatprep.subr.mxu0 0.0
    %3826 = vmatpush2.xpose.msra.mxu0 0.0
    %3827 = vmatprep.subr.mxu0 0.0
    %3828 = vmatpush2.xpose.msra.mxu0 0.0
    %3829 = vmatprep.mubr.f32.mxu0 0.0
    %3830 = vmatmul.mubr.f32.gmra.mxu0 %v3462
    %v3831 = vpop.f32.mrf.mxu0
    %v3832 = vadd.f32 0.0, %v3831
    %v3833 = vpop.f32.mrf.mxu0
    %3834 = vdwg.mxu0
    %3835 = vmatprep.subr.mxu0 0.0
    %3836 = vmatpush1.xpose.msra.mxu0 0.0
    %3837 = vmatprep.subr.mxu0 0.0
    %3838 = vmatpush1.xpose.msra.mxu0 0.0
    %3839 = vmatprep.subr.mxu0 0.0
    %3840 = vmatpush1.xpose.msra.mxu0 0.0
    %3841 = vmatprep.subr.mxu0 0.0
    %3842 = vmatpush1.xpose.msra.mxu0 0.0
    %3843 = vmatprep.subr.mxu0 0.0
    %3844 = vmatpush1.xpose.msra.mxu0 0.0
    %3845 = vmatprep.subr.mxu0 0.0
    %3846 = vmatpush1.xpose.msra.mxu0 0.0
    %3847 = vmatprep.subr.mxu0 0.0
    %3848 = vmatpush1.xpose.msra.mxu0 0.0
    %3849 = vmatprep.subr.mxu0 0.0
    %3850 = vmatpush1.xpose.msra.mxu0 0.0
    %3851 = vmatprep.subr.mxu0 0.0
    %3852 = vmatpush1.xpose.msra.mxu0 0.0
    %3853 = vmatprep.subr.mxu0 0.0
    %3854 = vmatpush1.xpose.msra.mxu0 0.0
    %3855 = vmatprep.subr.mxu0 0.0
    %3856 = vmatpush1.xpose.msra.mxu0 0.0
    %3857 = vmatprep.subr.mxu0 0.0
    %3858 = vmatpush1.xpose.msra.mxu0 0.0
    %3859 = vmatprep.subr.mxu0 0.0
    %3860 = vmatpush1.xpose.msra.mxu0 0.0
    %3861 = vmatprep.subr.mxu0 0.0
    %3862 = vmatpush1.xpose.msra.mxu0 0.0
    %3863 = vmatprep.subr.mxu0 0.0
    %3864 = vmatpush1.xpose.msra.mxu0 %v3500
    %3865 = vmatprep.subr.mxu0 0.0
    %3866 = vmatpush1.xpose.msra.mxu0 %v3499
    %3867 = vmatprep.subr.mxu0 0.0
    %3868 = vmatpush2.xpose.msra.mxu0 0.0
    %3869 = vmatprep.subr.mxu0 0.0
    %3870 = vmatpush2.xpose.msra.mxu0 0.0
    %3871 = vmatprep.subr.mxu0 0.0
    %3872 = vmatpush2.xpose.msra.mxu0 0.0
    %3873 = vmatprep.subr.mxu0 0.0
    %3874 = vmatpush2.xpose.msra.mxu0 0.0
    %3875 = vmatprep.subr.mxu0 0.0
    %3876 = vmatpush2.xpose.msra.mxu0 0.0
    %3877 = vmatprep.subr.mxu0 0.0
    %3878 = vmatpush2.xpose.msra.mxu0 0.0
    %3879 = vmatprep.subr.mxu0 0.0
    %3880 = vmatpush2.xpose.msra.mxu0 0.0
    %3881 = vmatprep.subr.mxu0 0.0
    %3882 = vmatpush2.xpose.msra.mxu0 0.0
    %3883 = vmatprep.subr.mxu0 0.0
    %3884 = vmatpush2.xpose.msra.mxu0 0.0
    %3885 = vmatprep.subr.mxu0 0.0
    %3886 = vmatpush2.xpose.msra.mxu0 0.0
    %3887 = vmatprep.subr.mxu0 0.0
    %3888 = vmatpush2.xpose.msra.mxu0 0.0
    %3889 = vmatprep.subr.mxu0 0.0
    %3890 = vmatpush2.xpose.msra.mxu0 0.0
    %3891 = vmatprep.subr.mxu0 0.0
    %3892 = vmatpush2.xpose.msra.mxu0 0.0
    %3893 = vmatprep.subr.mxu0 0.0
    %3894 = vmatpush2.xpose.msra.mxu0 0.0
    %3895 = vmatprep.subr.mxu0 0.0
    %3896 = vmatpush2.xpose.msra.mxu0 0.0
    %3897 = vmatprep.subr.mxu0 0.0
    %3898 = vmatpush2.xpose.msra.mxu0 0.0
    %3899 = vmatprep.mubr.f32.mxu0 0.0
    %3900 = vmatmul.mubr.f32.gmra.mxu0 %v3463
    %v3901 = vpop.f32.mrf.mxu0
    %v3902 = vadd.f32 0.0, %v3901
    %v3903 = vpop.f32.mrf.mxu0
    %3904 = vdwg.mxu0
    %3905 = vmatprep.subr.mxu0 0.0
    %3906 = vmatpush1.xpose.msra.mxu0 0.0
    %3907 = vmatprep.subr.mxu0 0.0
    %3908 = vmatpush1.xpose.msra.mxu0 0.0
    %3909 = vmatprep.subr.mxu0 0.0
    %3910 = vmatpush1.xpose.msra.mxu0 0.0
    %3911 = vmatprep.subr.mxu0 0.0
    %3912 = vmatpush1.xpose.msra.mxu0 0.0
    %3913 = vmatprep.subr.mxu0 0.0
    %3914 = vmatpush1.xpose.msra.mxu0 0.0
    %3915 = vmatprep.subr.mxu0 0.0
    %3916 = vmatpush1.xpose.msra.mxu0 0.0
    %3917 = vmatprep.subr.mxu0 0.0
    %3918 = vmatpush1.xpose.msra.mxu0 0.0
    %3919 = vmatprep.subr.mxu0 0.0
    %3920 = vmatpush1.xpose.msra.mxu0 0.0
    %3921 = vmatprep.subr.mxu0 0.0
    %3922 = vmatpush1.xpose.msra.mxu0 0.0
    %3923 = vmatprep.subr.mxu0 0.0
    %3924 = vmatpush1.xpose.msra.mxu0 0.0
    %3925 = vmatprep.subr.mxu0 0.0
    %3926 = vmatpush1.xpose.msra.mxu0 0.0
    %3927 = vmatprep.subr.mxu0 0.0
    %3928 = vmatpush1.xpose.msra.mxu0 0.0
    %3929 = vmatprep.subr.mxu0 0.0
    %3930 = vmatpush1.xpose.msra.mxu0 0.0
    %3931 = vmatprep.subr.mxu0 0.0
    %3932 = vmatpush1.xpose.msra.mxu0 0.0
    %3933 = vmatprep.subr.mxu0 0.0
    %3934 = vmatpush1.xpose.msra.mxu0 %v3502
    %3935 = vmatprep.subr.mxu0 0.0
    %3936 = vmatpush1.xpose.msra.mxu0 %v3501
    %3937 = vmatprep.subr.mxu0 0.0
    %3938 = vmatpush2.xpose.msra.mxu0 0.0
    %3939 = vmatprep.subr.mxu0 0.0
    %3940 = vmatpush2.xpose.msra.mxu0 0.0
    %3941 = vmatprep.subr.mxu0 0.0
    %3942 = vmatpush2.xpose.msra.mxu0 0.0
    %3943 = vmatprep.subr.mxu0 0.0
    %3944 = vmatpush2.xpose.msra.mxu0 0.0
    %3945 = vmatprep.subr.mxu0 0.0
    %3946 = vmatpush2.xpose.msra.mxu0 0.0
    %3947 = vmatprep.subr.mxu0 0.0
    %3948 = vmatpush2.xpose.msra.mxu0 0.0
    %3949 = vmatprep.subr.mxu0 0.0
    %3950 = vmatpush2.xpose.msra.mxu0 0.0
    %3951 = vmatprep.subr.mxu0 0.0
    %3952 = vmatpush2.xpose.msra.mxu0 0.0
    %3953 = vmatprep.subr.mxu0 0.0
    %3954 = vmatpush2.xpose.msra.mxu0 0.0
    %3955 = vmatprep.subr.mxu0 0.0
    %3956 = vmatpush2.xpose.msra.mxu0 0.0
    %3957 = vmatprep.subr.mxu0 0.0
    %3958 = vmatpush2.xpose.msra.mxu0 0.0
    %3959 = vmatprep.subr.mxu0 0.0
    %3960 = vmatpush2.xpose.msra.mxu0 0.0
    %3961 = vmatprep.subr.mxu0 0.0
    %3962 = vmatpush2.xpose.msra.mxu0 0.0
    %3963 = vmatprep.subr.mxu0 0.0
    %3964 = vmatpush2.xpose.msra.mxu0 0.0
    %3965 = vmatprep.subr.mxu0 0.0
    %3966 = vmatpush2.xpose.msra.mxu0 0.0
    %3967 = vmatprep.subr.mxu0 0.0
    %3968 = vmatpush2.xpose.msra.mxu0 0.0
    %3969 = vmatprep.mubr.f32.mxu0 0.0
    %3970 = vmatmul.mubr.f32.gmra.mxu0 %v3464
    %v3971 = vpop.f32.mrf.mxu0
    %v3972 = vadd.f32 0.0, %v3971
    %v3973 = vpop.f32.mrf.mxu0
    %3974 = vdwg.mxu0
    %3975 = vmatprep.subr.mxu0 0.0
    %3976 = vmatpush1.xpose.msra.mxu0 0.0
    %3977 = vmatprep.subr.mxu0 0.0
    %3978 = vmatpush1.xpose.msra.mxu0 0.0
    %3979 = vmatprep.subr.mxu0 0.0
    %3980 = vmatpush1.xpose.msra.mxu0 0.0
    %3981 = vmatprep.subr.mxu0 0.0
    %3982 = vmatpush1.xpose.msra.mxu0 0.0
    %3983 = vmatprep.subr.mxu0 0.0
    %3984 = vmatpush1.xpose.msra.mxu0 0.0
    %3985 = vmatprep.subr.mxu0 0.0
    %3986 = vmatpush1.xpose.msra.mxu0 0.0
    %3987 = vmatprep.subr.mxu0 0.0
    %3988 = vmatpush1.xpose.msra.mxu0 0.0
    %3989 = vmatprep.subr.mxu0 0.0
    %3990 = vmatpush1.xpose.msra.mxu0 0.0
    %3991 = vmatprep.subr.mxu0 0.0
    %3992 = vmatpush1.xpose.msra.mxu0 0.0
    %3993 = vmatprep.subr.mxu0 0.0
    %3994 = vmatpush1.xpose.msra.mxu0 0.0
    %3995 = vmatprep.subr.mxu0 0.0
    %3996 = vmatpush1.xpose.msra.mxu0 0.0
    %3997 = vmatprep.subr.mxu0 0.0
    %3998 = vmatpush1.xpose.msra.mxu0 0.0
    %3999 = vmatprep.subr.mxu0 0.0
    %4000 = vmatpush1.xpose.msra.mxu0 0.0
    %4001 = vmatprep.subr.mxu0 0.0
    %4002 = vmatpush1.xpose.msra.mxu0 0.0
    %4003 = vmatprep.subr.mxu0 0.0
    %4004 = vmatpush1.xpose.msra.mxu0 %v3504
    %4005 = vmatprep.subr.mxu0 0.0
    %4006 = vmatpush1.xpose.msra.mxu0 %v3503
    %4007 = vmatprep.subr.mxu0 0.0
    %4008 = vmatpush2.xpose.msra.mxu0 0.0
    %4009 = vmatprep.subr.mxu0 0.0
    %4010 = vmatpush2.xpose.msra.mxu0 0.0
    %4011 = vmatprep.subr.mxu0 0.0
    %4012 = vmatpush2.xpose.msra.mxu0 0.0
    %4013 = vmatprep.subr.mxu0 0.0
    %4014 = vmatpush2.xpose.msra.mxu0 0.0
    %4015 = vmatprep.subr.mxu0 0.0
    %4016 = vmatpush2.xpose.msra.mxu0 0.0
    %4017 = vmatprep.subr.mxu0 0.0
    %4018 = vmatpush2.xpose.msra.mxu0 0.0
    %4019 = vmatprep.subr.mxu0 0.0
    %4020 = vmatpush2.xpose.msra.mxu0 0.0
    %4021 = vmatprep.subr.mxu0 0.0
    %4022 = vmatpush2.xpose.msra.mxu0 0.0
    %4023 = vmatprep.subr.mxu0 0.0
    %4024 = vmatpush2.xpose.msra.mxu0 0.0
    %4025 = vmatprep.subr.mxu0 0.0
    %4026 = vmatpush2.xpose.msra.mxu0 0.0
    %4027 = vmatprep.subr.mxu0 0.0
    %4028 = vmatpush2.xpose.msra.mxu0 0.0
    %4029 = vmatprep.subr.mxu0 0.0
    %4030 = vmatpush2.xpose.msra.mxu0 0.0
    %4031 = vmatprep.subr.mxu0 0.0
    %4032 = vmatpush2.xpose.msra.mxu0 0.0
    %4033 = vmatprep.subr.mxu0 0.0
    %4034 = vmatpush2.xpose.msra.mxu0 0.0
    %4035 = vmatprep.subr.mxu0 0.0
    %4036 = vmatpush2.xpose.msra.mxu0 0.0
    %4037 = vmatprep.subr.mxu0 0.0
    %4038 = vmatpush2.xpose.msra.mxu0 0.0
    %4039 = vmatprep.mubr.f32.mxu0 0.0
    %4040 = vmatmul.mubr.f32.gmra.mxu0 %v3465
    %v4041 = vpop.f32.mrf.mxu0
    %v4042 = vadd.f32 0.0, %v4041
    %v4043 = vpop.f32.mrf.mxu0
    %4044 = vdwg.mxu0
    %4045 = vmatprep.subr.mxu0 0.0
    %4046 = vmatpush1.xpose.msra.mxu0 0.0
    %4047 = vmatprep.subr.mxu0 0.0
    %4048 = vmatpush1.xpose.msra.mxu0 0.0
    %4049 = vmatprep.subr.mxu0 0.0
    %4050 = vmatpush1.xpose.msra.mxu0 0.0
    %4051 = vmatprep.subr.mxu0 0.0
    %4052 = vmatpush1.xpose.msra.mxu0 0.0
    %4053 = vmatprep.subr.mxu0 0.0
    %4054 = vmatpush1.xpose.msra.mxu0 0.0
    %4055 = vmatprep.subr.mxu0 0.0
    %4056 = vmatpush1.xpose.msra.mxu0 0.0
    %4057 = vmatprep.subr.mxu0 0.0
    %4058 = vmatpush1.xpose.msra.mxu0 0.0
    %4059 = vmatprep.subr.mxu0 0.0
    %4060 = vmatpush1.xpose.msra.mxu0 0.0
    %4061 = vmatprep.subr.mxu0 0.0
    %4062 = vmatpush1.xpose.msra.mxu0 0.0
    %4063 = vmatprep.subr.mxu0 0.0
    %4064 = vmatpush1.xpose.msra.mxu0 0.0
    %4065 = vmatprep.subr.mxu0 0.0
    %4066 = vmatpush1.xpose.msra.mxu0 0.0
    %4067 = vmatprep.subr.mxu0 0.0
    %4068 = vmatpush1.xpose.msra.mxu0 0.0
    %4069 = vmatprep.subr.mxu0 0.0
    %4070 = vmatpush1.xpose.msra.mxu0 0.0
    %4071 = vmatprep.subr.mxu0 0.0
    %4072 = vmatpush1.xpose.msra.mxu0 0.0
    %4073 = vmatprep.subr.mxu0 0.0
    %4074 = vmatpush1.xpose.msra.mxu0 %v3506
    %4075 = vmatprep.subr.mxu0 0.0
    %4076 = vmatpush1.xpose.msra.mxu0 %v3505
    %4077 = vmatprep.subr.mxu0 0.0
    %4078 = vmatpush2.xpose.msra.mxu0 0.0
    %4079 = vmatprep.subr.mxu0 0.0
    %4080 = vmatpush2.xpose.msra.mxu0 0.0
    %4081 = vmatprep.subr.mxu0 0.0
    %4082 = vmatpush2.xpose.msra.mxu0 0.0
    %4083 = vmatprep.subr.mxu0 0.0
    %4084 = vmatpush2.xpose.msra.mxu0 0.0
    %4085 = vmatprep.subr.mxu0 0.0
    %4086 = vmatpush2.xpose.msra.mxu0 0.0
    %4087 = vmatprep.subr.mxu0 0.0
    %4088 = vmatpush2.xpose.msra.mxu0 0.0
    %4089 = vmatprep.subr.mxu0 0.0
    %4090 = vmatpush2.xpose.msra.mxu0 0.0
    %4091 = vmatprep.subr.mxu0 0.0
    %4092 = vmatpush2.xpose.msra.mxu0 0.0
    %4093 = vmatprep.subr.mxu0 0.0
    %4094 = vmatpush2.xpose.msra.mxu0 0.0
    %4095 = vmatprep.subr.mxu0 0.0
    %4096 = vmatpush2.xpose.msra.mxu0 0.0
    %4097 = vmatprep.subr.mxu0 0.0
    %4098 = vmatpush2.xpose.msra.mxu0 0.0
    %4099 = vmatprep.subr.mxu0 0.0
    %4100 = vmatpush2.xpose.msra.mxu0 0.0
    %4101 = vmatprep.subr.mxu0 0.0
    %4102 = vmatpush2.xpose.msra.mxu0 0.0
    %4103 = vmatprep.subr.mxu0 0.0
    %4104 = vmatpush2.xpose.msra.mxu0 0.0
    %4105 = vmatprep.subr.mxu0 0.0
    %4106 = vmatpush2.xpose.msra.mxu0 0.0
    %4107 = vmatprep.subr.mxu0 0.0
    %4108 = vmatpush2.xpose.msra.mxu0 0.0
    %4109 = vmatprep.mubr.f32.mxu0 0.0
    %4110 = vmatmul.mubr.f32.gmra.mxu0 %v3466
    %v4111 = vpop.f32.mrf.mxu0
    %v4112 = vadd.f32 0.0, %v4111
    %v4113 = vpop.f32.mrf.mxu0
    %4114 = vdwg.mxu0
    %4115 = vmatprep.subr.mxu0 0.0
    %4116 = vmatpush1.xpose.msra.mxu0 0.0
    %4117 = vmatprep.subr.mxu0 0.0
    %4118 = vmatpush1.xpose.msra.mxu0 0.0
    %4119 = vmatprep.subr.mxu0 0.0
    %4120 = vmatpush1.xpose.msra.mxu0 0.0
    %4121 = vmatprep.subr.mxu0 0.0
    %4122 = vmatpush1.xpose.msra.mxu0 0.0
    %4123 = vmatprep.subr.mxu0 0.0
    %4124 = vmatpush1.xpose.msra.mxu0 0.0
    %4125 = vmatprep.subr.mxu0 0.0
    %4126 = vmatpush1.xpose.msra.mxu0 0.0
    %4127 = vmatprep.subr.mxu0 0.0
    %4128 = vmatpush1.xpose.msra.mxu0 0.0
    %4129 = vmatprep.subr.mxu0 0.0
    %4130 = vmatpush1.xpose.msra.mxu0 0.0
    %4131 = vmatprep.subr.mxu0 0.0
    %4132 = vmatpush1.xpose.msra.mxu0 0.0
    %4133 = vmatprep.subr.mxu0 0.0
    %4134 = vmatpush1.xpose.msra.mxu0 0.0
    %4135 = vmatprep.subr.mxu0 0.0
    %4136 = vmatpush1.xpose.msra.mxu0 0.0
    %4137 = vmatprep.subr.mxu0 0.0
    %4138 = vmatpush1.xpose.msra.mxu0 0.0
    %4139 = vmatprep.subr.mxu0 0.0
    %4140 = vmatpush1.xpose.msra.mxu0 0.0
    %4141 = vmatprep.subr.mxu0 0.0
    %4142 = vmatpush1.xpose.msra.mxu0 0.0
    %4143 = vmatprep.subr.mxu0 0.0
    %4144 = vmatpush1.xpose.msra.mxu0 %v3508
    %4145 = vmatprep.subr.mxu0 0.0
    %4146 = vmatpush1.xpose.msra.mxu0 %v3507
    %4147 = vmatprep.subr.mxu0 0.0
    %4148 = vmatpush2.xpose.msra.mxu0 0.0
    %4149 = vmatprep.subr.mxu0 0.0
    %4150 = vmatpush2.xpose.msra.mxu0 0.0
    %4151 = vmatprep.subr.mxu0 0.0
    %4152 = vmatpush2.xpose.msra.mxu0 0.0
    %4153 = vmatprep.subr.mxu0 0.0
    %4154 = vmatpush2.xpose.msra.mxu0 0.0
    %4155 = vmatprep.subr.mxu0 0.0
    %4156 = vmatpush2.xpose.msra.mxu0 0.0
    %4157 = vmatprep.subr.mxu0 0.0
    %4158 = vmatpush2.xpose.msra.mxu0 0.0
    %4159 = vmatprep.subr.mxu0 0.0
    %4160 = vmatpush2.xpose.msra.mxu0 0.0
    %4161 = vmatprep.subr.mxu0 0.0
    %4162 = vmatpush2.xpose.msra.mxu0 0.0
    %4163 = vmatprep.subr.mxu0 0.0
    %4164 = vmatpush2.xpose.msra.mxu0 0.0
    %4165 = vmatprep.subr.mxu0 0.0
    %4166 = vmatpush2.xpose.msra.mxu0 0.0
    %4167 = vmatprep.subr.mxu0 0.0
    %4168 = vmatpush2.xpose.msra.mxu0 0.0
    %4169 = vmatprep.subr.mxu0 0.0
    %4170 = vmatpush2.xpose.msra.mxu0 0.0
    %4171 = vmatprep.subr.mxu0 0.0
    %4172 = vmatpush2.xpose.msra.mxu0 0.0
    %4173 = vmatprep.subr.mxu0 0.0
    %4174 = vmatpush2.xpose.msra.mxu0 0.0
    %4175 = vmatprep.subr.mxu0 0.0
    %4176 = vmatpush2.xpose.msra.mxu0 0.0
    %4177 = vmatprep.subr.mxu0 0.0
    %4178 = vmatpush2.xpose.msra.mxu0 0.0
    %4179 = vmatprep.mubr.f32.mxu0 0.0
    %4180 = vmatmul.mubr.f32.gmra.mxu0 %v3467
    %v4181 = vpop.f32.mrf.mxu0
    %v4182 = vadd.f32 0.0, %v4181
    %v4183 = vpop.f32.mrf.mxu0
    %4184 = vdwg.mxu0
    %4185 = vmatprep.subr.mxu0 0.0
    %4186 = vmatpush1.xpose.msra.mxu0 0.0
    %4187 = vmatprep.subr.mxu0 0.0
    %4188 = vmatpush1.xpose.msra.mxu0 0.0
    %4189 = vmatprep.subr.mxu0 0.0
    %4190 = vmatpush1.xpose.msra.mxu0 0.0
    %4191 = vmatprep.subr.mxu0 0.0
    %4192 = vmatpush1.xpose.msra.mxu0 0.0
    %4193 = vmatprep.subr.mxu0 0.0
    %4194 = vmatpush1.xpose.msra.mxu0 0.0
    %4195 = vmatprep.subr.mxu0 0.0
    %4196 = vmatpush1.xpose.msra.mxu0 0.0
    %4197 = vmatprep.subr.mxu0 0.0
    %4198 = vmatpush1.xpose.msra.mxu0 0.0
    %4199 = vmatprep.subr.mxu0 0.0
    %4200 = vmatpush1.xpose.msra.mxu0 0.0
    %4201 = vmatprep.subr.mxu0 0.0
    %4202 = vmatpush1.xpose.msra.mxu0 0.0
    %4203 = vmatprep.subr.mxu0 0.0
    %4204 = vmatpush1.xpose.msra.mxu0 0.0
    %4205 = vmatprep.subr.mxu0 0.0
    %4206 = vmatpush1.xpose.msra.mxu0 0.0
    %4207 = vmatprep.subr.mxu0 0.0
    %4208 = vmatpush1.xpose.msra.mxu0 0.0
    %4209 = vmatprep.subr.mxu0 0.0
    %4210 = vmatpush1.xpose.msra.mxu0 0.0
    %4211 = vmatprep.subr.mxu0 0.0
    %4212 = vmatpush1.xpose.msra.mxu0 0.0
    %4213 = vmatprep.subr.mxu0 0.0
    %4214 = vmatpush1.xpose.msra.mxu0 %v3510
    %4215 = vmatprep.subr.mxu0 0.0
    %4216 = vmatpush1.xpose.msra.mxu0 %v3509
    %4217 = vmatprep.subr.mxu0 0.0
    %4218 = vmatpush2.xpose.msra.mxu0 0.0
    %4219 = vmatprep.subr.mxu0 0.0
    %4220 = vmatpush2.xpose.msra.mxu0 0.0
    %4221 = vmatprep.subr.mxu0 0.0
    %4222 = vmatpush2.xpose.msra.mxu0 0.0
    %4223 = vmatprep.subr.mxu0 0.0
    %4224 = vmatpush2.xpose.msra.mxu0 0.0
    %4225 = vmatprep.subr.mxu0 0.0
    %4226 = vmatpush2.xpose.msra.mxu0 0.0
    %4227 = vmatprep.subr.mxu0 0.0
    %4228 = vmatpush2.xpose.msra.mxu0 0.0
    %4229 = vmatprep.subr.mxu0 0.0
    %4230 = vmatpush2.xpose.msra.mxu0 0.0
    %4231 = vmatprep.subr.mxu0 0.0
    %4232 = vmatpush2.xpose.msra.mxu0 0.0
    %4233 = vmatprep.subr.mxu0 0.0
    %4234 = vmatpush2.xpose.msra.mxu0 0.0
    %4235 = vmatprep.subr.mxu0 0.0
    %4236 = vmatpush2.xpose.msra.mxu0 0.0
    %4237 = vmatprep.subr.mxu0 0.0
    %4238 = vmatpush2.xpose.msra.mxu0 0.0
    %4239 = vmatprep.subr.mxu0 0.0
    %4240 = vmatpush2.xpose.msra.mxu0 0.0
    %4241 = vmatprep.subr.mxu0 0.0
    %4242 = vmatpush2.xpose.msra.mxu0 0.0
    %4243 = vmatprep.subr.mxu0 0.0
    %4244 = vmatpush2.xpose.msra.mxu0 0.0
    %4245 = vmatprep.subr.mxu0 0.0
    %4246 = vmatpush2.xpose.msra.mxu0 0.0
    %4247 = vmatprep.subr.mxu0 0.0
    %4248 = vmatpush2.xpose.msra.mxu0 0.0
    %4249 = vmatprep.mubr.f32.mxu0 0.0
    %4250 = vmatmul.mubr.f32.gmra.mxu0 %v3468
    %v4251 = vpop.f32.mrf.mxu0
    %v4252 = vadd.f32 0.0, %v4251
    %v4253 = vpop.f32.mrf.mxu0
    %4254 = vdwg.mxu0
    %4255 = vmatprep.subr.mxu0 0.0
    %4256 = vmatpush1.xpose.msra.mxu0 0.0
    %4257 = vmatprep.subr.mxu0 0.0
    %4258 = vmatpush1.xpose.msra.mxu0 0.0
    %4259 = vmatprep.subr.mxu0 0.0
    %4260 = vmatpush1.xpose.msra.mxu0 0.0
    %4261 = vmatprep.subr.mxu0 0.0
    %4262 = vmatpush1.xpose.msra.mxu0 0.0
    %4263 = vmatprep.subr.mxu0 0.0
    %4264 = vmatpush1.xpose.msra.mxu0 0.0
    %4265 = vmatprep.subr.mxu0 0.0
    %4266 = vmatpush1.xpose.msra.mxu0 0.0
    %4267 = vmatprep.subr.mxu0 0.0
    %4268 = vmatpush1.xpose.msra.mxu0 0.0
    %4269 = vmatprep.subr.mxu0 0.0
    %4270 = vmatpush1.xpose.msra.mxu0 0.0
    %4271 = vmatprep.subr.mxu0 0.0
    %4272 = vmatpush1.xpose.msra.mxu0 0.0
    %4273 = vmatprep.subr.mxu0 0.0
    %4274 = vmatpush1.xpose.msra.mxu0 0.0
    %4275 = vmatprep.subr.mxu0 0.0
    %4276 = vmatpush1.xpose.msra.mxu0 0.0
    %4277 = vmatprep.subr.mxu0 0.0
    %4278 = vmatpush1.xpose.msra.mxu0 0.0
    %4279 = vmatprep.subr.mxu0 0.0
    %4280 = vmatpush1.xpose.msra.mxu0 0.0
    %4281 = vmatprep.subr.mxu0 0.0
    %4282 = vmatpush1.xpose.msra.mxu0 0.0
    %4283 = vmatprep.subr.mxu0 0.0
    %4284 = vmatpush1.xpose.msra.mxu0 %v3512
    %4285 = vmatprep.subr.mxu0 0.0
    %4286 = vmatpush1.xpose.msra.mxu0 %v3511
    %4287 = vmatprep.subr.mxu0 0.0
    %4288 = vmatpush2.xpose.msra.mxu0 0.0
    %4289 = vmatprep.subr.mxu0 0.0
    %4290 = vmatpush2.xpose.msra.mxu0 0.0
    %4291 = vmatprep.subr.mxu0 0.0
    %4292 = vmatpush2.xpose.msra.mxu0 0.0
    %4293 = vmatprep.subr.mxu0 0.0
    %4294 = vmatpush2.xpose.msra.mxu0 0.0
    %4295 = vmatprep.subr.mxu0 0.0
    %4296 = vmatpush2.xpose.msra.mxu0 0.0
    %4297 = vmatprep.subr.mxu0 0.0
    %4298 = vmatpush2.xpose.msra.mxu0 0.0
    %4299 = vmatprep.subr.mxu0 0.0
    %4300 = vmatpush2.xpose.msra.mxu0 0.0
    %4301 = vmatprep.subr.mxu0 0.0
    %4302 = vmatpush2.xpose.msra.mxu0 0.0
    %4303 = vmatprep.subr.mxu0 0.0
    %4304 = vmatpush2.xpose.msra.mxu0 0.0
    %4305 = vmatprep.subr.mxu0 0.0
    %4306 = vmatpush2.xpose.msra.mxu0 0.0
    %4307 = vmatprep.subr.mxu0 0.0
    %4308 = vmatpush2.xpose.msra.mxu0 0.0
    %4309 = vmatprep.subr.mxu0 0.0
    %4310 = vmatpush2.xpose.msra.mxu0 0.0
    %4311 = vmatprep.subr.mxu0 0.0
    %4312 = vmatpush2.xpose.msra.mxu0 0.0
    %4313 = vmatprep.subr.mxu0 0.0
    %4314 = vmatpush2.xpose.msra.mxu0 0.0
    %4315 = vmatprep.subr.mxu0 0.0
    %4316 = vmatpush2.xpose.msra.mxu0 0.0
    %4317 = vmatprep.subr.mxu0 0.0
    %4318 = vmatpush2.xpose.msra.mxu0 0.0
    %4319 = vmatprep.mubr.f32.mxu0 0.0
    %4320 = vmatmul.mubr.f32.gmra.mxu0 %v3469
    %v4321 = vpop.f32.mrf.mxu0
    %v4322 = vadd.f32 0.0, %v4321
    %v4323 = vpop.f32.mrf.mxu0
    %4324 = vdwg.mxu0
    %4325 = vmatprep.subr.mxu0 0.0
    %4326 = vmatpush1.xpose.msra.mxu0 0.0
    %4327 = vmatprep.subr.mxu0 0.0
    %4328 = vmatpush1.xpose.msra.mxu0 0.0
    %4329 = vmatprep.subr.mxu0 0.0
    %4330 = vmatpush1.xpose.msra.mxu0 0.0
    %4331 = vmatprep.subr.mxu0 0.0
    %4332 = vmatpush1.xpose.msra.mxu0 0.0
    %4333 = vmatprep.subr.mxu0 0.0
    %4334 = vmatpush1.xpose.msra.mxu0 0.0
    %4335 = vmatprep.subr.mxu0 0.0
    %4336 = vmatpush1.xpose.msra.mxu0 0.0
    %4337 = vmatprep.subr.mxu0 0.0
    %4338 = vmatpush1.xpose.msra.mxu0 0.0
    %4339 = vmatprep.subr.mxu0 0.0
    %4340 = vmatpush1.xpose.msra.mxu0 0.0
    %4341 = vmatprep.subr.mxu0 0.0
    %4342 = vmatpush1.xpose.msra.mxu0 0.0
    %4343 = vmatprep.subr.mxu0 0.0
    %4344 = vmatpush1.xpose.msra.mxu0 0.0
    %4345 = vmatprep.subr.mxu0 0.0
    %4346 = vmatpush1.xpose.msra.mxu0 0.0
    %4347 = vmatprep.subr.mxu0 0.0
    %4348 = vmatpush1.xpose.msra.mxu0 0.0
    %4349 = vmatprep.subr.mxu0 0.0
    %4350 = vmatpush1.xpose.msra.mxu0 0.0
    %4351 = vmatprep.subr.mxu0 0.0
    %4352 = vmatpush1.xpose.msra.mxu0 0.0
    %4353 = vmatprep.subr.mxu0 0.0
    %4354 = vmatpush1.xpose.msra.mxu0 %v3514
    %4355 = vmatprep.subr.mxu0 0.0
    %4356 = vmatpush1.xpose.msra.mxu0 %v3513
    %4357 = vmatprep.subr.mxu0 0.0
    %4358 = vmatpush2.xpose.msra.mxu0 0.0
    %4359 = vmatprep.subr.mxu0 0.0
    %4360 = vmatpush2.xpose.msra.mxu0 0.0
    %4361 = vmatprep.subr.mxu0 0.0
    %4362 = vmatpush2.xpose.msra.mxu0 0.0
    %4363 = vmatprep.subr.mxu0 0.0
    %4364 = vmatpush2.xpose.msra.mxu0 0.0
    %4365 = vmatprep.subr.mxu0 0.0
    %4366 = vmatpush2.xpose.msra.mxu0 0.0
    %4367 = vmatprep.subr.mxu0 0.0
    %4368 = vmatpush2.xpose.msra.mxu0 0.0
    %4369 = vmatprep.subr.mxu0 0.0
    %4370 = vmatpush2.xpose.msra.mxu0 0.0
    %4371 = vmatprep.subr.mxu0 0.0
    %4372 = vmatpush2.xpose.msra.mxu0 0.0
    %4373 = vmatprep.subr.mxu0 0.0
    %4374 = vmatpush2.xpose.msra.mxu0 0.0
    %4375 = vmatprep.subr.mxu0 0.0
    %4376 = vmatpush2.xpose.msra.mxu0 0.0
    %4377 = vmatprep.subr.mxu0 0.0
    %4378 = vmatpush2.xpose.msra.mxu0 0.0
    %4379 = vmatprep.subr.mxu0 0.0
    %4380 = vmatpush2.xpose.msra.mxu0 0.0
    %4381 = vmatprep.subr.mxu0 0.0
    %4382 = vmatpush2.xpose.msra.mxu0 0.0
    %4383 = vmatprep.subr.mxu0 0.0
    %4384 = vmatpush2.xpose.msra.mxu0 0.0
    %4385 = vmatprep.subr.mxu0 0.0
    %4386 = vmatpush2.xpose.msra.mxu0 0.0
    %4387 = vmatprep.subr.mxu0 0.0
    %4388 = vmatpush2.xpose.msra.mxu0 0.0
    %4389 = vmatprep.mubr.f32.mxu0 0.0
    %4390 = vmatmul.mubr.f32.gmra.mxu0 %v3470
    %v4391 = vpop.f32.mrf.mxu0
    %v4392 = vadd.f32 0.0, %v4391
    %v4393 = vpop.f32.mrf.mxu0
    %4394 = vdwg.mxu0
    %4395 = vmatprep.subr.mxu0 0.0
    %4396 = vmatpush1.xpose.msra.mxu0 0.0
    %4397 = vmatprep.subr.mxu0 0.0
    %4398 = vmatpush1.xpose.msra.mxu0 0.0
    %4399 = vmatprep.subr.mxu0 0.0
    %4400 = vmatpush1.xpose.msra.mxu0 0.0
    %4401 = vmatprep.subr.mxu0 0.0
    %4402 = vmatpush1.xpose.msra.mxu0 0.0
    %4403 = vmatprep.subr.mxu0 0.0
    %4404 = vmatpush1.xpose.msra.mxu0 0.0
    %4405 = vmatprep.subr.mxu0 0.0
    %4406 = vmatpush1.xpose.msra.mxu0 0.0
    %4407 = vmatprep.subr.mxu0 0.0
    %4408 = vmatpush1.xpose.msra.mxu0 0.0
    %4409 = vmatprep.subr.mxu0 0.0
    %4410 = vmatpush1.xpose.msra.mxu0 0.0
    %4411 = vmatprep.subr.mxu0 0.0
    %4412 = vmatpush1.xpose.msra.mxu0 0.0
    %4413 = vmatprep.subr.mxu0 0.0
    %4414 = vmatpush1.xpose.msra.mxu0 0.0
    %4415 = vmatprep.subr.mxu0 0.0
    %4416 = vmatpush1.xpose.msra.mxu0 0.0
    %4417 = vmatprep.subr.mxu0 0.0
    %4418 = vmatpush1.xpose.msra.mxu0 0.0
    %4419 = vmatprep.subr.mxu0 0.0
    %4420 = vmatpush1.xpose.msra.mxu0 0.0
    %4421 = vmatprep.subr.mxu0 0.0
    %4422 = vmatpush1.xpose.msra.mxu0 0.0
    %4423 = vmatprep.subr.mxu0 0.0
    %4424 = vmatpush1.xpose.msra.mxu0 %v3516
    %4425 = vmatprep.subr.mxu0 0.0
    %4426 = vmatpush1.xpose.msra.mxu0 %v3515
    %4427 = vmatprep.subr.mxu0 0.0
    %4428 = vmatpush2.xpose.msra.mxu0 0.0
    %4429 = vmatprep.subr.mxu0 0.0
    %4430 = vmatpush2.xpose.msra.mxu0 0.0
    %4431 = vmatprep.subr.mxu0 0.0
    %4432 = vmatpush2.xpose.msra.mxu0 0.0
    %4433 = vmatprep.subr.mxu0 0.0
    %4434 = vmatpush2.xpose.msra.mxu0 0.0
    %4435 = vmatprep.subr.mxu0 0.0
    %4436 = vmatpush2.xpose.msra.mxu0 0.0
    %4437 = vmatprep.subr.mxu0 0.0
    %4438 = vmatpush2.xpose.msra.mxu0 0.0
    %4439 = vmatprep.subr.mxu0 0.0
    %4440 = vmatpush2.xpose.msra.mxu0 0.0
    %4441 = vmatprep.subr.mxu0 0.0
    %4442 = vmatpush2.xpose.msra.mxu0 0.0
    %4443 = vmatprep.subr.mxu0 0.0
    %4444 = vmatpush2.xpose.msra.mxu0 0.0
    %4445 = vmatprep.subr.mxu0 0.0
    %4446 = vmatpush2.xpose.msra.mxu0 0.0
    %4447 = vmatprep.subr.mxu0 0.0
    %4448 = vmatpush2.xpose.msra.mxu0 0.0
    %4449 = vmatprep.subr.mxu0 0.0
    %4450 = vmatpush2.xpose.msra.mxu0 0.0
    %4451 = vmatprep.subr.mxu0 0.0
    %4452 = vmatpush2.xpose.msra.mxu0 0.0
    %4453 = vmatprep.subr.mxu0 0.0
    %4454 = vmatpush2.xpose.msra.mxu0 0.0
    %4455 = vmatprep.subr.mxu0 0.0
    %4456 = vmatpush2.xpose.msra.mxu0 0.0
    %4457 = vmatprep.subr.mxu0 0.0
    %4458 = vmatpush2.xpose.msra.mxu0 0.0
    %4459 = vmatprep.mubr.f32.mxu0 0.0
    %4460 = vmatmul.mubr.f32.gmra.mxu0 %v3471
    %v4461 = vpop.f32.mrf.mxu0
    %v4462 = vadd.f32 0.0, %v4461
    %v4463 = vpop.f32.mrf.mxu0
    %4464 = vdwg.mxu0
    %4465 = vmatprep.subr.mxu0 0.0
    %4466 = vmatpush1.xpose.msra.mxu0 0.0
    %4467 = vmatprep.subr.mxu0 0.0
    %4468 = vmatpush1.xpose.msra.mxu0 0.0
    %4469 = vmatprep.subr.mxu0 0.0
    %4470 = vmatpush1.xpose.msra.mxu0 0.0
    %4471 = vmatprep.subr.mxu0 0.0
    %4472 = vmatpush1.xpose.msra.mxu0 0.0
    %4473 = vmatprep.subr.mxu0 0.0
    %4474 = vmatpush1.xpose.msra.mxu0 0.0
    %4475 = vmatprep.subr.mxu0 0.0
    %4476 = vmatpush1.xpose.msra.mxu0 0.0
    %4477 = vmatprep.subr.mxu0 0.0
    %4478 = vmatpush1.xpose.msra.mxu0 0.0
    %4479 = vmatprep.subr.mxu0 0.0
    %4480 = vmatpush1.xpose.msra.mxu0 0.0
    %4481 = vmatprep.subr.mxu0 0.0
    %4482 = vmatpush1.xpose.msra.mxu0 0.0
    %4483 = vmatprep.subr.mxu0 0.0
    %4484 = vmatpush1.xpose.msra.mxu0 0.0
    %4485 = vmatprep.subr.mxu0 0.0
    %4486 = vmatpush1.xpose.msra.mxu0 0.0
    %4487 = vmatprep.subr.mxu0 0.0
    %4488 = vmatpush1.xpose.msra.mxu0 0.0
    %4489 = vmatprep.subr.mxu0 0.0
    %4490 = vmatpush1.xpose.msra.mxu0 0.0
    %4491 = vmatprep.subr.mxu0 0.0
    %4492 = vmatpush1.xpose.msra.mxu0 0.0
    %4493 = vmatprep.subr.mxu0 0.0
    %4494 = vmatpush1.xpose.msra.mxu0 %v3518
    %4495 = vmatprep.subr.mxu0 0.0
    %4496 = vmatpush1.xpose.msra.mxu0 %v3517
    %4497 = vmatprep.subr.mxu0 0.0
    %4498 = vmatpush2.xpose.msra.mxu0 0.0
    %4499 = vmatprep.subr.mxu0 0.0
    %4500 = vmatpush2.xpose.msra.mxu0 0.0
    %4501 = vmatprep.subr.mxu0 0.0
    %4502 = vmatpush2.xpose.msra.mxu0 0.0
    %4503 = vmatprep.subr.mxu0 0.0
    %4504 = vmatpush2.xpose.msra.mxu0 0.0
    %4505 = vmatprep.subr.mxu0 0.0
    %4506 = vmatpush2.xpose.msra.mxu0 0.0
    %4507 = vmatprep.subr.mxu0 0.0
    %4508 = vmatpush2.xpose.msra.mxu0 0.0
    %4509 = vmatprep.subr.mxu0 0.0
    %4510 = vmatpush2.xpose.msra.mxu0 0.0
    %4511 = vmatprep.subr.mxu0 0.0
    %4512 = vmatpush2.xpose.msra.mxu0 0.0
    %4513 = vmatprep.subr.mxu0 0.0
    %4514 = vmatpush2.xpose.msra.mxu0 0.0
    %4515 = vmatprep.subr.mxu0 0.0
    %4516 = vmatpush2.xpose.msra.mxu0 0.0
    %4517 = vmatprep.subr.mxu0 0.0
    %4518 = vmatpush2.xpose.msra.mxu0 0.0
    %4519 = vmatprep.subr.mxu0 0.0
    %4520 = vmatpush2.xpose.msra.mxu0 0.0
    %4521 = vmatprep.subr.mxu0 0.0
    %4522 = vmatpush2.xpose.msra.mxu0 0.0
    %4523 = vmatprep.subr.mxu0 0.0
    %4524 = vmatpush2.xpose.msra.mxu0 0.0
    %4525 = vmatprep.subr.mxu0 0.0
    %4526 = vmatpush2.xpose.msra.mxu0 0.0
    %4527 = vmatprep.subr.mxu0 0.0
    %4528 = vmatpush2.xpose.msra.mxu0 0.0
    %4529 = vmatprep.mubr.f32.mxu0 0.0
    %4530 = vmatmul.mubr.f32.gmra.mxu0 %v3472
    %v4531 = vpop.f32.mrf.mxu0
    %v4532 = vadd.f32 0.0, %v4531
    %v4533 = vpop.f32.mrf.mxu0
    %4534 = vdwg.mxu0
    %4535 = vmatprep.subr.mxu0 0.0
    %4536 = vmatpush1.xpose.msra.mxu0 0.0
    %4537 = vmatprep.subr.mxu0 0.0
    %4538 = vmatpush1.xpose.msra.mxu0 0.0
    %4539 = vmatprep.subr.mxu0 0.0
    %4540 = vmatpush1.xpose.msra.mxu0 0.0
    %4541 = vmatprep.subr.mxu0 0.0
    %4542 = vmatpush1.xpose.msra.mxu0 0.0
    %4543 = vmatprep.subr.mxu0 0.0
    %4544 = vmatpush1.xpose.msra.mxu0 0.0
    %4545 = vmatprep.subr.mxu0 0.0
    %4546 = vmatpush1.xpose.msra.mxu0 0.0
    %4547 = vmatprep.subr.mxu0 0.0
    %4548 = vmatpush1.xpose.msra.mxu0 0.0
    %4549 = vmatprep.subr.mxu0 0.0
    %4550 = vmatpush1.xpose.msra.mxu0 0.0
    %4551 = vmatprep.subr.mxu0 0.0
    %4552 = vmatpush1.xpose.msra.mxu0 0.0
    %4553 = vmatprep.subr.mxu0 0.0
    %4554 = vmatpush1.xpose.msra.mxu0 0.0
    %4555 = vmatprep.subr.mxu0 0.0
    %4556 = vmatpush1.xpose.msra.mxu0 0.0
    %4557 = vmatprep.subr.mxu0 0.0
    %4558 = vmatpush1.xpose.msra.mxu0 0.0
    %4559 = vmatprep.subr.mxu0 0.0
    %4560 = vmatpush1.xpose.msra.mxu0 0.0
    %4561 = vmatprep.subr.mxu0 0.0
    %4562 = vmatpush1.xpose.msra.mxu0 0.0
    %4563 = vmatprep.subr.mxu0 0.0
    %4564 = vmatpush1.xpose.msra.mxu0 %v3520
    %4565 = vmatprep.subr.mxu0 0.0
    %4566 = vmatpush1.xpose.msra.mxu0 %v3519
    %4567 = vmatprep.subr.mxu0 0.0
    %4568 = vmatpush2.xpose.msra.mxu0 0.0
    %4569 = vmatprep.subr.mxu0 0.0
    %4570 = vmatpush2.xpose.msra.mxu0 0.0
    %4571 = vmatprep.subr.mxu0 0.0
    %4572 = vmatpush2.xpose.msra.mxu0 0.0
    %4573 = vmatprep.subr.mxu0 0.0
    %4574 = vmatpush2.xpose.msra.mxu0 0.0
    %4575 = vmatprep.subr.mxu0 0.0
    %4576 = vmatpush2.xpose.msra.mxu0 0.0
    %4577 = vmatprep.subr.mxu0 0.0
    %4578 = vmatpush2.xpose.msra.mxu0 0.0
    %4579 = vmatprep.subr.mxu0 0.0
    %4580 = vmatpush2.xpose.msra.mxu0 0.0
    %4581 = vmatprep.subr.mxu0 0.0
    %4582 = vmatpush2.xpose.msra.mxu0 0.0
    %4583 = vmatprep.subr.mxu0 0.0
    %4584 = vmatpush2.xpose.msra.mxu0 0.0
    %4585 = vmatprep.subr.mxu0 0.0
    %4586 = vmatpush2.xpose.msra.mxu0 0.0
    %4587 = vmatprep.subr.mxu0 0.0
    %4588 = vmatpush2.xpose.msra.mxu0 0.0
    %4589 = vmatprep.subr.mxu0 0.0
    %4590 = vmatpush2.xpose.msra.mxu0 0.0
    %4591 = vmatprep.subr.mxu0 0.0
    %4592 = vmatpush2.xpose.msra.mxu0 0.0
    %4593 = vmatprep.subr.mxu0 0.0
    %4594 = vmatpush2.xpose.msra.mxu0 0.0
    %4595 = vmatprep.subr.mxu0 0.0
    %4596 = vmatpush2.xpose.msra.mxu0 0.0
    %4597 = vmatprep.subr.mxu0 0.0
    %4598 = vmatpush2.xpose.msra.mxu0 0.0
    %4599 = vmatprep.mubr.f32.mxu0 0.0
    %4600 = vmatmul.mubr.f32.gmra.mxu0 %v3473
    %v4601 = vpop.f32.mrf.mxu0
    %v4602 = vadd.f32 0.0, %v4601
    %v4603 = vpop.f32.mrf.mxu0
    %4604 = vdwg.mxu0
    %4605 = vmatprep.subr.mxu0 0.0
    %4606 = vmatpush1.xpose.msra.mxu0 0.0
    %4607 = vmatprep.subr.mxu0 0.0
    %4608 = vmatpush1.xpose.msra.mxu0 0.0
    %4609 = vmatprep.subr.mxu0 0.0
    %4610 = vmatpush1.xpose.msra.mxu0 0.0
    %4611 = vmatprep.subr.mxu0 0.0
    %4612 = vmatpush1.xpose.msra.mxu0 0.0
    %4613 = vmatprep.subr.mxu0 0.0
    %4614 = vmatpush1.xpose.msra.mxu0 0.0
    %4615 = vmatprep.subr.mxu0 0.0
    %4616 = vmatpush1.xpose.msra.mxu0 0.0
    %4617 = vmatprep.subr.mxu0 0.0
    %4618 = vmatpush1.xpose.msra.mxu0 0.0
    %4619 = vmatprep.subr.mxu0 0.0
    %4620 = vmatpush1.xpose.msra.mxu0 0.0
    %4621 = vmatprep.subr.mxu0 0.0
    %4622 = vmatpush1.xpose.msra.mxu0 0.0
    %4623 = vmatprep.subr.mxu0 0.0
    %4624 = vmatpush1.xpose.msra.mxu0 0.0
    %4625 = vmatprep.subr.mxu0 0.0
    %4626 = vmatpush1.xpose.msra.mxu0 0.0
    %4627 = vmatprep.subr.mxu0 0.0
    %4628 = vmatpush1.xpose.msra.mxu0 0.0
    %4629 = vmatprep.subr.mxu0 0.0
    %4630 = vmatpush1.xpose.msra.mxu0 0.0
    %4631 = vmatprep.subr.mxu0 0.0
    %4632 = vmatpush1.xpose.msra.mxu0 0.0
    %4633 = vmatprep.subr.mxu0 0.0
    %4634 = vmatpush1.xpose.msra.mxu0 %v3522
    %4635 = vmatprep.subr.mxu0 0.0
    %4636 = vmatpush1.xpose.msra.mxu0 %v3521
    %4637 = vmatprep.subr.mxu0 0.0
    %4638 = vmatpush2.xpose.msra.mxu0 0.0
    %4639 = vmatprep.subr.mxu0 0.0
    %4640 = vmatpush2.xpose.msra.mxu0 0.0
    %4641 = vmatprep.subr.mxu0 0.0
    %4642 = vmatpush2.xpose.msra.mxu0 0.0
    %4643 = vmatprep.subr.mxu0 0.0
    %4644 = vmatpush2.xpose.msra.mxu0 0.0
    %4645 = vmatprep.subr.mxu0 0.0
    %4646 = vmatpush2.xpose.msra.mxu0 0.0
    %4647 = vmatprep.subr.mxu0 0.0
    %4648 = vmatpush2.xpose.msra.mxu0 0.0
    %4649 = vmatprep.subr.mxu0 0.0
    %4650 = vmatpush2.xpose.msra.mxu0 0.0
    %4651 = vmatprep.subr.mxu0 0.0
    %4652 = vmatpush2.xpose.msra.mxu0 0.0
    %4653 = vmatprep.subr.mxu0 0.0
    %4654 = vmatpush2.xpose.msra.mxu0 0.0
    %4655 = vmatprep.subr.mxu0 0.0
    %4656 = vmatpush2.xpose.msra.mxu0 0.0
    %4657 = vmatprep.subr.mxu0 0.0
    %4658 = vmatpush2.xpose.msra.mxu0 0.0
    %4659 = vmatprep.subr.mxu0 0.0
    %4660 = vmatpush2.xpose.msra.mxu0 0.0
    %4661 = vmatprep.subr.mxu0 0.0
    %4662 = vmatpush2.xpose.msra.mxu0 0.0
    %4663 = vmatprep.subr.mxu0 0.0
    %4664 = vmatpush2.xpose.msra.mxu0 0.0
    %4665 = vmatprep.subr.mxu0 0.0
    %4666 = vmatpush2.xpose.msra.mxu0 0.0
    %4667 = vmatprep.subr.mxu0 0.0
    %4668 = vmatpush2.xpose.msra.mxu0 0.0
    %4669 = vmatprep.mubr.f32.mxu0 0.0
    %4670 = vmatmul.mubr.f32.gmra.mxu0 %v3474
    %v4671 = vpop.f32.mrf.mxu0
    %v4672 = vadd.f32 0.0, %v4671
    %v4673 = vpop.f32.mrf.mxu0
    %4674 = vdwg.mxu0
    %4675 = vmatprep.subr.mxu0 0.0
    %4676 = vmatpush1.xpose.msra.mxu0 0.0
    %4677 = vmatprep.subr.mxu0 0.0
    %4678 = vmatpush1.xpose.msra.mxu0 0.0
    %4679 = vmatprep.subr.mxu0 0.0
    %4680 = vmatpush1.xpose.msra.mxu0 0.0
    %4681 = vmatprep.subr.mxu0 0.0
    %4682 = vmatpush1.xpose.msra.mxu0 0.0
    %4683 = vmatprep.subr.mxu0 0.0
    %4684 = vmatpush1.xpose.msra.mxu0 0.0
    %4685 = vmatprep.subr.mxu0 0.0
    %4686 = vmatpush1.xpose.msra.mxu0 0.0
    %4687 = vmatprep.subr.mxu0 0.0
    %4688 = vmatpush1.xpose.msra.mxu0 0.0
    %4689 = vmatprep.subr.mxu0 0.0
    %4690 = vmatpush1.xpose.msra.mxu0 0.0
    %4691 = vmatprep.subr.mxu0 0.0
    %4692 = vmatpush1.xpose.msra.mxu0 0.0
    %4693 = vmatprep.subr.mxu0 0.0
    %4694 = vmatpush1.xpose.msra.mxu0 0.0
    %4695 = vmatprep.subr.mxu0 0.0
    %4696 = vmatpush1.xpose.msra.mxu0 0.0
    %4697 = vmatprep.subr.mxu0 0.0
    %4698 = vmatpush1.xpose.msra.mxu0 0.0
    %4699 = vmatprep.subr.mxu0 0.0
    %4700 = vmatpush1.xpose.msra.mxu0 0.0
    %4701 = vmatprep.subr.mxu0 0.0
    %4702 = vmatpush1.xpose.msra.mxu0 0.0
    %4703 = vmatprep.subr.mxu0 0.0
    %4704 = vmatpush1.xpose.msra.mxu0 %v3524
    %4705 = vmatprep.subr.mxu0 0.0
    %4706 = vmatpush1.xpose.msra.mxu0 %v3523
    %4707 = vmatprep.subr.mxu0 0.0
    %4708 = vmatpush2.xpose.msra.mxu0 0.0
    %4709 = vmatprep.subr.mxu0 0.0
    %4710 = vmatpush2.xpose.msra.mxu0 0.0
    %4711 = vmatprep.subr.mxu0 0.0
    %4712 = vmatpush2.xpose.msra.mxu0 0.0
    %4713 = vmatprep.subr.mxu0 0.0
    %4714 = vmatpush2.xpose.msra.mxu0 0.0
    %4715 = vmatprep.subr.mxu0 0.0
    %4716 = vmatpush2.xpose.msra.mxu0 0.0
    %4717 = vmatprep.subr.mxu0 0.0
    %4718 = vmatpush2.xpose.msra.mxu0 0.0
    %4719 = vmatprep.subr.mxu0 0.0
    %4720 = vmatpush2.xpose.msra.mxu0 0.0
    %4721 = vmatprep.subr.mxu0 0.0
    %4722 = vmatpush2.xpose.msra.mxu0 0.0
    %4723 = vmatprep.subr.mxu0 0.0
    %4724 = vmatpush2.xpose.msra.mxu0 0.0
    %4725 = vmatprep.subr.mxu0 0.0
    %4726 = vmatpush2.xpose.msra.mxu0 0.0
    %4727 = vmatprep.subr.mxu0 0.0
    %4728 = vmatpush2.xpose.msra.mxu0 0.0
    %4729 = vmatprep.subr.mxu0 0.0
    %4730 = vmatpush2.xpose.msra.mxu0 0.0
    %4731 = vmatprep.subr.mxu0 0.0
    %4732 = vmatpush2.xpose.msra.mxu0 0.0
    %4733 = vmatprep.subr.mxu0 0.0
    %4734 = vmatpush2.xpose.msra.mxu0 0.0
    %4735 = vmatprep.subr.mxu0 0.0
    %4736 = vmatpush2.xpose.msra.mxu0 0.0
    %4737 = vmatprep.subr.mxu0 0.0
    %4738 = vmatpush2.xpose.msra.mxu0 0.0
    %4739 = vmatprep.mubr.f32.mxu0 0.0
    %4740 = vmatmul.mubr.f32.gmra.mxu0 %v3475
    %v4741 = vpop.f32.mrf.mxu0
    %v4742 = vadd.f32 0.0, %v4741
    %v4743 = vpop.f32.mrf.mxu0
    %4744 = vdwg.mxu0
    %4745 = vmatprep.subr.mxu0 0.0
    %4746 = vmatpush1.xpose.msra.mxu0 0.0
    %4747 = vmatprep.subr.mxu0 0.0
    %4748 = vmatpush1.xpose.msra.mxu0 0.0
    %4749 = vmatprep.subr.mxu0 0.0
    %4750 = vmatpush1.xpose.msra.mxu0 0.0
    %4751 = vmatprep.subr.mxu0 0.0
    %4752 = vmatpush1.xpose.msra.mxu0 0.0
    %4753 = vmatprep.subr.mxu0 0.0
    %4754 = vmatpush1.xpose.msra.mxu0 0.0
    %4755 = vmatprep.subr.mxu0 0.0
    %4756 = vmatpush1.xpose.msra.mxu0 0.0
    %4757 = vmatprep.subr.mxu0 0.0
    %4758 = vmatpush1.xpose.msra.mxu0 0.0
    %4759 = vmatprep.subr.mxu0 0.0
    %4760 = vmatpush1.xpose.msra.mxu0 0.0
    %4761 = vmatprep.subr.mxu0 0.0
    %4762 = vmatpush1.xpose.msra.mxu0 0.0
    %4763 = vmatprep.subr.mxu0 0.0
    %4764 = vmatpush1.xpose.msra.mxu0 0.0
    %4765 = vmatprep.subr.mxu0 0.0
    %4766 = vmatpush1.xpose.msra.mxu0 0.0
    %4767 = vmatprep.subr.mxu0 0.0
    %4768 = vmatpush1.xpose.msra.mxu0 0.0
    %4769 = vmatprep.subr.mxu0 0.0
    %4770 = vmatpush1.xpose.msra.mxu0 0.0
    %4771 = vmatprep.subr.mxu0 0.0
    %4772 = vmatpush1.xpose.msra.mxu0 0.0
    %4773 = vmatprep.subr.mxu0 0.0
    %4774 = vmatpush1.xpose.msra.mxu0 %v3526
    %4775 = vmatprep.subr.mxu0 0.0
    %4776 = vmatpush1.xpose.msra.mxu0 %v3525
    %4777 = vmatprep.subr.mxu0 0.0
    %4778 = vmatpush2.xpose.msra.mxu0 0.0
    %4779 = vmatprep.subr.mxu0 0.0
    %4780 = vmatpush2.xpose.msra.mxu0 0.0
    %4781 = vmatprep.subr.mxu0 0.0
    %4782 = vmatpush2.xpose.msra.mxu0 0.0
    %4783 = vmatprep.subr.mxu0 0.0
    %4784 = vmatpush2.xpose.msra.mxu0 0.0
    %4785 = vmatprep.subr.mxu0 0.0
    %4786 = vmatpush2.xpose.msra.mxu0 0.0
    %4787 = vmatprep.subr.mxu0 0.0
    %4788 = vmatpush2.xpose.msra.mxu0 0.0
    %4789 = vmatprep.subr.mxu0 0.0
    %4790 = vmatpush2.xpose.msra.mxu0 0.0
    %4791 = vmatprep.subr.mxu0 0.0
    %4792 = vmatpush2.xpose.msra.mxu0 0.0
    %4793 = vmatprep.subr.mxu0 0.0
    %4794 = vmatpush2.xpose.msra.mxu0 0.0
    %4795 = vmatprep.subr.mxu0 0.0
    %4796 = vmatpush2.xpose.msra.mxu0 0.0
    %4797 = vmatprep.subr.mxu0 0.0
    %4798 = vmatpush2.xpose.msra.mxu0 0.0
    %4799 = vmatprep.subr.mxu0 0.0
    %4800 = vmatpush2.xpose.msra.mxu0 0.0
    %4801 = vmatprep.subr.mxu0 0.0
    %4802 = vmatpush2.xpose.msra.mxu0 0.0
    %4803 = vmatprep.subr.mxu0 0.0
    %4804 = vmatpush2.xpose.msra.mxu0 0.0
    %4805 = vmatprep.subr.mxu0 0.0
    %4806 = vmatpush2.xpose.msra.mxu0 0.0
    %4807 = vmatprep.subr.mxu0 0.0
    %4808 = vmatpush2.xpose.msra.mxu0 0.0
    %4809 = vmatprep.mubr.f32.mxu0 0.0
    %4810 = vmatmul.mubr.f32.gmra.mxu0 %v3476
    %v4811 = vpop.f32.mrf.mxu0
    %v4812 = vadd.f32 0.0, %v4811
    %v4813 = vpop.f32.mrf.mxu0
    %4814 = vdwg.mxu0
    %4815 = vmatprep.subr.mxu0 0.0
    %4816 = vmatpush1.xpose.msra.mxu0 0.0
    %4817 = vmatprep.subr.mxu0 0.0
    %4818 = vmatpush1.xpose.msra.mxu0 0.0
    %4819 = vmatprep.subr.mxu0 0.0
    %4820 = vmatpush1.xpose.msra.mxu0 0.0
    %4821 = vmatprep.subr.mxu0 0.0
    %4822 = vmatpush1.xpose.msra.mxu0 0.0
    %4823 = vmatprep.subr.mxu0 0.0
    %4824 = vmatpush1.xpose.msra.mxu0 0.0
    %4825 = vmatprep.subr.mxu0 0.0
    %4826 = vmatpush1.xpose.msra.mxu0 0.0
    %4827 = vmatprep.subr.mxu0 0.0
    %4828 = vmatpush1.xpose.msra.mxu0 0.0
    %4829 = vmatprep.subr.mxu0 0.0
    %4830 = vmatpush1.xpose.msra.mxu0 0.0
    %4831 = vmatprep.subr.mxu0 0.0
    %4832 = vmatpush1.xpose.msra.mxu0 0.0
    %4833 = vmatprep.subr.mxu0 0.0
    %4834 = vmatpush1.xpose.msra.mxu0 0.0
    %4835 = vmatprep.subr.mxu0 0.0
    %4836 = vmatpush1.xpose.msra.mxu0 0.0
    %4837 = vmatprep.subr.mxu0 0.0
    %4838 = vmatpush1.xpose.msra.mxu0 0.0
    %4839 = vmatprep.subr.mxu0 0.0
    %4840 = vmatpush1.xpose.msra.mxu0 0.0
    %4841 = vmatprep.subr.mxu0 0.0
    %4842 = vmatpush1.xpose.msra.mxu0 0.0
    %4843 = vmatprep.subr.mxu0 0.0
    %4844 = vmatpush1.xpose.msra.mxu0 %v3528
    %4845 = vmatprep.subr.mxu0 0.0
    %4846 = vmatpush1.xpose.msra.mxu0 %v3527
    %4847 = vmatprep.subr.mxu0 0.0
    %4848 = vmatpush2.xpose.msra.mxu0 0.0
    %4849 = vmatprep.subr.mxu0 0.0
    %4850 = vmatpush2.xpose.msra.mxu0 0.0
    %4851 = vmatprep.subr.mxu0 0.0
    %4852 = vmatpush2.xpose.msra.mxu0 0.0
    %4853 = vmatprep.subr.mxu0 0.0
    %4854 = vmatpush2.xpose.msra.mxu0 0.0
    %4855 = vmatprep.subr.mxu0 0.0
    %4856 = vmatpush2.xpose.msra.mxu0 0.0
    %4857 = vmatprep.subr.mxu0 0.0
    %4858 = vmatpush2.xpose.msra.mxu0 0.0
    %4859 = vmatprep.subr.mxu0 0.0
    %4860 = vmatpush2.xpose.msra.mxu0 0.0
    %4861 = vmatprep.subr.mxu0 0.0
    %4862 = vmatpush2.xpose.msra.mxu0 0.0
    %4863 = vmatprep.subr.mxu0 0.0
    %4864 = vmatpush2.xpose.msra.mxu0 0.0
    %4865 = vmatprep.subr.mxu0 0.0
    %4866 = vmatpush2.xpose.msra.mxu0 0.0
    %4867 = vmatprep.subr.mxu0 0.0
    %4868 = vmatpush2.xpose.msra.mxu0 0.0
    %4869 = vmatprep.subr.mxu0 0.0
    %4870 = vmatpush2.xpose.msra.mxu0 0.0
    %4871 = vmatprep.subr.mxu0 0.0
    %4872 = vmatpush2.xpose.msra.mxu0 0.0
    %4873 = vmatprep.subr.mxu0 0.0
    %4874 = vmatpush2.xpose.msra.mxu0 0.0
    %4875 = vmatprep.subr.mxu0 0.0
    %4876 = vmatpush2.xpose.msra.mxu0 0.0
    %4877 = vmatprep.subr.mxu0 0.0
    %4878 = vmatpush2.xpose.msra.mxu0 0.0
    %4879 = vmatprep.mubr.f32.mxu0 0.0
    %4880 = vmatmul.mubr.f32.gmra.mxu0 %v3477
    %v4881 = vpop.f32.mrf.mxu0
    %v4882 = vadd.f32 0.0, %v4881
    %v4883 = vpop.f32.mrf.mxu0
    %4884 = vdwg.mxu0
    %4885 = vmatprep.subr.mxu0 0.0
    %4886 = vmatpush1.xpose.msra.mxu0 0.0
    %4887 = vmatprep.subr.mxu0 0.0
    %4888 = vmatpush1.xpose.msra.mxu0 0.0
    %4889 = vmatprep.subr.mxu0 0.0
    %4890 = vmatpush1.xpose.msra.mxu0 0.0
    %4891 = vmatprep.subr.mxu0 0.0
    %4892 = vmatpush1.xpose.msra.mxu0 0.0
    %4893 = vmatprep.subr.mxu0 0.0
    %4894 = vmatpush1.xpose.msra.mxu0 0.0
    %4895 = vmatprep.subr.mxu0 0.0
    %4896 = vmatpush1.xpose.msra.mxu0 0.0
    %4897 = vmatprep.subr.mxu0 0.0
    %4898 = vmatpush1.xpose.msra.mxu0 0.0
    %4899 = vmatprep.subr.mxu0 0.0
    %4900 = vmatpush1.xpose.msra.mxu0 0.0
    %4901 = vmatprep.subr.mxu0 0.0
    %4902 = vmatpush1.xpose.msra.mxu0 0.0
    %4903 = vmatprep.subr.mxu0 0.0
    %4904 = vmatpush1.xpose.msra.mxu0 0.0
    %4905 = vmatprep.subr.mxu0 0.0
    %4906 = vmatpush1.xpose.msra.mxu0 0.0
    %4907 = vmatprep.subr.mxu0 0.0
    %4908 = vmatpush1.xpose.msra.mxu0 0.0
    %4909 = vmatprep.subr.mxu0 0.0
    %4910 = vmatpush1.xpose.msra.mxu0 0.0
    %4911 = vmatprep.subr.mxu0 0.0
    %4912 = vmatpush1.xpose.msra.mxu0 0.0
    %4913 = vmatprep.subr.mxu0 0.0
    %4914 = vmatpush1.xpose.msra.mxu0 %v3530
    %4915 = vmatprep.subr.mxu0 0.0
    %4916 = vmatpush1.xpose.msra.mxu0 %v3529
    %4917 = vmatprep.subr.mxu0 0.0
    %4918 = vmatpush2.xpose.msra.mxu0 0.0
    %4919 = vmatprep.subr.mxu0 0.0
    %4920 = vmatpush2.xpose.msra.mxu0 0.0
    %4921 = vmatprep.subr.mxu0 0.0
    %4922 = vmatpush2.xpose.msra.mxu0 0.0
    %4923 = vmatprep.subr.mxu0 0.0
    %4924 = vmatpush2.xpose.msra.mxu0 0.0
    %4925 = vmatprep.subr.mxu0 0.0
    %4926 = vmatpush2.xpose.msra.mxu0 0.0
    %4927 = vmatprep.subr.mxu0 0.0
    %4928 = vmatpush2.xpose.msra.mxu0 0.0
    %4929 = vmatprep.subr.mxu0 0.0
    %4930 = vmatpush2.xpose.msra.mxu0 0.0
    %4931 = vmatprep.subr.mxu0 0.0
    %4932 = vmatpush2.xpose.msra.mxu0 0.0
    %4933 = vmatprep.subr.mxu0 0.0
    %4934 = vmatpush2.xpose.msra.mxu0 0.0
    %4935 = vmatprep.subr.mxu0 0.0
    %4936 = vmatpush2.xpose.msra.mxu0 0.0
    %4937 = vmatprep.subr.mxu0 0.0
    %4938 = vmatpush2.xpose.msra.mxu0 0.0
    %4939 = vmatprep.subr.mxu0 0.0
    %4940 = vmatpush2.xpose.msra.mxu0 0.0
    %4941 = vmatprep.subr.mxu0 0.0
    %4942 = vmatpush2.xpose.msra.mxu0 0.0
    %4943 = vmatprep.subr.mxu0 0.0
    %4944 = vmatpush2.xpose.msra.mxu0 0.0
    %4945 = vmatprep.subr.mxu0 0.0
    %4946 = vmatpush2.xpose.msra.mxu0 0.0
    %4947 = vmatprep.subr.mxu0 0.0
    %4948 = vmatpush2.xpose.msra.mxu0 0.0
    %4949 = vmatprep.mubr.f32.mxu0 0.0
    %4950 = vmatmul.mubr.f32.gmra.mxu0 %v3478
    %v4951 = vpop.f32.mrf.mxu0
    %v4952 = vadd.f32 0.0, %v4951
    %v4953 = vpop.f32.mrf.mxu0
    %4954 = vdwg.mxu0
    %4955 = vmatprep.subr.mxu0 0.0
    %4956 = vmatpush1.xpose.msra.mxu0 0.0
    %4957 = vmatprep.subr.mxu0 0.0
    %4958 = vmatpush1.xpose.msra.mxu0 0.0
    %4959 = vmatprep.subr.mxu0 0.0
    %4960 = vmatpush1.xpose.msra.mxu0 0.0
    %4961 = vmatprep.subr.mxu0 0.0
    %4962 = vmatpush1.xpose.msra.mxu0 0.0
    %4963 = vmatprep.subr.mxu0 0.0
    %4964 = vmatpush1.xpose.msra.mxu0 0.0
    %4965 = vmatprep.subr.mxu0 0.0
    %4966 = vmatpush1.xpose.msra.mxu0 0.0
    %4967 = vmatprep.subr.mxu0 0.0
    %4968 = vmatpush1.xpose.msra.mxu0 0.0
    %4969 = vmatprep.subr.mxu0 0.0
    %4970 = vmatpush1.xpose.msra.mxu0 0.0
    %4971 = vmatprep.subr.mxu0 0.0
    %4972 = vmatpush1.xpose.msra.mxu0 0.0
    %4973 = vmatprep.subr.mxu0 0.0
    %4974 = vmatpush1.xpose.msra.mxu0 0.0
    %4975 = vmatprep.subr.mxu0 0.0
    %4976 = vmatpush1.xpose.msra.mxu0 0.0
    %4977 = vmatprep.subr.mxu0 0.0
    %4978 = vmatpush1.xpose.msra.mxu0 0.0
    %4979 = vmatprep.subr.mxu0 0.0
    %4980 = vmatpush1.xpose.msra.mxu0 0.0
    %4981 = vmatprep.subr.mxu0 0.0
    %4982 = vmatpush1.xpose.msra.mxu0 0.0
    %4983 = vmatprep.subr.mxu0 0.0
    %4984 = vmatpush1.xpose.msra.mxu0 %v3532
    %4985 = vmatprep.subr.mxu0 0.0
    %4986 = vmatpush1.xpose.msra.mxu0 %v3531
    %4987 = vmatprep.subr.mxu0 0.0
    %4988 = vmatpush2.xpose.msra.mxu0 0.0
    %4989 = vmatprep.subr.mxu0 0.0
    %4990 = vmatpush2.xpose.msra.mxu0 0.0
    %4991 = vmatprep.subr.mxu0 0.0
    %4992 = vmatpush2.xpose.msra.mxu0 0.0
    %4993 = vmatprep.subr.mxu0 0.0
    %4994 = vmatpush2.xpose.msra.mxu0 0.0
    %4995 = vmatprep.subr.mxu0 0.0
    %4996 = vmatpush2.xpose.msra.mxu0 0.0
    %4997 = vmatprep.subr.mxu0 0.0
    %4998 = vmatpush2.xpose.msra.mxu0 0.0
    %4999 = vmatprep.subr.mxu0 0.0
    %5000 = vmatpush2.xpose.msra.mxu0 0.0
    %5001 = vmatprep.subr.mxu0 0.0
    %5002 = vmatpush2.xpose.msra.mxu0 0.0
    %5003 = vmatprep.subr.mxu0 0.0
    %5004 = vmatpush2.xpose.msra.mxu0 0.0
    %5005 = vmatprep.subr.mxu0 0.0
    %5006 = vmatpush2.xpose.msra.mxu0 0.0
    %5007 = vmatprep.subr.mxu0 0.0
    %5008 = vmatpush2.xpose.msra.mxu0 0.0
    %5009 = vmatprep.subr.mxu0 0.0
    %5010 = vmatpush2.xpose.msra.mxu0 0.0
    %5011 = vmatprep.subr.mxu0 0.0
    %5012 = vmatpush2.xpose.msra.mxu0 0.0
    %5013 = vmatprep.subr.mxu0 0.0
    %5014 = vmatpush2.xpose.msra.mxu0 0.0
    %5015 = vmatprep.subr.mxu0 0.0
    %5016 = vmatpush2.xpose.msra.mxu0 0.0
    %5017 = vmatprep.subr.mxu0 0.0
    %5018 = vmatpush2.xpose.msra.mxu0 0.0
    %5019 = vmatprep.mubr.f32.mxu0 0.0
    %5020 = vmatmul.mubr.f32.gmra.mxu0 %v3479
    %v5021 = vpop.f32.mrf.mxu0
    %v5022 = vadd.f32 0.0, %v5021
    %v5023 = vpop.f32.mrf.mxu0
    %5024 = vdwg.mxu0
    %5025 = vmatprep.subr.mxu0 0.0
    %5026 = vmatpush1.xpose.msra.mxu0 0.0
    %5027 = vmatprep.subr.mxu0 0.0
    %5028 = vmatpush1.xpose.msra.mxu0 0.0
    %5029 = vmatprep.subr.mxu0 0.0
    %5030 = vmatpush1.xpose.msra.mxu0 0.0
    %5031 = vmatprep.subr.mxu0 0.0
    %5032 = vmatpush1.xpose.msra.mxu0 0.0
    %5033 = vmatprep.subr.mxu0 0.0
    %5034 = vmatpush1.xpose.msra.mxu0 0.0
    %5035 = vmatprep.subr.mxu0 0.0
    %5036 = vmatpush1.xpose.msra.mxu0 0.0
    %5037 = vmatprep.subr.mxu0 0.0
    %5038 = vmatpush1.xpose.msra.mxu0 0.0
    %5039 = vmatprep.subr.mxu0 0.0
    %5040 = vmatpush1.xpose.msra.mxu0 0.0
    %5041 = vmatprep.subr.mxu0 0.0
    %5042 = vmatpush1.xpose.msra.mxu0 0.0
    %5043 = vmatprep.subr.mxu0 0.0
    %5044 = vmatpush1.xpose.msra.mxu0 0.0
    %5045 = vmatprep.subr.mxu0 0.0
    %5046 = vmatpush1.xpose.msra.mxu0 0.0
    %5047 = vmatprep.subr.mxu0 0.0
    %5048 = vmatpush1.xpose.msra.mxu0 0.0
    %5049 = vmatprep.subr.mxu0 0.0
    %5050 = vmatpush1.xpose.msra.mxu0 0.0
    %5051 = vmatprep.subr.mxu0 0.0
    %5052 = vmatpush1.xpose.msra.mxu0 0.0
    %5053 = vmatprep.subr.mxu0 0.0
    %5054 = vmatpush1.xpose.msra.mxu0 %v3534
    %5055 = vmatprep.subr.mxu0 0.0
    %5056 = vmatpush1.xpose.msra.mxu0 %v3533
    %5057 = vmatprep.subr.mxu0 0.0
    %5058 = vmatpush2.xpose.msra.mxu0 0.0
    %5059 = vmatprep.subr.mxu0 0.0
    %5060 = vmatpush2.xpose.msra.mxu0 0.0
    %5061 = vmatprep.subr.mxu0 0.0
    %5062 = vmatpush2.xpose.msra.mxu0 0.0
    %5063 = vmatprep.subr.mxu0 0.0
    %5064 = vmatpush2.xpose.msra.mxu0 0.0
    %5065 = vmatprep.subr.mxu0 0.0
    %5066 = vmatpush2.xpose.msra.mxu0 0.0
    %5067 = vmatprep.subr.mxu0 0.0
    %5068 = vmatpush2.xpose.msra.mxu0 0.0
    %5069 = vmatprep.subr.mxu0 0.0
    %5070 = vmatpush2.xpose.msra.mxu0 0.0
    %5071 = vmatprep.subr.mxu0 0.0
    %5072 = vmatpush2.xpose.msra.mxu0 0.0
    %5073 = vmatprep.subr.mxu0 0.0
    %5074 = vmatpush2.xpose.msra.mxu0 0.0
    %5075 = vmatprep.subr.mxu0 0.0
    %5076 = vmatpush2.xpose.msra.mxu0 0.0
    %5077 = vmatprep.subr.mxu0 0.0
    %5078 = vmatpush2.xpose.msra.mxu0 0.0
    %5079 = vmatprep.subr.mxu0 0.0
    %5080 = vmatpush2.xpose.msra.mxu0 0.0
    %5081 = vmatprep.subr.mxu0 0.0
    %5082 = vmatpush2.xpose.msra.mxu0 0.0
    %5083 = vmatprep.subr.mxu0 0.0
    %5084 = vmatpush2.xpose.msra.mxu0 0.0
    %5085 = vmatprep.subr.mxu0 0.0
    %5086 = vmatpush2.xpose.msra.mxu0 0.0
    %5087 = vmatprep.subr.mxu0 0.0
    %5088 = vmatpush2.xpose.msra.mxu0 0.0
    %5089 = vmatprep.mubr.f32.mxu0 0.0
    %5090 = vmatmul.mubr.f32.gmra.mxu0 %v3480
    %v5091 = vpop.f32.mrf.mxu0
    %v5092 = vadd.f32 0.0, %v5091
    %v5093 = vpop.f32.mrf.mxu0
    %5094 = vdwg.mxu0
    %5095 = vmatprep.subr.mxu0 0.0
    %5096 = vmatpush1.xpose.msra.mxu0 0.0
    %5097 = vmatprep.subr.mxu0 0.0
    %5098 = vmatpush1.xpose.msra.mxu0 0.0
    %5099 = vmatprep.subr.mxu0 0.0
    %5100 = vmatpush1.xpose.msra.mxu0 0.0
    %5101 = vmatprep.subr.mxu0 0.0
    %5102 = vmatpush1.xpose.msra.mxu0 0.0
    %5103 = vmatprep.subr.mxu0 0.0
    %5104 = vmatpush1.xpose.msra.mxu0 0.0
    %5105 = vmatprep.subr.mxu0 0.0
    %5106 = vmatpush1.xpose.msra.mxu0 0.0
    %5107 = vmatprep.subr.mxu0 0.0
    %5108 = vmatpush1.xpose.msra.mxu0 0.0
    %5109 = vmatprep.subr.mxu0 0.0
    %5110 = vmatpush1.xpose.msra.mxu0 0.0
    %5111 = vmatprep.subr.mxu0 0.0
    %5112 = vmatpush1.xpose.msra.mxu0 0.0
    %5113 = vmatprep.subr.mxu0 0.0
    %5114 = vmatpush1.xpose.msra.mxu0 0.0
    %5115 = vmatprep.subr.mxu0 0.0
    %5116 = vmatpush1.xpose.msra.mxu0 0.0
    %5117 = vmatprep.subr.mxu0 0.0
    %5118 = vmatpush1.xpose.msra.mxu0 0.0
    %5119 = vmatprep.subr.mxu0 0.0
    %5120 = vmatpush1.xpose.msra.mxu0 0.0
    %5121 = vmatprep.subr.mxu0 0.0
    %5122 = vmatpush1.xpose.msra.mxu0 0.0
    %5123 = vmatprep.subr.mxu0 0.0
    %5124 = vmatpush1.xpose.msra.mxu0 %v3536
    %5125 = vmatprep.subr.mxu0 0.0
    %5126 = vmatpush1.xpose.msra.mxu0 %v3535
    %5127 = vmatprep.subr.mxu0 0.0
    %5128 = vmatpush2.xpose.msra.mxu0 0.0
    %5129 = vmatprep.subr.mxu0 0.0
    %5130 = vmatpush2.xpose.msra.mxu0 0.0
    %5131 = vmatprep.subr.mxu0 0.0
    %5132 = vmatpush2.xpose.msra.mxu0 0.0
    %5133 = vmatprep.subr.mxu0 0.0
    %5134 = vmatpush2.xpose.msra.mxu0 0.0
    %5135 = vmatprep.subr.mxu0 0.0
    %5136 = vmatpush2.xpose.msra.mxu0 0.0
    %5137 = vmatprep.subr.mxu0 0.0
    %5138 = vmatpush2.xpose.msra.mxu0 0.0
    %5139 = vmatprep.subr.mxu0 0.0
    %5140 = vmatpush2.xpose.msra.mxu0 0.0
    %5141 = vmatprep.subr.mxu0 0.0
    %5142 = vmatpush2.xpose.msra.mxu0 0.0
    %5143 = vmatprep.subr.mxu0 0.0
    %5144 = vmatpush2.xpose.msra.mxu0 0.0
    %5145 = vmatprep.subr.mxu0 0.0
    %5146 = vmatpush2.xpose.msra.mxu0 0.0
    %5147 = vmatprep.subr.mxu0 0.0
    %5148 = vmatpush2.xpose.msra.mxu0 0.0
    %5149 = vmatprep.subr.mxu0 0.0
    %5150 = vmatpush2.xpose.msra.mxu0 0.0
    %5151 = vmatprep.subr.mxu0 0.0
    %5152 = vmatpush2.xpose.msra.mxu0 0.0
    %5153 = vmatprep.subr.mxu0 0.0
    %5154 = vmatpush2.xpose.msra.mxu0 0.0
    %5155 = vmatprep.subr.mxu0 0.0
    %5156 = vmatpush2.xpose.msra.mxu0 0.0
    %5157 = vmatprep.subr.mxu0 0.0
    %5158 = vmatpush2.xpose.msra.mxu0 0.0
    %5159 = vmatprep.mubr.f32.mxu0 0.0
    %5160 = vmatmul.mubr.f32.gmra.mxu0 %v3481
    %v5161 = vpop.f32.mrf.mxu0
    %v5162 = vadd.f32 0.0, %v5161
    %v5163 = vpop.f32.mrf.mxu0
    %5164 = vdwg.mxu0
    %5165 = vmatprep.subr.mxu0 0.0
    %5166 = vmatpush1.xpose.msra.mxu0 0.0
    %5167 = vmatprep.subr.mxu0 0.0
    %5168 = vmatpush1.xpose.msra.mxu0 0.0
    %5169 = vmatprep.subr.mxu0 0.0
    %5170 = vmatpush1.xpose.msra.mxu0 0.0
    %5171 = vmatprep.subr.mxu0 0.0
    %5172 = vmatpush1.xpose.msra.mxu0 0.0
    %5173 = vmatprep.subr.mxu0 0.0
    %5174 = vmatpush1.xpose.msra.mxu0 0.0
    %5175 = vmatprep.subr.mxu0 0.0
    %5176 = vmatpush1.xpose.msra.mxu0 0.0
    %5177 = vmatprep.subr.mxu0 0.0
    %5178 = vmatpush1.xpose.msra.mxu0 0.0
    %5179 = vmatprep.subr.mxu0 0.0
    %5180 = vmatpush1.xpose.msra.mxu0 0.0
    %5181 = vmatprep.subr.mxu0 0.0
    %5182 = vmatpush1.xpose.msra.mxu0 0.0
    %5183 = vmatprep.subr.mxu0 0.0
    %5184 = vmatpush1.xpose.msra.mxu0 0.0
    %5185 = vmatprep.subr.mxu0 0.0
    %5186 = vmatpush1.xpose.msra.mxu0 0.0
    %5187 = vmatprep.subr.mxu0 0.0
    %5188 = vmatpush1.xpose.msra.mxu0 0.0
    %5189 = vmatprep.subr.mxu0 0.0
    %5190 = vmatpush1.xpose.msra.mxu0 0.0
    %5191 = vmatprep.subr.mxu0 0.0
    %5192 = vmatpush1.xpose.msra.mxu0 0.0
    %5193 = vmatprep.subr.mxu0 0.0
    %5194 = vmatpush1.xpose.msra.mxu0 %v3538
    %5195 = vmatprep.subr.mxu0 0.0
    %5196 = vmatpush1.xpose.msra.mxu0 %v3537
    %5197 = vmatprep.subr.mxu0 0.0
    %5198 = vmatpush2.xpose.msra.mxu0 0.0
    %5199 = vmatprep.subr.mxu0 0.0
    %5200 = vmatpush2.xpose.msra.mxu0 0.0
    %5201 = vmatprep.subr.mxu0 0.0
    %5202 = vmatpush2.xpose.msra.mxu0 0.0
    %5203 = vmatprep.subr.mxu0 0.0
    %5204 = vmatpush2.xpose.msra.mxu0 0.0
    %5205 = vmatprep.subr.mxu0 0.0
    %5206 = vmatpush2.xpose.msra.mxu0 0.0
    %5207 = vmatprep.subr.mxu0 0.0
    %5208 = vmatpush2.xpose.msra.mxu0 0.0
    %5209 = vmatprep.subr.mxu0 0.0
    %5210 = vmatpush2.xpose.msra.mxu0 0.0
    %5211 = vmatprep.subr.mxu0 0.0
    %5212 = vmatpush2.xpose.msra.mxu0 0.0
    %5213 = vmatprep.subr.mxu0 0.0
    %5214 = vmatpush2.xpose.msra.mxu0 0.0
    %5215 = vmatprep.subr.mxu0 0.0
    %5216 = vmatpush2.xpose.msra.mxu0 0.0
    %5217 = vmatprep.subr.mxu0 0.0
    %5218 = vmatpush2.xpose.msra.mxu0 0.0
    %5219 = vmatprep.subr.mxu0 0.0
    %5220 = vmatpush2.xpose.msra.mxu0 0.0
    %5221 = vmatprep.subr.mxu0 0.0
    %5222 = vmatpush2.xpose.msra.mxu0 0.0
    %5223 = vmatprep.subr.mxu0 0.0
    %5224 = vmatpush2.xpose.msra.mxu0 0.0
    %5225 = vmatprep.subr.mxu0 0.0
    %5226 = vmatpush2.xpose.msra.mxu0 0.0
    %5227 = vmatprep.subr.mxu0 0.0
    %5228 = vmatpush2.xpose.msra.mxu0 0.0
    %5229 = vmatprep.mubr.f32.mxu0 0.0
    %5230 = vmatmul.mubr.f32.gmra.mxu0 %v3482
    %v5231 = vpop.f32.mrf.mxu0
    %v5232 = vadd.f32 0.0, %v5231
    %v5233 = vpop.f32.mrf.mxu0
    %5234 = vdwg.mxu0
    %5235 = vmatprep.subr.mxu0 0.0
    %5236 = vmatpush1.xpose.msra.mxu0 0.0
    %5237 = vmatprep.subr.mxu0 0.0
    %5238 = vmatpush1.xpose.msra.mxu0 0.0
    %5239 = vmatprep.subr.mxu0 0.0
    %5240 = vmatpush1.xpose.msra.mxu0 0.0
    %5241 = vmatprep.subr.mxu0 0.0
    %5242 = vmatpush1.xpose.msra.mxu0 0.0
    %5243 = vmatprep.subr.mxu0 0.0
    %5244 = vmatpush1.xpose.msra.mxu0 0.0
    %5245 = vmatprep.subr.mxu0 0.0
    %5246 = vmatpush1.xpose.msra.mxu0 0.0
    %5247 = vmatprep.subr.mxu0 0.0
    %5248 = vmatpush1.xpose.msra.mxu0 0.0
    %5249 = vmatprep.subr.mxu0 0.0
    %5250 = vmatpush1.xpose.msra.mxu0 0.0
    %5251 = vmatprep.subr.mxu0 0.0
    %5252 = vmatpush1.xpose.msra.mxu0 0.0
    %5253 = vmatprep.subr.mxu0 0.0
    %5254 = vmatpush1.xpose.msra.mxu0 0.0
    %5255 = vmatprep.subr.mxu0 0.0
    %5256 = vmatpush1.xpose.msra.mxu0 0.0
    %5257 = vmatprep.subr.mxu0 0.0
    %5258 = vmatpush1.xpose.msra.mxu0 0.0
    %5259 = vmatprep.subr.mxu0 0.0
    %5260 = vmatpush1.xpose.msra.mxu0 0.0
    %5261 = vmatprep.subr.mxu0 0.0
    %5262 = vmatpush1.xpose.msra.mxu0 0.0
    %5263 = vmatprep.subr.mxu0 0.0
    %5264 = vmatpush1.xpose.msra.mxu0 %v3540
    %5265 = vmatprep.subr.mxu0 0.0
    %5266 = vmatpush1.xpose.msra.mxu0 %v3539
    %5267 = vmatprep.subr.mxu0 0.0
    %5268 = vmatpush2.xpose.msra.mxu0 0.0
    %5269 = vmatprep.subr.mxu0 0.0
    %5270 = vmatpush2.xpose.msra.mxu0 0.0
    %5271 = vmatprep.subr.mxu0 0.0
    %5272 = vmatpush2.xpose.msra.mxu0 0.0
    %5273 = vmatprep.subr.mxu0 0.0
    %5274 = vmatpush2.xpose.msra.mxu0 0.0
    %5275 = vmatprep.subr.mxu0 0.0
    %5276 = vmatpush2.xpose.msra.mxu0 0.0
    %5277 = vmatprep.subr.mxu0 0.0
    %5278 = vmatpush2.xpose.msra.mxu0 0.0
    %5279 = vmatprep.subr.mxu0 0.0
    %5280 = vmatpush2.xpose.msra.mxu0 0.0
    %5281 = vmatprep.subr.mxu0 0.0
    %5282 = vmatpush2.xpose.msra.mxu0 0.0
    %5283 = vmatprep.subr.mxu0 0.0
    %5284 = vmatpush2.xpose.msra.mxu0 0.0
    %5285 = vmatprep.subr.mxu0 0.0
    %5286 = vmatpush2.xpose.msra.mxu0 0.0
    %5287 = vmatprep.subr.mxu0 0.0
    %5288 = vmatpush2.xpose.msra.mxu0 0.0
    %5289 = vmatprep.subr.mxu0 0.0
    %5290 = vmatpush2.xpose.msra.mxu0 0.0
    %5291 = vmatprep.subr.mxu0 0.0
    %5292 = vmatpush2.xpose.msra.mxu0 0.0
    %5293 = vmatprep.subr.mxu0 0.0
    %5294 = vmatpush2.xpose.msra.mxu0 0.0
    %5295 = vmatprep.subr.mxu0 0.0
    %5296 = vmatpush2.xpose.msra.mxu0 0.0
    %5297 = vmatprep.subr.mxu0 0.0
    %5298 = vmatpush2.xpose.msra.mxu0 0.0
    %5299 = vmatprep.mubr.f32.mxu0 0.0
    %5300 = vmatmul.mubr.f32.gmra.mxu0 %v3483
    %v5301 = vpop.f32.mrf.mxu0
    %v5302 = vadd.f32 0.0, %v5301
    %v5303 = vpop.f32.mrf.mxu0
    %5304 = vdwg.mxu0
    %5305 = vmatprep.subr.mxu0 0.0
    %5306 = vmatpush1.xpose.msra.mxu0 0.0
    %5307 = vmatprep.subr.mxu0 0.0
    %5308 = vmatpush1.xpose.msra.mxu0 0.0
    %5309 = vmatprep.subr.mxu0 0.0
    %5310 = vmatpush1.xpose.msra.mxu0 0.0
    %5311 = vmatprep.subr.mxu0 0.0
    %5312 = vmatpush1.xpose.msra.mxu0 0.0
    %5313 = vmatprep.subr.mxu0 0.0
    %5314 = vmatpush1.xpose.msra.mxu0 0.0
    %5315 = vmatprep.subr.mxu0 0.0
    %5316 = vmatpush1.xpose.msra.mxu0 0.0
    %5317 = vmatprep.subr.mxu0 0.0
    %5318 = vmatpush1.xpose.msra.mxu0 0.0
    %5319 = vmatprep.subr.mxu0 0.0
    %5320 = vmatpush1.xpose.msra.mxu0 0.0
    %5321 = vmatprep.subr.mxu0 0.0
    %5322 = vmatpush1.xpose.msra.mxu0 0.0
    %5323 = vmatprep.subr.mxu0 0.0
    %5324 = vmatpush1.xpose.msra.mxu0 0.0
    %5325 = vmatprep.subr.mxu0 0.0
    %5326 = vmatpush1.xpose.msra.mxu0 0.0
    %5327 = vmatprep.subr.mxu0 0.0
    %5328 = vmatpush1.xpose.msra.mxu0 0.0
    %5329 = vmatprep.subr.mxu0 0.0
    %5330 = vmatpush1.xpose.msra.mxu0 0.0
    %5331 = vmatprep.subr.mxu0 0.0
    %5332 = vmatpush1.xpose.msra.mxu0 0.0
    %5333 = vmatprep.subr.mxu0 0.0
    %5334 = vmatpush1.xpose.msra.mxu0 %v3542
    %5335 = vmatprep.subr.mxu0 0.0
    %5336 = vmatpush1.xpose.msra.mxu0 %v3541
    %5337 = vmatprep.subr.mxu0 0.0
    %5338 = vmatpush2.xpose.msra.mxu0 0.0
    %5339 = vmatprep.subr.mxu0 0.0
    %5340 = vmatpush2.xpose.msra.mxu0 0.0
    %5341 = vmatprep.subr.mxu0 0.0
    %5342 = vmatpush2.xpose.msra.mxu0 0.0
    %5343 = vmatprep.subr.mxu0 0.0
    %5344 = vmatpush2.xpose.msra.mxu0 0.0
    %5345 = vmatprep.subr.mxu0 0.0
    %5346 = vmatpush2.xpose.msra.mxu0 0.0
    %5347 = vmatprep.subr.mxu0 0.0
    %5348 = vmatpush2.xpose.msra.mxu0 0.0
    %5349 = vmatprep.subr.mxu0 0.0
    %5350 = vmatpush2.xpose.msra.mxu0 0.0
    %5351 = vmatprep.subr.mxu0 0.0
    %5352 = vmatpush2.xpose.msra.mxu0 0.0
    %5353 = vmatprep.subr.mxu0 0.0
    %5354 = vmatpush2.xpose.msra.mxu0 0.0
    %5355 = vmatprep.subr.mxu0 0.0
    %5356 = vmatpush2.xpose.msra.mxu0 0.0
    %5357 = vmatprep.subr.mxu0 0.0
    %5358 = vmatpush2.xpose.msra.mxu0 0.0
    %5359 = vmatprep.subr.mxu0 0.0
    %5360 = vmatpush2.xpose.msra.mxu0 0.0
    %5361 = vmatprep.subr.mxu0 0.0
    %5362 = vmatpush2.xpose.msra.mxu0 0.0
    %5363 = vmatprep.subr.mxu0 0.0
    %5364 = vmatpush2.xpose.msra.mxu0 0.0
    %5365 = vmatprep.subr.mxu0 0.0
    %5366 = vmatpush2.xpose.msra.mxu0 0.0
    %5367 = vmatprep.subr.mxu0 0.0
    %5368 = vmatpush2.xpose.msra.mxu0 0.0
    %5369 = vmatprep.mubr.f32.mxu0 0.0
    %5370 = vmatmul.mubr.f32.gmra.mxu0 %v3484
    %v5371 = vpop.f32.mrf.mxu0
    %v5372 = vadd.f32 0.0, %v5371
    %v5373 = vpop.f32.mrf.mxu0
    %5374 = vdwg.mxu0
    %5375 = vmatprep.subr.mxu0 0.0
    %5376 = vmatpush1.xpose.msra.mxu0 0.0
    %5377 = vmatprep.subr.mxu0 0.0
    %5378 = vmatpush1.xpose.msra.mxu0 0.0
    %5379 = vmatprep.subr.mxu0 0.0
    %5380 = vmatpush1.xpose.msra.mxu0 0.0
    %5381 = vmatprep.subr.mxu0 0.0
    %5382 = vmatpush1.xpose.msra.mxu0 0.0
    %5383 = vmatprep.subr.mxu0 0.0
    %5384 = vmatpush1.xpose.msra.mxu0 0.0
    %5385 = vmatprep.subr.mxu0 0.0
    %5386 = vmatpush1.xpose.msra.mxu0 0.0
    %5387 = vmatprep.subr.mxu0 0.0
    %5388 = vmatpush1.xpose.msra.mxu0 0.0
    %5389 = vmatprep.subr.mxu0 0.0
    %5390 = vmatpush1.xpose.msra.mxu0 0.0
    %5391 = vmatprep.subr.mxu0 0.0
    %5392 = vmatpush1.xpose.msra.mxu0 0.0
    %5393 = vmatprep.subr.mxu0 0.0
    %5394 = vmatpush1.xpose.msra.mxu0 0.0
    %5395 = vmatprep.subr.mxu0 0.0
    %5396 = vmatpush1.xpose.msra.mxu0 0.0
    %5397 = vmatprep.subr.mxu0 0.0
    %5398 = vmatpush1.xpose.msra.mxu0 0.0
    %5399 = vmatprep.subr.mxu0 0.0
    %5400 = vmatpush1.xpose.msra.mxu0 0.0
    %5401 = vmatprep.subr.mxu0 0.0
    %5402 = vmatpush1.xpose.msra.mxu0 0.0
    %5403 = vmatprep.subr.mxu0 0.0
    %5404 = vmatpush1.xpose.msra.mxu0 %v3544
    %5405 = vmatprep.subr.mxu0 0.0
    %5406 = vmatpush1.xpose.msra.mxu0 %v3543
    %5407 = vmatprep.subr.mxu0 0.0
    %5408 = vmatpush2.xpose.msra.mxu0 0.0
    %5409 = vmatprep.subr.mxu0 0.0
    %5410 = vmatpush2.xpose.msra.mxu0 0.0
    %5411 = vmatprep.subr.mxu0 0.0
    %5412 = vmatpush2.xpose.msra.mxu0 0.0
    %5413 = vmatprep.subr.mxu0 0.0
    %5414 = vmatpush2.xpose.msra.mxu0 0.0
    %5415 = vmatprep.subr.mxu0 0.0
    %5416 = vmatpush2.xpose.msra.mxu0 0.0
    %5417 = vmatprep.subr.mxu0 0.0
    %5418 = vmatpush2.xpose.msra.mxu0 0.0
    %5419 = vmatprep.subr.mxu0 0.0
    %5420 = vmatpush2.xpose.msra.mxu0 0.0
    %5421 = vmatprep.subr.mxu0 0.0
    %5422 = vmatpush2.xpose.msra.mxu0 0.0
    %5423 = vmatprep.subr.mxu0 0.0
    %5424 = vmatpush2.xpose.msra.mxu0 0.0
    %5425 = vmatprep.subr.mxu0 0.0
    %5426 = vmatpush2.xpose.msra.mxu0 0.0
    %5427 = vmatprep.subr.mxu0 0.0
    %5428 = vmatpush2.xpose.msra.mxu0 0.0
    %5429 = vmatprep.subr.mxu0 0.0
    %5430 = vmatpush2.xpose.msra.mxu0 0.0
    %5431 = vmatprep.subr.mxu0 0.0
    %5432 = vmatpush2.xpose.msra.mxu0 0.0
    %5433 = vmatprep.subr.mxu0 0.0
    %5434 = vmatpush2.xpose.msra.mxu0 0.0
    %5435 = vmatprep.subr.mxu0 0.0
    %5436 = vmatpush2.xpose.msra.mxu0 0.0
    %5437 = vmatprep.subr.mxu0 0.0
    %5438 = vmatpush2.xpose.msra.mxu0 0.0
    %5439 = vmatprep.mubr.f32.mxu0 0.0
    %5440 = vmatmul.mubr.f32.gmra.mxu0 %v3485
    %v5441 = vpop.f32.mrf.mxu0
    %v5442 = vadd.f32 0.0, %v5441
    %v5443 = vpop.f32.mrf.mxu0
    %5444 = vdwg.mxu0
    %5445 = vmatprep.subr.mxu0 0.0
    %5446 = vmatpush1.xpose.msra.mxu0 0.0
    %5447 = vmatprep.subr.mxu0 0.0
    %5448 = vmatpush1.xpose.msra.mxu0 0.0
    %5449 = vmatprep.subr.mxu0 0.0
    %5450 = vmatpush1.xpose.msra.mxu0 0.0
    %5451 = vmatprep.subr.mxu0 0.0
    %5452 = vmatpush1.xpose.msra.mxu0 0.0
    %5453 = vmatprep.subr.mxu0 0.0
    %5454 = vmatpush1.xpose.msra.mxu0 0.0
    %5455 = vmatprep.subr.mxu0 0.0
    %5456 = vmatpush1.xpose.msra.mxu0 0.0
    %5457 = vmatprep.subr.mxu0 0.0
    %5458 = vmatpush1.xpose.msra.mxu0 0.0
    %5459 = vmatprep.subr.mxu0 0.0
    %5460 = vmatpush1.xpose.msra.mxu0 0.0
    %5461 = vmatprep.subr.mxu0 0.0
    %5462 = vmatpush1.xpose.msra.mxu0 0.0
    %5463 = vmatprep.subr.mxu0 0.0
    %5464 = vmatpush1.xpose.msra.mxu0 0.0
    %5465 = vmatprep.subr.mxu0 0.0
    %5466 = vmatpush1.xpose.msra.mxu0 0.0
    %5467 = vmatprep.subr.mxu0 0.0
    %5468 = vmatpush1.xpose.msra.mxu0 0.0
    %5469 = vmatprep.subr.mxu0 0.0
    %5470 = vmatpush1.xpose.msra.mxu0 0.0
    %5471 = vmatprep.subr.mxu0 0.0
    %5472 = vmatpush1.xpose.msra.mxu0 0.0
    %5473 = vmatprep.subr.mxu0 0.0
    %5474 = vmatpush1.xpose.msra.mxu0 %v3546
    %5475 = vmatprep.subr.mxu0 0.0
    %5476 = vmatpush1.xpose.msra.mxu0 %v3545
    %5477 = vmatprep.subr.mxu0 0.0
    %5478 = vmatpush2.xpose.msra.mxu0 0.0
    %5479 = vmatprep.subr.mxu0 0.0
    %5480 = vmatpush2.xpose.msra.mxu0 0.0
    %5481 = vmatprep.subr.mxu0 0.0
    %5482 = vmatpush2.xpose.msra.mxu0 0.0
    %5483 = vmatprep.subr.mxu0 0.0
    %5484 = vmatpush2.xpose.msra.mxu0 0.0
    %5485 = vmatprep.subr.mxu0 0.0
    %5486 = vmatpush2.xpose.msra.mxu0 0.0
    %5487 = vmatprep.subr.mxu0 0.0
    %5488 = vmatpush2.xpose.msra.mxu0 0.0
    %5489 = vmatprep.subr.mxu0 0.0
    %5490 = vmatpush2.xpose.msra.mxu0 0.0
    %5491 = vmatprep.subr.mxu0 0.0
    %5492 = vmatpush2.xpose.msra.mxu0 0.0
    %5493 = vmatprep.subr.mxu0 0.0
    %5494 = vmatpush2.xpose.msra.mxu0 0.0
    %5495 = vmatprep.subr.mxu0 0.0
    %5496 = vmatpush2.xpose.msra.mxu0 0.0
    %5497 = vmatprep.subr.mxu0 0.0
    %5498 = vmatpush2.xpose.msra.mxu0 0.0
    %5499 = vmatprep.subr.mxu0 0.0
    %5500 = vmatpush2.xpose.msra.mxu0 0.0
    %5501 = vmatprep.subr.mxu0 0.0
    %5502 = vmatpush2.xpose.msra.mxu0 0.0
    %5503 = vmatprep.subr.mxu0 0.0
    %5504 = vmatpush2.xpose.msra.mxu0 0.0
    %5505 = vmatprep.subr.mxu0 0.0
    %5506 = vmatpush2.xpose.msra.mxu0 0.0
    %5507 = vmatprep.subr.mxu0 0.0
    %5508 = vmatpush2.xpose.msra.mxu0 0.0
    %5509 = vmatprep.mubr.f32.mxu0 0.0
    %5510 = vmatmul.mubr.f32.gmra.mxu0 %v3486
    %v5511 = vpop.f32.mrf.mxu0
    %v5512 = vadd.f32 0.0, %v5511
    %v5513 = vpop.f32.mrf.mxu0
    %5514 = vdwg.mxu0
    %5515 = vmatprep.subr.mxu0 0.0
    %5516 = vmatpush1.xpose.msra.mxu0 0.0
    %5517 = vmatprep.subr.mxu0 0.0
    %5518 = vmatpush1.xpose.msra.mxu0 0.0
    %5519 = vmatprep.subr.mxu0 0.0
    %5520 = vmatpush1.xpose.msra.mxu0 0.0
    %5521 = vmatprep.subr.mxu0 0.0
    %5522 = vmatpush1.xpose.msra.mxu0 0.0
    %5523 = vmatprep.subr.mxu0 0.0
    %5524 = vmatpush1.xpose.msra.mxu0 0.0
    %5525 = vmatprep.subr.mxu0 0.0
    %5526 = vmatpush1.xpose.msra.mxu0 0.0
    %5527 = vmatprep.subr.mxu0 0.0
    %5528 = vmatpush1.xpose.msra.mxu0 0.0
    %5529 = vmatprep.subr.mxu0 0.0
    %5530 = vmatpush1.xpose.msra.mxu0 0.0
    %5531 = vmatprep.subr.mxu0 0.0
    %5532 = vmatpush1.xpose.msra.mxu0 0.0
    %5533 = vmatprep.subr.mxu0 0.0
    %5534 = vmatpush1.xpose.msra.mxu0 0.0
    %5535 = vmatprep.subr.mxu0 0.0
    %5536 = vmatpush1.xpose.msra.mxu0 0.0
    %5537 = vmatprep.subr.mxu0 0.0
    %5538 = vmatpush1.xpose.msra.mxu0 0.0
    %5539 = vmatprep.subr.mxu0 0.0
    %5540 = vmatpush1.xpose.msra.mxu0 0.0
    %5541 = vmatprep.subr.mxu0 0.0
    %5542 = vmatpush1.xpose.msra.mxu0 0.0
    %5543 = vmatprep.subr.mxu0 0.0
    %5544 = vmatpush1.xpose.msra.mxu0 %v3548
    %5545 = vmatprep.subr.mxu0 0.0
    %5546 = vmatpush1.xpose.msra.mxu0 %v3547
    %5547 = vmatprep.subr.mxu0 0.0
    %5548 = vmatpush2.xpose.msra.mxu0 0.0
    %5549 = vmatprep.subr.mxu0 0.0
    %5550 = vmatpush2.xpose.msra.mxu0 0.0
    %5551 = vmatprep.subr.mxu0 0.0
    %5552 = vmatpush2.xpose.msra.mxu0 0.0
    %5553 = vmatprep.subr.mxu0 0.0
    %5554 = vmatpush2.xpose.msra.mxu0 0.0
    %5555 = vmatprep.subr.mxu0 0.0
    %5556 = vmatpush2.xpose.msra.mxu0 0.0
    %5557 = vmatprep.subr.mxu0 0.0
    %5558 = vmatpush2.xpose.msra.mxu0 0.0
    %5559 = vmatprep.subr.mxu0 0.0
    %5560 = vmatpush2.xpose.msra.mxu0 0.0
    %5561 = vmatprep.subr.mxu0 0.0
    %5562 = vmatpush2.xpose.msra.mxu0 0.0
    %5563 = vmatprep.subr.mxu0 0.0
    %5564 = vmatpush2.xpose.msra.mxu0 0.0
    %5565 = vmatprep.subr.mxu0 0.0
    %5566 = vmatpush2.xpose.msra.mxu0 0.0
    %5567 = vmatprep.subr.mxu0 0.0
    %5568 = vmatpush2.xpose.msra.mxu0 0.0
    %5569 = vmatprep.subr.mxu0 0.0
    %5570 = vmatpush2.xpose.msra.mxu0 0.0
    %5571 = vmatprep.subr.mxu0 0.0
    %5572 = vmatpush2.xpose.msra.mxu0 0.0
    %5573 = vmatprep.subr.mxu0 0.0
    %5574 = vmatpush2.xpose.msra.mxu0 0.0
    %5575 = vmatprep.subr.mxu0 0.0
    %5576 = vmatpush2.xpose.msra.mxu0 0.0
    %5577 = vmatprep.subr.mxu0 0.0
    %5578 = vmatpush2.xpose.msra.mxu0 0.0
    %5579 = vmatprep.mubr.f32.mxu0 0.0
    %5580 = vmatmul.mubr.f32.gmra.mxu0 %v3487
    %v5581 = vpop.f32.mrf.mxu0
    %v5582 = vadd.f32 0.0, %v5581
    %v5583 = vpop.f32.mrf.mxu0
    %5584 = vdwg.mxu0
    %5585 = vmatprep.subr.mxu0 0.0
    %5586 = vmatpush1.xpose.msra.mxu0 0.0
    %5587 = vmatprep.subr.mxu0 0.0
    %5588 = vmatpush1.xpose.msra.mxu0 0.0
    %5589 = vmatprep.subr.mxu0 0.0
    %5590 = vmatpush1.xpose.msra.mxu0 0.0
    %5591 = vmatprep.subr.mxu0 0.0
    %5592 = vmatpush1.xpose.msra.mxu0 0.0
    %5593 = vmatprep.subr.mxu0 0.0
    %5594 = vmatpush1.xpose.msra.mxu0 0.0
    %5595 = vmatprep.subr.mxu0 0.0
    %5596 = vmatpush1.xpose.msra.mxu0 0.0
    %5597 = vmatprep.subr.mxu0 0.0
    %5598 = vmatpush1.xpose.msra.mxu0 0.0
    %5599 = vmatprep.subr.mxu0 0.0
    %5600 = vmatpush1.xpose.msra.mxu0 0.0
    %5601 = vmatprep.subr.mxu0 0.0
    %5602 = vmatpush1.xpose.msra.mxu0 0.0
    %5603 = vmatprep.subr.mxu0 0.0
    %5604 = vmatpush1.xpose.msra.mxu0 0.0
    %5605 = vmatprep.subr.mxu0 0.0
    %5606 = vmatpush1.xpose.msra.mxu0 0.0
    %5607 = vmatprep.subr.mxu0 0.0
    %5608 = vmatpush1.xpose.msra.mxu0 0.0
    %5609 = vmatprep.subr.mxu0 0.0
    %5610 = vmatpush1.xpose.msra.mxu0 0.0
    %5611 = vmatprep.subr.mxu0 0.0
    %5612 = vmatpush1.xpose.msra.mxu0 0.0
    %5613 = vmatprep.subr.mxu0 0.0
    %5614 = vmatpush1.xpose.msra.mxu0 %v3550
    %5615 = vmatprep.subr.mxu0 0.0
    %5616 = vmatpush1.xpose.msra.mxu0 %v3549
    %5617 = vmatprep.subr.mxu0 0.0
    %5618 = vmatpush2.xpose.msra.mxu0 0.0
    %5619 = vmatprep.subr.mxu0 0.0
    %5620 = vmatpush2.xpose.msra.mxu0 0.0
    %5621 = vmatprep.subr.mxu0 0.0
    %5622 = vmatpush2.xpose.msra.mxu0 0.0
    %5623 = vmatprep.subr.mxu0 0.0
    %5624 = vmatpush2.xpose.msra.mxu0 0.0
    %5625 = vmatprep.subr.mxu0 0.0
    %5626 = vmatpush2.xpose.msra.mxu0 0.0
    %5627 = vmatprep.subr.mxu0 0.0
    %5628 = vmatpush2.xpose.msra.mxu0 0.0
    %5629 = vmatprep.subr.mxu0 0.0
    %5630 = vmatpush2.xpose.msra.mxu0 0.0
    %5631 = vmatprep.subr.mxu0 0.0
    %5632 = vmatpush2.xpose.msra.mxu0 0.0
    %5633 = vmatprep.subr.mxu0 0.0
    %5634 = vmatpush2.xpose.msra.mxu0 0.0
    %5635 = vmatprep.subr.mxu0 0.0
    %5636 = vmatpush2.xpose.msra.mxu0 0.0
    %5637 = vmatprep.subr.mxu0 0.0
    %5638 = vmatpush2.xpose.msra.mxu0 0.0
    %5639 = vmatprep.subr.mxu0 0.0
    %5640 = vmatpush2.xpose.msra.mxu0 0.0
    %5641 = vmatprep.subr.mxu0 0.0
    %5642 = vmatpush2.xpose.msra.mxu0 0.0
    %5643 = vmatprep.subr.mxu0 0.0
    %5644 = vmatpush2.xpose.msra.mxu0 0.0
    %5645 = vmatprep.subr.mxu0 0.0
    %5646 = vmatpush2.xpose.msra.mxu0 0.0
    %5647 = vmatprep.subr.mxu0 0.0
    %5648 = vmatpush2.xpose.msra.mxu0 0.0
    %5649 = vmatprep.mubr.f32.mxu0 0.0
    %5650 = vmatmul.mubr.f32.gmra.mxu0 %v3488
    %v5651 = vpop.f32.mrf.mxu0
    %v5652 = vadd.f32 0.0, %v5651
    %v5653 = vpop.f32.mrf.mxu0
    %5654 = vdwg.mxu0
    %5655 = vmatprep.subr.mxu0 0.0
    %5656 = vmatpush1.xpose.msra.mxu0 0.0
    %5657 = vmatprep.subr.mxu0 0.0
    %5658 = vmatpush1.xpose.msra.mxu0 0.0
    %5659 = vmatprep.subr.mxu0 0.0
    %5660 = vmatpush1.xpose.msra.mxu0 0.0
    %5661 = vmatprep.subr.mxu0 0.0
    %5662 = vmatpush1.xpose.msra.mxu0 0.0
    %5663 = vmatprep.subr.mxu0 0.0
    %5664 = vmatpush1.xpose.msra.mxu0 0.0
    %5665 = vmatprep.subr.mxu0 0.0
    %5666 = vmatpush1.xpose.msra.mxu0 0.0
    %5667 = vmatprep.subr.mxu0 0.0
    %5668 = vmatpush1.xpose.msra.mxu0 0.0
    %5669 = vmatprep.subr.mxu0 0.0
    %5670 = vmatpush1.xpose.msra.mxu0 0.0
    %5671 = vmatprep.subr.mxu0 0.0
    %5672 = vmatpush1.xpose.msra.mxu0 0.0
    %5673 = vmatprep.subr.mxu0 0.0
    %5674 = vmatpush1.xpose.msra.mxu0 0.0
    %5675 = vmatprep.subr.mxu0 0.0
    %5676 = vmatpush1.xpose.msra.mxu0 0.0
    %5677 = vmatprep.subr.mxu0 0.0
    %5678 = vmatpush1.xpose.msra.mxu0 0.0
    %5679 = vmatprep.subr.mxu0 0.0
    %5680 = vmatpush1.xpose.msra.mxu0 0.0
    %5681 = vmatprep.subr.mxu0 0.0
    %5682 = vmatpush1.xpose.msra.mxu0 0.0
    %5683 = vmatprep.subr.mxu0 0.0
    %5684 = vmatpush1.xpose.msra.mxu0 %v3552
    %5685 = vmatprep.subr.mxu0 0.0
    %5686 = vmatpush1.xpose.msra.mxu0 %v3551
    %5687 = vmatprep.subr.mxu0 0.0
    %5688 = vmatpush2.xpose.msra.mxu0 0.0
    %5689 = vmatprep.subr.mxu0 0.0
    %5690 = vmatpush2.xpose.msra.mxu0 0.0
    %5691 = vmatprep.subr.mxu0 0.0
    %5692 = vmatpush2.xpose.msra.mxu0 0.0
    %5693 = vmatprep.subr.mxu0 0.0
    %5694 = vmatpush2.xpose.msra.mxu0 0.0
    %5695 = vmatprep.subr.mxu0 0.0
    %5696 = vmatpush2.xpose.msra.mxu0 0.0
    %5697 = vmatprep.subr.mxu0 0.0
    %5698 = vmatpush2.xpose.msra.mxu0 0.0
    %5699 = vmatprep.subr.mxu0 0.0
    %5700 = vmatpush2.xpose.msra.mxu0 0.0
    %5701 = vmatprep.subr.mxu0 0.0
    %5702 = vmatpush2.xpose.msra.mxu0 0.0
    %5703 = vmatprep.subr.mxu0 0.0
    %5704 = vmatpush2.xpose.msra.mxu0 0.0
    %5705 = vmatprep.subr.mxu0 0.0
    %5706 = vmatpush2.xpose.msra.mxu0 0.0
    %5707 = vmatprep.subr.mxu0 0.0
    %5708 = vmatpush2.xpose.msra.mxu0 0.0
    %5709 = vmatprep.subr.mxu0 0.0
    %5710 = vmatpush2.xpose.msra.mxu0 0.0
    %5711 = vmatprep.subr.mxu0 0.0
    %5712 = vmatpush2.xpose.msra.mxu0 0.0
    %5713 = vmatprep.subr.mxu0 0.0
    %5714 = vmatpush2.xpose.msra.mxu0 0.0
    %5715 = vmatprep.subr.mxu0 0.0
    %5716 = vmatpush2.xpose.msra.mxu0 0.0
    %5717 = vmatprep.subr.mxu0 0.0
    %5718 = vmatpush2.xpose.msra.mxu0 0.0
    %5719 = vmatprep.mubr.f32.mxu0 0.0
    %5720 = vmatmul.mubr.f32.gmra.mxu0 %v3489
    %v5721 = vpop.f32.mrf.mxu0
    %v5722 = vadd.f32 0.0, %v5721
    %v5723 = vpop.f32.mrf.mxu0
    %5724 = vdwg.mxu0
    %5725 = vmatprep.subr.mxu0 0.0
    %5726 = vmatpush1.xpose.msra.mxu0 0.0
    %5727 = vmatprep.subr.mxu0 0.0
    %5728 = vmatpush1.xpose.msra.mxu0 0.0
    %5729 = vmatprep.subr.mxu0 0.0
    %5730 = vmatpush1.xpose.msra.mxu0 0.0
    %5731 = vmatprep.subr.mxu0 0.0
    %5732 = vmatpush1.xpose.msra.mxu0 0.0
    %5733 = vmatprep.subr.mxu0 0.0
    %5734 = vmatpush1.xpose.msra.mxu0 0.0
    %5735 = vmatprep.subr.mxu0 0.0
    %5736 = vmatpush1.xpose.msra.mxu0 0.0
    %5737 = vmatprep.subr.mxu0 0.0
    %5738 = vmatpush1.xpose.msra.mxu0 0.0
    %5739 = vmatprep.subr.mxu0 0.0
    %5740 = vmatpush1.xpose.msra.mxu0 0.0
    %5741 = vmatprep.subr.mxu0 0.0
    %5742 = vmatpush1.xpose.msra.mxu0 0.0
    %5743 = vmatprep.subr.mxu0 0.0
    %5744 = vmatpush1.xpose.msra.mxu0 0.0
    %5745 = vmatprep.subr.mxu0 0.0
    %5746 = vmatpush1.xpose.msra.mxu0 0.0
    %5747 = vmatprep.subr.mxu0 0.0
    %5748 = vmatpush1.xpose.msra.mxu0 0.0
    %5749 = vmatprep.subr.mxu0 0.0
    %5750 = vmatpush1.xpose.msra.mxu0 0.0
    %5751 = vmatprep.subr.mxu0 0.0
    %5752 = vmatpush1.xpose.msra.mxu0 0.0
    %5753 = vmatprep.subr.mxu0 0.0
    %5754 = vmatpush1.xpose.msra.mxu0 %v3554
    %5755 = vmatprep.subr.mxu0 0.0
    %5756 = vmatpush1.xpose.msra.mxu0 %v3553
    %5757 = vmatprep.subr.mxu0 0.0
    %5758 = vmatpush2.xpose.msra.mxu0 0.0
    %5759 = vmatprep.subr.mxu0 0.0
    %5760 = vmatpush2.xpose.msra.mxu0 0.0
    %5761 = vmatprep.subr.mxu0 0.0
    %5762 = vmatpush2.xpose.msra.mxu0 0.0
    %5763 = vmatprep.subr.mxu0 0.0
    %5764 = vmatpush2.xpose.msra.mxu0 0.0
    %5765 = vmatprep.subr.mxu0 0.0
    %5766 = vmatpush2.xpose.msra.mxu0 0.0
    %5767 = vmatprep.subr.mxu0 0.0
    %5768 = vmatpush2.xpose.msra.mxu0 0.0
    %5769 = vmatprep.subr.mxu0 0.0
    %5770 = vmatpush2.xpose.msra.mxu0 0.0
    %5771 = vmatprep.subr.mxu0 0.0
    %5772 = vmatpush2.xpose.msra.mxu0 0.0
    %5773 = vmatprep.subr.mxu0 0.0
    %5774 = vmatpush2.xpose.msra.mxu0 0.0
    %5775 = vmatprep.subr.mxu0 0.0
    %5776 = vmatpush2.xpose.msra.mxu0 0.0
    %5777 = vmatprep.subr.mxu0 0.0
    %5778 = vmatpush2.xpose.msra.mxu0 0.0
    %5779 = vmatprep.subr.mxu0 0.0
    %5780 = vmatpush2.xpose.msra.mxu0 0.0
    %5781 = vmatprep.subr.mxu0 0.0
    %5782 = vmatpush2.xpose.msra.mxu0 0.0
    %5783 = vmatprep.subr.mxu0 0.0
    %5784 = vmatpush2.xpose.msra.mxu0 0.0
    %5785 = vmatprep.subr.mxu0 0.0
    %5786 = vmatpush2.xpose.msra.mxu0 0.0
    %5787 = vmatprep.subr.mxu0 0.0
    %5788 = vmatpush2.xpose.msra.mxu0 0.0
    %5789 = vmatprep.mubr.f32.mxu0 0.0
    %5790 = vmatmul.mubr.f32.gmra.mxu0 %v3490
    %v5791 = vpop.f32.mrf.mxu0
    %v5792 = vadd.f32 0.0, %v5791
    %v5793 = vpop.f32.mrf.mxu0
    %5794 = vdwg.mxu0
    %vm5795 = vcmask 80896
    %v5796 = vsel %vm5795, %v3622, 0.0
    %v5797 = vsel %vm5795, %v3692, 0.0
    %v5798 = vadd.f32 %v5796, %v5797
    %v5799 = vsel %vm5795, %v3762, 0.0
    %v5800 = vadd.f32 %v5798, %v5799
    %v5801 = vsel %vm5795, %v3832, 0.0
    %v5802 = vadd.f32 %v5800, %v5801
    %v5803 = vsel %vm5795, %v3902, 0.0
    %v5804 = vadd.f32 %v5802, %v5803
    %v5805 = vsel %vm5795, %v3972, 0.0
    %v5806 = vadd.f32 %v5804, %v5805
    %v5807 = vsel %vm5795, %v4042, 0.0
    %v5808 = vadd.f32 %v5806, %v5807
    %v5809 = vsel %vm5795, %v4112, 0.0
    %v5810 = vadd.f32 %v5808, %v5809
    %v5811 = vsel %vm5795, %v4182, 0.0
    %v5812 = vadd.f32 %v5810, %v5811
    %v5813 = vsel %vm5795, %v4252, 0.0
    %v5814 = vadd.f32 %v5812, %v5813
    %v5815 = vsel %vm5795, %v4322, 0.0
    %v5816 = vadd.f32 %v5814, %v5815
    %v5817 = vsel %vm5795, %v4392, 0.0
    %v5818 = vadd.f32 %v5816, %v5817
    %v5819 = vsel %vm5795, %v4462, 0.0
    %v5820 = vadd.f32 %v5818, %v5819
    %v5821 = vsel %vm5795, %v4532, 0.0
    %v5822 = vadd.f32 %v5820, %v5821
    %v5823 = vsel %vm5795, %v4602, 0.0
    %v5824 = vadd.f32 %v5822, %v5823
    %v5825 = vsel %vm5795, %v4672, 0.0
    %v5826 = vadd.f32 %v5824, %v5825
    %v5827 = vsel %vm5795, %v4742, 0.0
    %v5828 = vadd.f32 %v5826, %v5827
    %v5829 = vsel %vm5795, %v4812, 0.0
    %v5830 = vadd.f32 %v5828, %v5829
    %v5831 = vsel %vm5795, %v4882, 0.0
    %v5832 = vadd.f32 %v5830, %v5831
    %v5833 = vsel %vm5795, %v4952, 0.0
    %v5834 = vadd.f32 %v5832, %v5833
    %v5835 = vsel %vm5795, %v5022, 0.0
    %v5836 = vadd.f32 %v5834, %v5835
    %v5837 = vsel %vm5795, %v5092, 0.0
    %v5838 = vadd.f32 %v5836, %v5837
    %v5839 = vsel %vm5795, %v5162, 0.0
    %v5840 = vadd.f32 %v5838, %v5839
    %v5841 = vsel %vm5795, %v5232, 0.0
    %v5842 = vadd.f32 %v5840, %v5841
    %v5843 = vsel %vm5795, %v5302, 0.0
    %v5844 = vadd.f32 %v5842, %v5843
    %v5845 = vsel %vm5795, %v5372, 0.0
    %v5846 = vadd.f32 %v5844, %v5845
    %v5847 = vsel %vm5795, %v5442, 0.0
    %v5848 = vadd.f32 %v5846, %v5847
    %v5849 = vsel %vm5795, %v5512, 0.0
    %v5850 = vadd.f32 %v5848, %v5849
    %v5851 = vsel %vm5795, %v5582, 0.0
    %v5852 = vadd.f32 %v5850, %v5851
    %v5853 = vsel %vm5795, %v5652, 0.0
    %v5854 = vadd.f32 %v5852, %v5853
    %v5855 = vsel %vm5795, %v5722, 0.0
    %v5856 = vadd.f32 %v5854, %v5855
    %v5857 = vsel %vm5795, %v5792, 0.0
    %v5858 = vadd.f32 %v5856, %v5857
    %v5859 = vld [vmem:[%s8] sm:$0x1]
    %v5861 = vlaneseq
    %v5862 = vshrl.u32 %v5861, 7
    %v5863 = vsub.s32 0, %v5862
    %v5864 = vrot.slane %v5859, %v5863
    %v5866 = vadd.f32 %v5858, %v5864
    %5867 = vst.msk [vmem:[#allocation2] sm:$0xff] %vm5795, %v5866
    // Predicated region
    $region38: #{tpu_custom_call.1} parent=1 // pred_check
      _
    $region39: #{tpu_custom_call.1} parent=1 // pred_check_branch
      %5869 = sbr.rel (0) target = $region41
    $region40: #{tpu_custom_call.1} parent=1 // pred_region
      %s5871 = ssub.s32 128, 128
      %5872 = vsyncadd [#allocation3], %s5871
      %s5874 = sshll.u32 [#allocation2], 4
      %s5875 = int_to_ptr.vmem [resolvable:$true] %s5874
      %5877 = dma.vmem_to_hbm [thread:$0]  %s5875, 128, %s9, [#allocation3]
    $region41: #{tpu_custom_call.1} parent=1 // pred_fallthru
      _
    // Predicated region
    $region42: #{tpu_custom_call.1} parent=1 // pred_check
      _
    $region43: #{tpu_custom_call.1} parent=1 // pred_check_branch
      %5879 = sbr.rel (0) target = $region45
    $region44: #{tpu_custom_call.1} parent=1 // pred_region
      %5880 = dma.done [#allocation3], 128
    $region45: #{tpu_custom_call.1} parent=1 // pred_fallthru
      _
    %5881 = vsyncpa [#allocation3], 1

</llo_original>
